<compile_context>
chip_gen: v7x
topology: tpu7x:2x2x1
jax: 0.10.0
libtpu: 0.0.40
codegen_flags: <defaults>
</compile_context>

<pallas_src>
import math

import jax
import jax.numpy as jnp
from jax import lax
from jax.experimental import pallas as pl
from jax.experimental.pallas import tpu as pltpu


HP = 128  # lane-padded hidden dimension (true hidden = 32)


# ----------------------------------------------------------------------------
# fused whole-model kernel
# ----------------------------------------------------------------------------

def make_fused_kernel(node_types, edge_types, num_nodes, hidden):
    n_nt, n_et = len(node_types), len(edge_types)
    inv_sqrt_h = 1.0 / math.sqrt(hidden)

    def kernel(*refs):
        x_refs = refs[:n_nt]
        oh_refs = refs[n_nt:n_nt + 2 * n_et]
        w_sq, b_sq, w_qkv, b_qkv = refs[n_nt + 2 * n_et:n_nt + 2 * n_et + 4]
        out_refs = refs[n_nt + 2 * n_et + 4:]

        # --- one-hot derived values, computed ONCE, shared by both conv layers ---
        # bf16 inputs halve HBM->VMEM DMA bytes; a single f32 upcast here feeds the
        # f32 scatter-add and the f32 VPU softmax path.
        S, Df32, deg_bf = [], [], []
        for j in range(n_et):
            S.append(oh_refs[2 * j][...])                          # bf16 [E, Ns] src one-hot
            d32 = oh_refs[2 * j + 1][...].astype(jnp.float32)      # f32  [E, Nd] dst one-hot
            Df32.append(d32)
            # per-dst incoming-edge counts; exact in bf16 for degree <= 256
            deg_bf.append(jnp.sum(d32, axis=0, keepdims=True).astype(jnp.bfloat16))

        def bn_relu(y, i):
            # BatchNorm1d training mode (batch stats, biased variance, eps=1e-5) + ReLU.
            # Padded columns stay 0 because gamma/beta are 0 there.  f32 on the VPU.
            gamma = b_sq[2 * n_nt + i:2 * n_nt + i + 1, :]
            beta = b_sq[3 * n_nt + i:3 * n_nt + i + 1, :]
            mean = jnp.mean(y, axis=0, keepdims=True)
            var = jnp.mean(jnp.square(y - mean), axis=0, keepdims=True)
            return jnp.maximum((y - mean) * lax.rsqrt(var + 1e-5) * gamma + beta, 0.0)

        def attention_layer(layer, x_bf):
            # Stacked q|v|k projection per node type: ONE MXU call + ONE bf16 cast each,
            # shared by every edge type that touches this node type.
            qvk = {}
            for i, nt in enumerate(node_types):
                row = layer * n_nt + i
                z = (jnp.dot(x_bf[nt], w_qkv[row], preferred_element_type=jnp.float32)
                     + b_qkv[row:row + 1, :])
                qvk[nt] = z.astype(jnp.bfloat16)

            out = {nt: jnp.zeros((num_nodes[nt], HP), jnp.float32) for nt in node_types}

            for j, et in enumerate(edge_types):
                src_t, _, dst_t = et
                Wet = w_sq[2 * n_nt + layer * n_et + j]            # [HP,HP] bf16, used as q @ W
                qv_src = qvk[src_t][:, :2 * HP]                    # q|v of src node type
                k_dst = qvk[dst_t][:, 2 * HP:]                     # k of dst node type

                # gather q[src] and v[src] for every edge in a single bf16 MXU call
                gqv = jnp.dot(S[j], qv_src, preferred_element_type=jnp.float32)  # [E,2HP]
                qe, ve = gqv[:, :HP], gqv[:, HP:]

                # reference: raw_alpha = (q[src] @ W @ k[dst].T).sum(-1) / sqrt(H)
                # == row-sum of the [E,E] score matrix == (q[src] @ W) . (sum_e' k[dst[e']])
                # and sum_e' k[dst[e']] == deg @ k  -> no [E,E] temporary.
                ksum = jnp.dot(deg_bf[j], k_dst, preferred_element_type=jnp.float32)  # [1,HP]
                qw = jnp.dot(qe.astype(jnp.bfloat16), Wet,
                             preferred_element_type=jnp.float32)                      # [E,HP]
                raw_alpha = jnp.sum(qw * ksum, axis=-1, keepdims=True) * inv_sqrt_h   # [E,1]

                # scatter_softmax over dst groups with a PER-GROUP max shift (robust to
                # underflow).  Whole softmax path is f32 on the VPU/XLU — no f32 MXU pass.
                m = Df32[j] > 0                                                        # [E,Nd]
                gmax = jnp.max(jnp.where(m, raw_alpha, -1e30), axis=0, keepdims=True)  # [1,Nd]
                shift = jnp.sum(jnp.where(m, gmax, 0.0), axis=-1, keepdims=True)       # [E,1]
                expa = jnp.exp(raw_alpha - shift)                                      # [E,1]
                denom = jnp.sum(jnp.where(m, expa, 0.0), axis=0, keepdims=True)        # [1,Nd]
                denom_e = jnp.sum(jnp.where(m, denom, 0.0), axis=-1, keepdims=True)    # [E,1]
                alpha = expa / denom_e                                                 # [E,1]

                msgs = alpha * ve                                                      # [E,HP]
                # scatter-add messages into dst nodes (kept f32 for accumulation precision)
                out[dst_t] = out[dst_t] + lax.dot_general(
                    Df32[j], msgs, (((0,), (0,)), ((), ())),
                    preferred_element_type=jnp.float32)
            return out

        # --- per-node-type input projection (GnnModel.lin_layers) ---
        x = {}
        for i, nt in enumerate(node_types):
            x[nt] = (jnp.dot(x_refs[i][...], w_sq[i], preferred_element_type=jnp.float32)
                     + b_sq[i:i + 1, :])
        x_bf = {nt: x[nt].astype(jnp.bfloat16) for nt in node_types}   # single cast, reused

        # self_loop_transform(original) is identical for both residual adds -> compute once
        self_loop = {nt: (jnp.dot(x_bf[nt], w_sq[n_nt + i],
                                  preferred_element_type=jnp.float32)
                          + b_sq[n_nt + i:n_nt + i + 1, :])
                     for i, nt in enumerate(node_types)}

        h = attention_layer(0, x_bf)                                     # GNN.conv1
        h = {nt: bn_relu(h[nt], i) + self_loop[nt]
             for i, nt in enumerate(node_types)}                         # relu(BN) + self-loop
        h_bf = {nt: h[nt].astype(jnp.bfloat16) for nt in node_types}
        h = attention_layer(1, h_bf)                                     # GNN.conv2
        for i, nt in enumerate(node_types):
            out_refs[i][...] = h[nt] + self_loop[nt]                     # lane-dense [N,128] store

    return kernel


# ----------------------------------------------------------------------------
# host wrapper
# ----------------------------------------------------------------------------

def fused_gnn_forward(packed, x_raw_dict, edge_index_dict,
                      node_types, edge_types, num_nodes, hidden):
    # host-built bf16 one-hots (0/1 exact in bf16) — largest inputs, halves DMA bytes
    oh = []
    for et in edge_types:
        src_t, _, dst_t = et
        ei = edge_index_dict[et]
        oh.append(jax.nn.one_hot(ei[0], num_nodes[src_t], dtype=jnp.bfloat16))
        oh.append(jax.nn.one_hot(ei[1], num_nodes[dst_t], dtype=jnp.bfloat16))

    # lane-pad raw features to 128 and cast the MXU operand to bf16 on the host
    xs = [jnp.pad(x_raw_dict[nt], ((0, 0), (0, HP - x_raw_dict[nt].shape[1])))
          .astype(jnp.bfloat16) for nt in node_types]

    args = (*xs, *oh, packed["w_sq"], packed["b_sq"], packed["w_qkv"], packed["b_qkv"])

    kernel = make_fused_kernel(node_types, edge_types, num_nodes, hidden)
    vmem = pl.BlockSpec(memory_space=pltpu.MemorySpace.VMEM)
    out = pl.pallas_call(
        kernel,
        out_shape=tuple(jax.ShapeDtypeStruct((num_nodes[nt], HP), jnp.float32)
                        for nt in node_types),
        in_specs=[vmem] * len(args),
        out_specs=tuple(vmem for _ in node_types),
        compiler_params=pltpu.CompilerParams(vmem_limit_bytes=32 * 1024 * 1024),
    )(*args)

    # strip the lane padding back to the true hidden size
    return {nt: out[i][:, :hidden] for i, nt in enumerate(node_types)}


# ----------------------------------------------------------------------------
# parameter init (mirrors the PyTorch module) + host-side packing into stacks
# ----------------------------------------------------------------------------

def xavier_uniform(key, shape):
    fan_out, fan_in = shape
    bound = math.sqrt(6.0 / (fan_in + fan_out))
    return jax.random.uniform(key, shape, jnp.float32, -bound, bound)


def linear_init(key, in_dim, out_dim):
    kw, kb = jax.random.split(key)
    bound = 1.0 / math.sqrt(in_dim)
    w = jax.random.uniform(kw, (out_dim, in_dim), jnp.float32, -bound, bound)
    b = jax.random.uniform(kb, (out_dim,), jnp.float32, -bound, bound)
    return w, b


def _pad2(x, rows, cols):
    return jnp.zeros((rows, cols), x.dtype).at[:x.shape[0], :x.shape[1]].set(x)


def init_and_pack_params(key, hidden, feat_dims, node_types, edge_types):
    """Stack every weight/bias into 4 tensors (fewer kernel inputs / DMAs).

    w_sq  [2*n_nt + 2*n_et, HP, HP] bf16: rows [0,n_nt) lin (pre-transposed [in,out]),
          [n_nt,2n_nt) self_loop (pre-transposed), then conv1 edge-W, conv2 edge-W
          (stored untransposed; used as q @ W, as in the reference).
    b_sq  [4*n_nt, HP] f32: lin bias, self_loop bias, BN gamma, BN beta.
    w_qkv [2*n_nt, HP, 3*HP] bf16: per (layer, node type), columns ordered q | v | k.
    b_qkv [2*n_nt, 3*HP] f32.
    """
    n_nt, n_et = len(node_types), len(edge_types)
    w_sq = jnp.zeros((2 * n_nt + 2 * n_et, HP, HP), jnp.float32)
    b_sq = jnp.zeros((4 * n_nt, HP), jnp.float32)
    w_qkv = jnp.zeros((2 * n_nt, HP, 3 * HP), jnp.float32)
    b_qkv = jnp.zeros((2 * n_nt, 3 * HP), jnp.float32)

    # GnnModel.lin_layers
    for i, nt in enumerate(node_types):
        key, k1 = jax.random.split(key)
        w, b = linear_init(k1, feat_dims[nt], hidden)
        w_sq = w_sq.at[i].set(_pad2(w.T, HP, HP))
        b_sq = b_sq.at[i, :hidden].set(b)

    # HeteroAttentionLayer q/k/v and per-edge-type W, for conv1 and conv2
    for layer in range(2):
        for i, nt in enumerate(node_types):
            key, kq, kk, kv = jax.random.split(key, 4)
            for slot, kkey in ((0, kq), (2, kk), (1, kv)):      # columns: q | v | k
                w, b = linear_init(kkey, hidden, hidden)
                w_qkv = w_qkv.at[layer * n_nt + i, :hidden,
                                 slot * HP:slot * HP + hidden].set(w.T)
                b_qkv = b_qkv.at[layer * n_nt + i,
                                 slot * HP:slot * HP + hidden].set(b)
        for j, et in enumerate(edge_types):
            key, kw = jax.random.split(key)
            w_sq = w_sq.at[2 * n_nt + layer * n_et + j, :hidden, :hidden].set(
                xavier_uniform(kw, (hidden, hidden)))           # WeightParameter (q @ W)

    # GNN.self_loop_transform (xavier weight) and BatchNorm1d affine params
    for i, nt in enumerate(node_types):
        key, kw, kb = jax.random.split(key, 3)
        w = xavier_uniform(kw, (hidden, hidden))
        bound = 1.0 / math.sqrt(hidden)
        b = jax.random.uniform(kb, (hidden,), jnp.float32, -bound, bound)
        w_sq = w_sq.at[n_nt + i, :hidden, :hidden].set(w.T)
        b_sq = b_sq.at[n_nt + i, :hidden].set(b)
        b_sq = b_sq.at[2 * n_nt + i, :hidden].set(1.0)          # BN gamma (beta stays 0)

    return {"w_sq": w_sq.astype(jnp.bfloat16), "b_sq": b_sq,
            "w_qkv": w_qkv.astype(jnp.bfloat16), "b_qkv": b_qkv}


# ----------------------------------------------------------------------------
# main
# ----------------------------------------------------------------------------

if __name__ == "__main__":
    hidden = 32
    node_types = ("user", "item")
    feat_dims = {"user": 12, "item": 20}
    num_nodes = {"user": 16, "item": 24}
    edge_types = (("user", "buys", "item"), ("item", "rev_buys", "user"))
    num_edges = {edge_types[0]: 40, edge_types[1]: 32}

    key = jax.random.PRNGKey(0)
    key, kdata = jax.random.split(key)

    # synthetic heterogeneous graph data
    x_raw_dict = {}
    for nt in node_types:
        kdata, kf = jax.random.split(kdata)
        x_raw_dict[nt] = jax.random.normal(kf, (num_nodes[nt], feat_dims[nt]), jnp.float32)

    edge_index_dict = {}
    for et in edge_types:
        src_t, _, dst_t = et
        kdata, ks, kd = jax.random.split(kdata, 3)
        src = jax.random.randint(ks, (num_edges[et],), 0, num_nodes[src_t])
        dst = jax.random.randint(kd, (num_edges[et],), 0, num_nodes[dst_t])
        edge_index_dict[et] = jnp.stack([src, dst], axis=0)

    packed = init_and_pack_params(key, hidden, feat_dims, node_types, edge_types)

    out = fused_gnn_forward(packed, x_raw_dict, edge_index_dict,
                            node_types, edge_types, num_nodes, hidden)
    out = jax.block_until_ready(out)

    for nt in node_types:
        assert out[nt].shape == (num_nodes[nt], hidden)
        assert out[nt].dtype == jnp.float32
        assert bool(jnp.all(jnp.isfinite(out[nt])))

    print("KERNEL_OK")
</pallas_src>

<mosaic_0001>
module attributes {stable_mosaic.version = 11 : i64} {
  func.func @kernel(%arg0: memref<16x128xbf16, #tpu.memory_space<vmem>>, %arg1: memref<24x128xbf16, #tpu.memory_space<vmem>>, %arg2: memref<40x16xbf16, #tpu.memory_space<vmem>>, %arg3: memref<40x24xbf16, #tpu.memory_space<vmem>>, %arg4: memref<32x24xbf16, #tpu.memory_space<vmem>>, %arg5: memref<32x16xbf16, #tpu.memory_space<vmem>>, %arg6: memref<8x128x128xbf16, #tpu.memory_space<vmem>>, %arg7: memref<8x128xf32, #tpu.memory_space<vmem>>, %arg8: memref<4x128x384xbf16, #tpu.memory_space<vmem>>, %arg9: memref<4x384xf32, #tpu.memory_space<vmem>>, %arg10: memref<16x128xf32, #tpu.memory_space<vmem>>, %arg11: memref<24x128xf32, #tpu.memory_space<vmem>>) attributes {dimension_semantics = [], scalar_prefetch = 0 : i64, scratch_operands = 0 : i64, tpu.core_type = #tpu.core_type<tc>} {
    %c0 = arith.constant 0 : index
    %c0_0 = arith.constant 0 : index
    %0 = vector.load %arg2[%c0, %c0_0] : memref<40x16xbf16, #tpu.memory_space<vmem>>, vector<40x16xbf16>
    %c0_1 = arith.constant 0 : index
    %c0_2 = arith.constant 0 : index
    %1 = vector.load %arg3[%c0_1, %c0_2] : memref<40x24xbf16, #tpu.memory_space<vmem>>, vector<40x24xbf16>
    %2 = arith.extf %1 : vector<40x24xbf16> to vector<40x24xf32>
    %cst = arith.constant dense<0.000000e+00> : vector<24xf32>
    %3 = vector.multi_reduction <add>, %2, %cst [0] : vector<40x24xf32> to vector<24xf32>
    %4 = vector.shape_cast %3 : vector<24xf32> to vector<1x24xf32>
    %5 = arith.truncf %4 : vector<1x24xf32> to vector<1x24xbf16>
    %c0_3 = arith.constant 0 : index
    %c0_4 = arith.constant 0 : index
    %6 = vector.load %arg4[%c0_3, %c0_4] : memref<32x24xbf16, #tpu.memory_space<vmem>>, vector<32x24xbf16>
    %c0_5 = arith.constant 0 : index
    %c0_6 = arith.constant 0 : index
    %7 = vector.load %arg5[%c0_5, %c0_6] : memref<32x16xbf16, #tpu.memory_space<vmem>>, vector<32x16xbf16>
    %8 = arith.extf %7 : vector<32x16xbf16> to vector<32x16xf32>
    %cst_7 = arith.constant dense<0.000000e+00> : vector<16xf32>
    %9 = vector.multi_reduction <add>, %8, %cst_7 [0] : vector<32x16xf32> to vector<16xf32>
    %10 = vector.shape_cast %9 : vector<16xf32> to vector<1x16xf32>
    %11 = arith.truncf %10 : vector<1x16xf32> to vector<1x16xbf16>
    %c0_8 = arith.constant 0 : index
    %c0_9 = arith.constant 0 : index
    %12 = vector.load %arg0[%c0_8, %c0_9] : memref<16x128xbf16, #tpu.memory_space<vmem>>, vector<16x128xbf16>
    %c0_10 = arith.constant 0 : index
    %c0_11 = arith.constant 0 : index
    %c0_12 = arith.constant 0 : index
    %13 = vector.load %arg6[%c0_10, %c0_11, %c0_12] : memref<8x128x128xbf16, #tpu.memory_space<vmem>>, vector<1x128x128xbf16>
    %14 = vector.shape_cast %13 : vector<1x128x128xbf16> to vector<128x128xbf16>
    %cst_13 = arith.constant dense<0.000000e+00> : vector<16x128xf32>
    %15 = tpu.matmul %12, %14, %cst_13 {dimension_numbers = #tpu.dot_dimension_numbers<[1], [0], [0], [1], [0, 0, 1, 1], [], []>} : vector<16x128xbf16>, vector<128x128xbf16>, vector<16x128xf32> -> vector<16x128xf32>
    %c0_14 = arith.constant 0 : index
    %c0_15 = arith.constant 0 : index
    %16 = vector.load %arg7[%c0_14, %c0_15] : memref<8x128xf32, #tpu.memory_space<vmem>>, vector<1x128xf32>
    %17 = vector.broadcast %16 : vector<1x128xf32> to vector<16x128xf32>
    %18 = arith.addf %15, %17 : vector<16x128xf32>
    %c0_16 = arith.constant 0 : index
    %c0_17 = arith.constant 0 : index
    %19 = vector.load %arg1[%c0_16, %c0_17] : memref<24x128xbf16, #tpu.memory_space<vmem>>, vector<24x128xbf16>
    %c1 = arith.constant 1 : index
    %c0_18 = arith.constant 0 : index
    %c0_19 = arith.constant 0 : index
    %20 = vector.load %arg6[%c1, %c0_18, %c0_19] : memref<8x128x128xbf16, #tpu.memory_space<vmem>>, vector<1x128x128xbf16>
    %21 = vector.shape_cast %20 : vector<1x128x128xbf16> to vector<128x128xbf16>
    %cst_20 = arith.constant dense<0.000000e+00> : vector<24x128xf32>
    %22 = tpu.matmul %19, %21, %cst_20 {dimension_numbers = #tpu.dot_dimension_numbers<[1], [0], [0], [1], [0, 0, 1, 1], [], []>} : vector<24x128xbf16>, vector<128x128xbf16>, vector<24x128xf32> -> vector<24x128xf32>
    %c1_21 = arith.constant 1 : index
    %c0_22 = arith.constant 0 : index
    %23 = vector.load %arg7[%c1_21, %c0_22] : memref<8x128xf32, #tpu.memory_space<vmem>>, vector<1x128xf32>
    %24 = vector.broadcast %23 : vector<1x128xf32> to vector<24x128xf32>
    %25 = arith.addf %22, %24 : vector<24x128xf32>
    %26 = arith.truncf %18 : vector<16x128xf32> to vector<16x128xbf16>
    %27 = arith.truncf %25 : vector<24x128xf32> to vector<24x128xbf16>
    %c2 = arith.constant 2 : index
    %c0_23 = arith.constant 0 : index
    %c0_24 = arith.constant 0 : index
    %28 = vector.load %arg6[%c2, %c0_23, %c0_24] : memref<8x128x128xbf16, #tpu.memory_space<vmem>>, vector<1x128x128xbf16>
    %29 = vector.shape_cast %28 : vector<1x128x128xbf16> to vector<128x128xbf16>
    %cst_25 = arith.constant dense<0.000000e+00> : vector<16x128xf32>
    %30 = tpu.matmul %26, %29, %cst_25 {dimension_numbers = #tpu.dot_dimension_numbers<[1], [0], [0], [1], [0, 0, 1, 1], [], []>} : vector<16x128xbf16>, vector<128x128xbf16>, vector<16x128xf32> -> vector<16x128xf32>
    %c2_26 = arith.constant 2 : index
    %c0_27 = arith.constant 0 : index
    %31 = vector.load %arg7[%c2_26, %c0_27] : memref<8x128xf32, #tpu.memory_space<vmem>>, vector<1x128xf32>
    %32 = vector.broadcast %31 : vector<1x128xf32> to vector<16x128xf32>
    %33 = arith.addf %30, %32 : vector<16x128xf32>
    %c3 = arith.constant 3 : index
    %c0_28 = arith.constant 0 : index
    %c0_29 = arith.constant 0 : index
    %34 = vector.load %arg6[%c3, %c0_28, %c0_29] : memref<8x128x128xbf16, #tpu.memory_space<vmem>>, vector<1x128x128xbf16>
    %35 = vector.shape_cast %34 : vector<1x128x128xbf16> to vector<128x128xbf16>
    %cst_30 = arith.constant dense<0.000000e+00> : vector<24x128xf32>
    %36 = tpu.matmul %27, %35, %cst_30 {dimension_numbers = #tpu.dot_dimension_numbers<[1], [0], [0], [1], [0, 0, 1, 1], [], []>} : vector<24x128xbf16>, vector<128x128xbf16>, vector<24x128xf32> -> vector<24x128xf32>
    %c3_31 = arith.constant 3 : index
    %c0_32 = arith.constant 0 : index
    %37 = vector.load %arg7[%c3_31, %c0_32] : memref<8x128xf32, #tpu.memory_space<vmem>>, vector<1x128xf32>
    %38 = vector.broadcast %37 : vector<1x128xf32> to vector<24x128xf32>
    %39 = arith.addf %36, %38 : vector<24x128xf32>
    %c0_33 = arith.constant 0 : index
    %c0_34 = arith.constant 0 : index
    %c0_35 = arith.constant 0 : index
    %40 = vector.load %arg8[%c0_33, %c0_34, %c0_35] : memref<4x128x384xbf16, #tpu.memory_space<vmem>>, vector<1x128x384xbf16>
    %41 = vector.shape_cast %40 : vector<1x128x384xbf16> to vector<128x384xbf16>
    %cst_36 = arith.constant dense<0.000000e+00> : vector<16x384xf32>
    %42 = tpu.matmul %26, %41, %cst_36 {dimension_numbers = #tpu.dot_dimension_numbers<[1], [0], [0], [1], [0, 0, 1, 1], [], []>} : vector<16x128xbf16>, vector<128x384xbf16>, vector<16x384xf32> -> vector<16x384xf32>
    %c0_37 = arith.constant 0 : index
    %c0_38 = arith.constant 0 : index
    %43 = vector.load %arg9[%c0_37, %c0_38] : memref<4x384xf32, #tpu.memory_space<vmem>>, vector<1x384xf32>
    %44 = vector.broadcast %43 : vector<1x384xf32> to vector<16x384xf32>
    %45 = arith.addf %42, %44 : vector<16x384xf32>
    %46 = arith.truncf %45 : vector<16x384xf32> to vector<16x384xbf16>
    %c1_39 = arith.constant 1 : index
    %c0_40 = arith.constant 0 : index
    %c0_41 = arith.constant 0 : index
    %47 = vector.load %arg8[%c1_39, %c0_40, %c0_41] : memref<4x128x384xbf16, #tpu.memory_space<vmem>>, vector<1x128x384xbf16>
    %48 = vector.shape_cast %47 : vector<1x128x384xbf16> to vector<128x384xbf16>
    %cst_42 = arith.constant dense<0.000000e+00> : vector<24x384xf32>
    %49 = tpu.matmul %27, %48, %cst_42 {dimension_numbers = #tpu.dot_dimension_numbers<[1], [0], [0], [1], [0, 0, 1, 1], [], []>} : vector<24x128xbf16>, vector<128x384xbf16>, vector<24x384xf32> -> vector<24x384xf32>
    %c1_43 = arith.constant 1 : index
    %c0_44 = arith.constant 0 : index
    %50 = vector.load %arg9[%c1_43, %c0_44] : memref<4x384xf32, #tpu.memory_space<vmem>>, vector<1x384xf32>
    %51 = vector.broadcast %50 : vector<1x384xf32> to vector<24x384xf32>
    %52 = arith.addf %49, %51 : vector<24x384xf32>
    %53 = arith.truncf %52 : vector<24x384xf32> to vector<24x384xbf16>
    %cst_45 = arith.constant 0.000000e+00 : f32
    %54 = vector.broadcast %cst_45 : f32 to vector<16x128xf32>
    %cst_46 = arith.constant 0.000000e+00 : f32
    %55 = vector.broadcast %cst_46 : f32 to vector<24x128xf32>
    %c4 = arith.constant 4 : index
    %c0_47 = arith.constant 0 : index
    %c0_48 = arith.constant 0 : index
    %56 = vector.load %arg6[%c4, %c0_47, %c0_48] : memref<8x128x128xbf16, #tpu.memory_space<vmem>>, vector<1x128x128xbf16>
    %57 = vector.shape_cast %56 : vector<1x128x128xbf16> to vector<128x128xbf16>
    %58 = vector.extract_strided_slice %46 {offsets = [0, 0], sizes = [16, 256], strides = [1, 1]} : vector<16x384xbf16> to vector<16x256xbf16>
    %59 = vector.extract_strided_slice %53 {offsets = [0, 256], sizes = [24, 128], strides = [1, 1]} : vector<24x384xbf16> to vector<24x128xbf16>
    %cst_49 = arith.constant dense<0.000000e+00> : vector<40x256xf32>
    %60 = tpu.matmul %0, %58, %cst_49 {dimension_numbers = #tpu.dot_dimension_numbers<[1], [0], [0], [1], [0, 0, 1, 1], [], []>} : vector<40x16xbf16>, vector<16x256xbf16>, vector<40x256xf32> -> vector<40x256xf32>
    %61 = vector.extract_strided_slice %60 {offsets = [0, 0], sizes = [40, 128], strides = [1, 1]} : vector<40x256xf32> to vector<40x128xf32>
    %62 = vector.extract_strided_slice %60 {offsets = [0, 128], sizes = [40, 128], strides = [1, 1]} : vector<40x256xf32> to vector<40x128xf32>
    %cst_50 = arith.constant dense<0.000000e+00> : vector<1x128xf32>
    %63 = tpu.matmul %5, %59, %cst_50 {dimension_numbers = #tpu.dot_dimension_numbers<[1], [0], [0], [1], [0, 0, 1, 1], [], []>} : vector<1x24xbf16>, vector<24x128xbf16>, vector<1x128xf32> -> vector<1x128xf32>
    %64 = arith.truncf %61 : vector<40x128xf32> to vector<40x128xbf16>
    %cst_51 = arith.constant dense<0.000000e+00> : vector<40x128xf32>
    %65 = tpu.matmul %64, %57, %cst_51 {dimension_numbers = #tpu.dot_dimension_numbers<[1], [0], [0], [1], [0, 0, 1, 1], [], []>} : vector<40x128xbf16>, vector<128x128xbf16>, vector<40x128xf32> -> vector<40x128xf32>
    %66 = vector.broadcast %63 : vector<1x128xf32> to vector<40x128xf32>
    %67 = arith.mulf %65, %66 : vector<40x128xf32>
    %cst_52 = arith.constant dense<0.000000e+00> : vector<40xf32>
    %68 = vector.multi_reduction <add>, %67, %cst_52 [1] : vector<40x128xf32> to vector<40xf32>
    %69 = vector.shape_cast %68 : vector<40xf32> to vector<40x1xf32>
    %cst_53 = arith.constant 0.176776692 : f32
    %70 = vector.broadcast %cst_53 : f32 to vector<40x1xf32>
    %71 = arith.mulf %69, %70 : vector<40x1xf32>
    %cst_54 = arith.constant 0.000000e+00 : f32
    %72 = vector.broadcast %cst_54 : f32 to vector<40x24xf32>
    %73 = arith.cmpf ogt, %2, %72 : vector<40x24xf32>
    %cst_55 = arith.constant -1.000000e+30 : f32
    %74 = vector.shape_cast %71 : vector<40x1xf32> to vector<40x1xf32>
    %75 = vector.broadcast %74 : vector<40x1xf32> to vector<40x24xf32>
    %76 = vector.broadcast %cst_55 : f32 to vector<40x24xf32>
    %77 = arith.select %73, %75, %76 : vector<40x24xi1>, vector<40x24xf32>
    %cst_56 = arith.constant dense<0xFF800000> : vector<24xf32>
    %78 = vector.multi_reduction <maximumf>, %77, %cst_56 [0] : vector<40x24xf32> to vector<24xf32>
    %79 = vector.shape_cast %78 : vector<24xf32> to vector<1x24xf32>
    %cst_57 = arith.constant 0.000000e+00 : f32
    %80 = vector.shape_cast %79 : vector<1x24xf32> to vector<1x24xf32>
    %81 = vector.broadcast %80 : vector<1x24xf32> to vector<40x24xf32>
    %82 = vector.broadcast %cst_57 : f32 to vector<40x24xf32>
    %83 = arith.select %73, %81, %82 : vector<40x24xi1>, vector<40x24xf32>
    %cst_58 = arith.constant dense<0.000000e+00> : vector<40xf32>
    %84 = vector.multi_reduction <add>, %83, %cst_58 [1] : vector<40x24xf32> to vector<40xf32>
    %85 = vector.shape_cast %84 : vector<40xf32> to vector<40x1xf32>
    %86 = arith.subf %71, %85 : vector<40x1xf32>
    %87 = math.exp %86 : vector<40x1xf32>
    %cst_59 = arith.constant 0.000000e+00 : f32
    %88 = vector.shape_cast %87 : vector<40x1xf32> to vector<40x1xf32>
    %89 = vector.broadcast %88 : vector<40x1xf32> to vector<40x24xf32>
    %90 = vector.broadcast %cst_59 : f32 to vector<40x24xf32>
    %91 = arith.select %73, %89, %90 : vector<40x24xi1>, vector<40x24xf32>
    %cst_60 = arith.constant dense<0.000000e+00> : vector<24xf32>
    %92 = vector.multi_reduction <add>, %91, %cst_60 [0] : vector<40x24xf32> to vector<24xf32>
    %93 = vector.shape_cast %92 : vector<24xf32> to vector<1x24xf32>
    %cst_61 = arith.constant 0.000000e+00 : f32
    %94 = vector.shape_cast %93 : vector<1x24xf32> to vector<1x24xf32>
    %95 = vector.broadcast %94 : vector<1x24xf32> to vector<40x24xf32>
    %96 = vector.broadcast %cst_61 : f32 to vector<40x24xf32>
    %97 = arith.select %73, %95, %96 : vector<40x24xi1>, vector<40x24xf32>
    %cst_62 = arith.constant dense<0.000000e+00> : vector<40xf32>
    %98 = vector.multi_reduction <add>, %97, %cst_62 [1] : vector<40x24xf32> to vector<40xf32>
    %99 = vector.shape_cast %98 : vector<40xf32> to vector<40x1xf32>
    %100 = arith.divf %87, %99 : vector<40x1xf32>
    %101 = vector.broadcast %100 : vector<40x1xf32> to vector<40x128xf32>
    %102 = arith.mulf %101, %62 : vector<40x128xf32>
    %cst_63 = arith.constant dense<0.000000e+00> : vector<24x128xf32>
    %103 = tpu.matmul %2, %102, %cst_63 {dimension_numbers = #tpu.dot_dimension_numbers<[0], [0], [1], [1], [0, 1, 1, 1], [], []>} : vector<40x24xf32>, vector<40x128xf32>, vector<24x128xf32> -> vector<24x128xf32>
    %104 = arith.addf %55, %103 : vector<24x128xf32>
    %c5 = arith.constant 5 : index
    %c0_64 = arith.constant 0 : index
    %c0_65 = arith.constant 0 : index
    %105 = vector.load %arg6[%c5, %c0_64, %c0_65] : memref<8x128x128xbf16, #tpu.memory_space<vmem>>, vector<1x128x128xbf16>
    %106 = vector.shape_cast %105 : vector<1x128x128xbf16> to vector<128x128xbf16>
    %107 = vector.extract_strided_slice %53 {offsets = [0, 0], sizes = [24, 256], strides = [1, 1]} : vector<24x384xbf16> to vector<24x256xbf16>
    %108 = vector.extract_strided_slice %46 {offsets = [0, 256], sizes = [16, 128], strides = [1, 1]} : vector<16x384xbf16> to vector<16x128xbf16>
    %cst_66 = arith.constant dense<0.000000e+00> : vector<32x256xf32>
    %109 = tpu.matmul %6, %107, %cst_66 {dimension_numbers = #tpu.dot_dimension_numbers<[1], [0], [0], [1], [0, 0, 1, 1], [], []>} : vector<32x24xbf16>, vector<24x256xbf16>, vector<32x256xf32> -> vector<32x256xf32>
    %110 = vector.extract_strided_slice %109 {offsets = [0, 0], sizes = [32, 128], strides = [1, 1]} : vector<32x256xf32> to vector<32x128xf32>
    %111 = vector.extract_strided_slice %109 {offsets = [0, 128], sizes = [32, 128], strides = [1, 1]} : vector<32x256xf32> to vector<32x128xf32>
    %cst_67 = arith.constant dense<0.000000e+00> : vector<1x128xf32>
    %112 = tpu.matmul %11, %108, %cst_67 {dimension_numbers = #tpu.dot_dimension_numbers<[1], [0], [0], [1], [0, 0, 1, 1], [], []>} : vector<1x16xbf16>, vector<16x128xbf16>, vector<1x128xf32> -> vector<1x128xf32>
    %113 = arith.truncf %110 : vector<32x128xf32> to vector<32x128xbf16>
    %cst_68 = arith.constant dense<0.000000e+00> : vector<32x128xf32>
    %114 = tpu.matmul %113, %106, %cst_68 {dimension_numbers = #tpu.dot_dimension_numbers<[1], [0], [0], [1], [0, 0, 1, 1], [], []>} : vector<32x128xbf16>, vector<128x128xbf16>, vector<32x128xf32> -> vector<32x128xf32>
    %115 = vector.broadcast %112 : vector<1x128xf32> to vector<32x128xf32>
    %116 = arith.mulf %114, %115 : vector<32x128xf32>
    %cst_69 = arith.constant dense<0.000000e+00> : vector<32xf32>
    %117 = vector.multi_reduction <add>, %116, %cst_69 [1] : vector<32x128xf32> to vector<32xf32>
    %118 = vector.shape_cast %117 : vector<32xf32> to vector<32x1xf32>
    %cst_70 = arith.constant 0.176776692 : f32
    %119 = vector.broadcast %cst_70 : f32 to vector<32x1xf32>
    %120 = arith.mulf %118, %119 : vector<32x1xf32>
    %cst_71 = arith.constant 0.000000e+00 : f32
    %121 = vector.broadcast %cst_71 : f32 to vector<32x16xf32>
    %122 = arith.cmpf ogt, %8, %121 : vector<32x16xf32>
    %cst_72 = arith.constant -1.000000e+30 : f32
    %123 = vector.shape_cast %120 : vector<32x1xf32> to vector<32x1xf32>
    %124 = vector.broadcast %123 : vector<32x1xf32> to vector<32x16xf32>
    %125 = vector.broadcast %cst_72 : f32 to vector<32x16xf32>
    %126 = arith.select %122, %124, %125 : vector<32x16xi1>, vector<32x16xf32>
    %cst_73 = arith.constant dense<0xFF800000> : vector<16xf32>
    %127 = vector.multi_reduction <maximumf>, %126, %cst_73 [0] : vector<32x16xf32> to vector<16xf32>
    %128 = vector.shape_cast %127 : vector<16xf32> to vector<1x16xf32>
    %cst_74 = arith.constant 0.000000e+00 : f32
    %129 = vector.shape_cast %128 : vector<1x16xf32> to vector<1x16xf32>
    %130 = vector.broadcast %129 : vector<1x16xf32> to vector<32x16xf32>
    %131 = vector.broadcast %cst_74 : f32 to vector<32x16xf32>
    %132 = arith.select %122, %130, %131 : vector<32x16xi1>, vector<32x16xf32>
    %cst_75 = arith.constant dense<0.000000e+00> : vector<32xf32>
    %133 = vector.multi_reduction <add>, %132, %cst_75 [1] : vector<32x16xf32> to vector<32xf32>
    %134 = vector.shape_cast %133 : vector<32xf32> to vector<32x1xf32>
    %135 = arith.subf %120, %134 : vector<32x1xf32>
    %136 = math.exp %135 : vector<32x1xf32>
    %cst_76 = arith.constant 0.000000e+00 : f32
    %137 = vector.shape_cast %136 : vector<32x1xf32> to vector<32x1xf32>
    %138 = vector.broadcast %137 : vector<32x1xf32> to vector<32x16xf32>
    %139 = vector.broadcast %cst_76 : f32 to vector<32x16xf32>
    %140 = arith.select %122, %138, %139 : vector<32x16xi1>, vector<32x16xf32>
    %cst_77 = arith.constant dense<0.000000e+00> : vector<16xf32>
    %141 = vector.multi_reduction <add>, %140, %cst_77 [0] : vector<32x16xf32> to vector<16xf32>
    %142 = vector.shape_cast %141 : vector<16xf32> to vector<1x16xf32>
    %cst_78 = arith.constant 0.000000e+00 : f32
    %143 = vector.shape_cast %142 : vector<1x16xf32> to vector<1x16xf32>
    %144 = vector.broadcast %143 : vector<1x16xf32> to vector<32x16xf32>
    %145 = vector.broadcast %cst_78 : f32 to vector<32x16xf32>
    %146 = arith.select %122, %144, %145 : vector<32x16xi1>, vector<32x16xf32>
    %cst_79 = arith.constant dense<0.000000e+00> : vector<32xf32>
    %147 = vector.multi_reduction <add>, %146, %cst_79 [1] : vector<32x16xf32> to vector<32xf32>
    %148 = vector.shape_cast %147 : vector<32xf32> to vector<32x1xf32>
    %149 = arith.divf %136, %148 : vector<32x1xf32>
    %150 = vector.broadcast %149 : vector<32x1xf32> to vector<32x128xf32>
    %151 = arith.mulf %150, %111 : vector<32x128xf32>
    %cst_80 = arith.constant dense<0.000000e+00> : vector<16x128xf32>
    %152 = tpu.matmul %8, %151, %cst_80 {dimension_numbers = #tpu.dot_dimension_numbers<[0], [0], [1], [1], [0, 1, 1, 1], [], []>} : vector<32x16xf32>, vector<32x128xf32>, vector<16x128xf32> -> vector<16x128xf32>
    %153 = arith.addf %54, %152 : vector<16x128xf32>
    %c4_81 = arith.constant 4 : index
    %c0_82 = arith.constant 0 : index
    %154 = vector.load %arg7[%c4_81, %c0_82] : memref<8x128xf32, #tpu.memory_space<vmem>>, vector<1x128xf32>
    %c6 = arith.constant 6 : index
    %c0_83 = arith.constant 0 : index
    %155 = vector.load %arg7[%c6, %c0_83] : memref<8x128xf32, #tpu.memory_space<vmem>>, vector<1x128xf32>
    %cst_84 = arith.constant dense<0.000000e+00> : vector<128xf32>
    %156 = vector.multi_reduction <add>, %153, %cst_84 [0] : vector<16x128xf32> to vector<128xf32>
    %157 = vector.shape_cast %156 : vector<128xf32> to vector<1x128xf32>
    %cst_85 = arith.constant 1.600000e+01 : f32
    %158 = vector.broadcast %cst_85 : f32 to vector<1x128xf32>
    %159 = arith.divf %157, %158 : vector<1x128xf32>
    %160 = vector.broadcast %159 : vector<1x128xf32> to vector<16x128xf32>
    %161 = arith.subf %153, %160 : vector<16x128xf32>
    %162 = arith.mulf %161, %161 : vector<16x128xf32>
    %cst_86 = arith.constant dense<0.000000e+00> : vector<128xf32>
    %163 = vector.multi_reduction <add>, %162, %cst_86 [0] : vector<16x128xf32> to vector<128xf32>
    %164 = vector.shape_cast %163 : vector<128xf32> to vector<1x128xf32>
    %cst_87 = arith.constant 1.600000e+01 : f32
    %165 = vector.broadcast %cst_87 : f32 to vector<1x128xf32>
    %166 = arith.divf %164, %165 : vector<1x128xf32>
    %167 = vector.broadcast %159 : vector<1x128xf32> to vector<16x128xf32>
    %168 = arith.subf %153, %167 : vector<16x128xf32>
    %cst_88 = arith.constant 9.99999974E-6 : f32
    %169 = vector.broadcast %cst_88 : f32 to vector<1x128xf32>
    %170 = arith.addf %166, %169 : vector<1x128xf32>
    %171 = math.rsqrt %170 : vector<1x128xf32>
    %172 = vector.broadcast %171 : vector<1x128xf32> to vector<16x128xf32>
    %173 = arith.mulf %168, %172 : vector<16x128xf32>
    %174 = vector.broadcast %154 : vector<1x128xf32> to vector<16x128xf32>
    %175 = arith.mulf %173, %174 : vector<16x128xf32>
    %176 = vector.broadcast %155 : vector<1x128xf32> to vector<16x128xf32>
    %177 = arith.addf %175, %176 : vector<16x128xf32>
    %cst_89 = arith.constant 0.000000e+00 : f32
    %178 = vector.broadcast %cst_89 : f32 to vector<16x128xf32>
    %179 = arith.maximumf %177, %178 : vector<16x128xf32>
    %180 = arith.addf %179, %33 : vector<16x128xf32>
    %c5_90 = arith.constant 5 : index
    %c0_91 = arith.constant 0 : index
    %181 = vector.load %arg7[%c5_90, %c0_91] : memref<8x128xf32, #tpu.memory_space<vmem>>, vector<1x128xf32>
    %c7 = arith.constant 7 : index
    %c0_92 = arith.constant 0 : index
    %182 = vector.load %arg7[%c7, %c0_92] : memref<8x128xf32, #tpu.memory_space<vmem>>, vector<1x128xf32>
    %cst_93 = arith.constant dense<0.000000e+00> : vector<128xf32>
    %183 = vector.multi_reduction <add>, %104, %cst_93 [0] : vector<24x128xf32> to vector<128xf32>
    %184 = vector.shape_cast %183 : vector<128xf32> to vector<1x128xf32>
    %cst_94 = arith.constant 2.400000e+01 : f32
    %185 = vector.broadcast %cst_94 : f32 to vector<1x128xf32>
    %186 = arith.divf %184, %185 : vector<1x128xf32>
    %187 = vector.broadcast %186 : vector<1x128xf32> to vector<24x128xf32>
    %188 = arith.subf %104, %187 : vector<24x128xf32>
    %189 = arith.mulf %188, %188 : vector<24x128xf32>
    %cst_95 = arith.constant dense<0.000000e+00> : vector<128xf32>
    %190 = vector.multi_reduction <add>, %189, %cst_95 [0] : vector<24x128xf32> to vector<128xf32>
    %191 = vector.shape_cast %190 : vector<128xf32> to vector<1x128xf32>
    %cst_96 = arith.constant 2.400000e+01 : f32
    %192 = vector.broadcast %cst_96 : f32 to vector<1x128xf32>
    %193 = arith.divf %191, %192 : vector<1x128xf32>
    %194 = vector.broadcast %186 : vector<1x128xf32> to vector<24x128xf32>
    %195 = arith.subf %104, %194 : vector<24x128xf32>
    %cst_97 = arith.constant 9.99999974E-6 : f32
    %196 = vector.broadcast %cst_97 : f32 to vector<1x128xf32>
    %197 = arith.addf %193, %196 : vector<1x128xf32>
    %198 = math.rsqrt %197 : vector<1x128xf32>
    %199 = vector.broadcast %198 : vector<1x128xf32> to vector<24x128xf32>
    %200 = arith.mulf %195, %199 : vector<24x128xf32>
    %201 = vector.broadcast %181 : vector<1x128xf32> to vector<24x128xf32>
    %202 = arith.mulf %200, %201 : vector<24x128xf32>
    %203 = vector.broadcast %182 : vector<1x128xf32> to vector<24x128xf32>
    %204 = arith.addf %202, %203 : vector<24x128xf32>
    %cst_98 = arith.constant 0.000000e+00 : f32
    %205 = vector.broadcast %cst_98 : f32 to vector<24x128xf32>
    %206 = arith.maximumf %204, %205 : vector<24x128xf32>
    %207 = arith.addf %206, %39 : vector<24x128xf32>
    %208 = arith.truncf %180 : vector<16x128xf32> to vector<16x128xbf16>
    %209 = arith.truncf %207 : vector<24x128xf32> to vector<24x128xbf16>
    %c2_99 = arith.constant 2 : index
    %c0_100 = arith.constant 0 : index
    %c0_101 = arith.constant 0 : index
    %210 = vector.load %arg8[%c2_99, %c0_100, %c0_101] : memref<4x128x384xbf16, #tpu.memory_space<vmem>>, vector<1x128x384xbf16>
    %211 = vector.shape_cast %210 : vector<1x128x384xbf16> to vector<128x384xbf16>
    %cst_102 = arith.constant dense<0.000000e+00> : vector<16x384xf32>
    %212 = tpu.matmul %208, %211, %cst_102 {dimension_numbers = #tpu.dot_dimension_numbers<[1], [0], [0], [1], [0, 0, 1, 1], [], []>} : vector<16x128xbf16>, vector<128x384xbf16>, vector<16x384xf32> -> vector<16x384xf32>
    %c2_103 = arith.constant 2 : index
    %c0_104 = arith.constant 0 : index
    %213 = vector.load %arg9[%c2_103, %c0_104] : memref<4x384xf32, #tpu.memory_space<vmem>>, vector<1x384xf32>
    %214 = vector.broadcast %213 : vector<1x384xf32> to vector<16x384xf32>
    %215 = arith.addf %212, %214 : vector<16x384xf32>
    %216 = arith.truncf %215 : vector<16x384xf32> to vector<16x384xbf16>
    %c3_105 = arith.constant 3 : index
    %c0_106 = arith.constant 0 : index
    %c0_107 = arith.constant 0 : index
    %217 = vector.load %arg8[%c3_105, %c0_106, %c0_107] : memref<4x128x384xbf16, #tpu.memory_space<vmem>>, vector<1x128x384xbf16>
    %218 = vector.shape_cast %217 : vector<1x128x384xbf16> to vector<128x384xbf16>
    %cst_108 = arith.constant dense<0.000000e+00> : vector<24x384xf32>
    %219 = tpu.matmul %209, %218, %cst_108 {dimension_numbers = #tpu.dot_dimension_numbers<[1], [0], [0], [1], [0, 0, 1, 1], [], []>} : vector<24x128xbf16>, vector<128x384xbf16>, vector<24x384xf32> -> vector<24x384xf32>
    %c3_109 = arith.constant 3 : index
    %c0_110 = arith.constant 0 : index
    %220 = vector.load %arg9[%c3_109, %c0_110] : memref<4x384xf32, #tpu.memory_space<vmem>>, vector<1x384xf32>
    %221 = vector.broadcast %220 : vector<1x384xf32> to vector<24x384xf32>
    %222 = arith.addf %219, %221 : vector<24x384xf32>
    %223 = arith.truncf %222 : vector<24x384xf32> to vector<24x384xbf16>
    %cst_111 = arith.constant 0.000000e+00 : f32
    %224 = vector.broadcast %cst_111 : f32 to vector<16x128xf32>
    %cst_112 = arith.constant 0.000000e+00 : f32
    %225 = vector.broadcast %cst_112 : f32 to vector<24x128xf32>
    %c6_113 = arith.constant 6 : index
    %c0_114 = arith.constant 0 : index
    %c0_115 = arith.constant 0 : index
    %226 = vector.load %arg6[%c6_113, %c0_114, %c0_115] : memref<8x128x128xbf16, #tpu.memory_space<vmem>>, vector<1x128x128xbf16>
    %227 = vector.shape_cast %226 : vector<1x128x128xbf16> to vector<128x128xbf16>
    %228 = vector.extract_strided_slice %216 {offsets = [0, 0], sizes = [16, 256], strides = [1, 1]} : vector<16x384xbf16> to vector<16x256xbf16>
    %229 = vector.extract_strided_slice %223 {offsets = [0, 256], sizes = [24, 128], strides = [1, 1]} : vector<24x384xbf16> to vector<24x128xbf16>
    %cst_116 = arith.constant dense<0.000000e+00> : vector<40x256xf32>
    %230 = tpu.matmul %0, %228, %cst_116 {dimension_numbers = #tpu.dot_dimension_numbers<[1], [0], [0], [1], [0, 0, 1, 1], [], []>} : vector<40x16xbf16>, vector<16x256xbf16>, vector<40x256xf32> -> vector<40x256xf32>
    %231 = vector.extract_strided_slice %230 {offsets = [0, 0], sizes = [40, 128], strides = [1, 1]} : vector<40x256xf32> to vector<40x128xf32>
    %232 = vector.extract_strided_slice %230 {offsets = [0, 128], sizes = [40, 128], strides = [1, 1]} : vector<40x256xf32> to vector<40x128xf32>
    %cst_117 = arith.constant dense<0.000000e+00> : vector<1x128xf32>
    %233 = tpu.matmul %5, %229, %cst_117 {dimension_numbers = #tpu.dot_dimension_numbers<[1], [0], [0], [1], [0, 0, 1, 1], [], []>} : vector<1x24xbf16>, vector<24x128xbf16>, vector<1x128xf32> -> vector<1x128xf32>
    %234 = arith.truncf %231 : vector<40x128xf32> to vector<40x128xbf16>
    %cst_118 = arith.constant dense<0.000000e+00> : vector<40x128xf32>
    %235 = tpu.matmul %234, %227, %cst_118 {dimension_numbers = #tpu.dot_dimension_numbers<[1], [0], [0], [1], [0, 0, 1, 1], [], []>} : vector<40x128xbf16>, vector<128x128xbf16>, vector<40x128xf32> -> vector<40x128xf32>
    %236 = vector.broadcast %233 : vector<1x128xf32> to vector<40x128xf32>
    %237 = arith.mulf %235, %236 : vector<40x128xf32>
    %cst_119 = arith.constant dense<0.000000e+00> : vector<40xf32>
    %238 = vector.multi_reduction <add>, %237, %cst_119 [1] : vector<40x128xf32> to vector<40xf32>
    %239 = vector.shape_cast %238 : vector<40xf32> to vector<40x1xf32>
    %cst_120 = arith.constant 0.176776692 : f32
    %240 = vector.broadcast %cst_120 : f32 to vector<40x1xf32>
    %241 = arith.mulf %239, %240 : vector<40x1xf32>
    %cst_121 = arith.constant 0.000000e+00 : f32
    %242 = vector.broadcast %cst_121 : f32 to vector<40x24xf32>
    %243 = arith.cmpf ogt, %2, %242 : vector<40x24xf32>
    %cst_122 = arith.constant -1.000000e+30 : f32
    %244 = vector.shape_cast %241 : vector<40x1xf32> to vector<40x1xf32>
    %245 = vector.broadcast %244 : vector<40x1xf32> to vector<40x24xf32>
    %246 = vector.broadcast %cst_122 : f32 to vector<40x24xf32>
    %247 = arith.select %243, %245, %246 : vector<40x24xi1>, vector<40x24xf32>
    %cst_123 = arith.constant dense<0xFF800000> : vector<24xf32>
    %248 = vector.multi_reduction <maximumf>, %247, %cst_123 [0] : vector<40x24xf32> to vector<24xf32>
    %249 = vector.shape_cast %248 : vector<24xf32> to vector<1x24xf32>
    %cst_124 = arith.constant 0.000000e+00 : f32
    %250 = vector.shape_cast %249 : vector<1x24xf32> to vector<1x24xf32>
    %251 = vector.broadcast %250 : vector<1x24xf32> to vector<40x24xf32>
    %252 = vector.broadcast %cst_124 : f32 to vector<40x24xf32>
    %253 = arith.select %243, %251, %252 : vector<40x24xi1>, vector<40x24xf32>
    %cst_125 = arith.constant dense<0.000000e+00> : vector<40xf32>
    %254 = vector.multi_reduction <add>, %253, %cst_125 [1] : vector<40x24xf32> to vector<40xf32>
    %255 = vector.shape_cast %254 : vector<40xf32> to vector<40x1xf32>
    %256 = arith.subf %241, %255 : vector<40x1xf32>
    %257 = math.exp %256 : vector<40x1xf32>
    %cst_126 = arith.constant 0.000000e+00 : f32
    %258 = vector.shape_cast %257 : vector<40x1xf32> to vector<40x1xf32>
    %259 = vector.broadcast %258 : vector<40x1xf32> to vector<40x24xf32>
    %260 = vector.broadcast %cst_126 : f32 to vector<40x24xf32>
    %261 = arith.select %243, %259, %260 : vector<40x24xi1>, vector<40x24xf32>
    %cst_127 = arith.constant dense<0.000000e+00> : vector<24xf32>
    %262 = vector.multi_reduction <add>, %261, %cst_127 [0] : vector<40x24xf32> to vector<24xf32>
    %263 = vector.shape_cast %262 : vector<24xf32> to vector<1x24xf32>
    %cst_128 = arith.constant 0.000000e+00 : f32
    %264 = vector.shape_cast %263 : vector<1x24xf32> to vector<1x24xf32>
    %265 = vector.broadcast %264 : vector<1x24xf32> to vector<40x24xf32>
    %266 = vector.broadcast %cst_128 : f32 to vector<40x24xf32>
    %267 = arith.select %243, %265, %266 : vector<40x24xi1>, vector<40x24xf32>
    %cst_129 = arith.constant dense<0.000000e+00> : vector<40xf32>
    %268 = vector.multi_reduction <add>, %267, %cst_129 [1] : vector<40x24xf32> to vector<40xf32>
    %269 = vector.shape_cast %268 : vector<40xf32> to vector<40x1xf32>
    %270 = arith.divf %257, %269 : vector<40x1xf32>
    %271 = vector.broadcast %270 : vector<40x1xf32> to vector<40x128xf32>
    %272 = arith.mulf %271, %232 : vector<40x128xf32>
    %cst_130 = arith.constant dense<0.000000e+00> : vector<24x128xf32>
    %273 = tpu.matmul %2, %272, %cst_130 {dimension_numbers = #tpu.dot_dimension_numbers<[0], [0], [1], [1], [0, 1, 1, 1], [], []>} : vector<40x24xf32>, vector<40x128xf32>, vector<24x128xf32> -> vector<24x128xf32>
    %274 = arith.addf %225, %273 : vector<24x128xf32>
    %c7_131 = arith.constant 7 : index
    %c0_132 = arith.constant 0 : index
    %c0_133 = arith.constant 0 : index
    %275 = vector.load %arg6[%c7_131, %c0_132, %c0_133] : memref<8x128x128xbf16, #tpu.memory_space<vmem>>, vector<1x128x128xbf16>
    %276 = vector.shape_cast %275 : vector<1x128x128xbf16> to vector<128x128xbf16>
    %277 = vector.extract_strided_slice %223 {offsets = [0, 0], sizes = [24, 256], strides = [1, 1]} : vector<24x384xbf16> to vector<24x256xbf16>
    %278 = vector.extract_strided_slice %216 {offsets = [0, 256], sizes = [16, 128], strides = [1, 1]} : vector<16x384xbf16> to vector<16x128xbf16>
    %cst_134 = arith.constant dense<0.000000e+00> : vector<32x256xf32>
    %279 = tpu.matmul %6, %277, %cst_134 {dimension_numbers = #tpu.dot_dimension_numbers<[1], [0], [0], [1], [0, 0, 1, 1], [], []>} : vector<32x24xbf16>, vector<24x256xbf16>, vector<32x256xf32> -> vector<32x256xf32>
    %280 = vector.extract_strided_slice %279 {offsets = [0, 0], sizes = [32, 128], strides = [1, 1]} : vector<32x256xf32> to vector<32x128xf32>
    %281 = vector.extract_strided_slice %279 {offsets = [0, 128], sizes = [32, 128], strides = [1, 1]} : vector<32x256xf32> to vector<32x128xf32>
    %cst_135 = arith.constant dense<0.000000e+00> : vector<1x128xf32>
    %282 = tpu.matmul %11, %278, %cst_135 {dimension_numbers = #tpu.dot_dimension_numbers<[1], [0], [0], [1], [0, 0, 1, 1], [], []>} : vector<1x16xbf16>, vector<16x128xbf16>, vector<1x128xf32> -> vector<1x128xf32>
    %283 = arith.truncf %280 : vector<32x128xf32> to vector<32x128xbf16>
    %cst_136 = arith.constant dense<0.000000e+00> : vector<32x128xf32>
    %284 = tpu.matmul %283, %276, %cst_136 {dimension_numbers = #tpu.dot_dimension_numbers<[1], [0], [0], [1], [0, 0, 1, 1], [], []>} : vector<32x128xbf16>, vector<128x128xbf16>, vector<32x128xf32> -> vector<32x128xf32>
    %285 = vector.broadcast %282 : vector<1x128xf32> to vector<32x128xf32>
    %286 = arith.mulf %284, %285 : vector<32x128xf32>
    %cst_137 = arith.constant dense<0.000000e+00> : vector<32xf32>
    %287 = vector.multi_reduction <add>, %286, %cst_137 [1] : vector<32x128xf32> to vector<32xf32>
    %288 = vector.shape_cast %287 : vector<32xf32> to vector<32x1xf32>
    %cst_138 = arith.constant 0.176776692 : f32
    %289 = vector.broadcast %cst_138 : f32 to vector<32x1xf32>
    %290 = arith.mulf %288, %289 : vector<32x1xf32>
    %cst_139 = arith.constant 0.000000e+00 : f32
    %291 = vector.broadcast %cst_139 : f32 to vector<32x16xf32>
    %292 = arith.cmpf ogt, %8, %291 : vector<32x16xf32>
    %cst_140 = arith.constant -1.000000e+30 : f32
    %293 = vector.shape_cast %290 : vector<32x1xf32> to vector<32x1xf32>
    %294 = vector.broadcast %293 : vector<32x1xf32> to vector<32x16xf32>
    %295 = vector.broadcast %cst_140 : f32 to vector<32x16xf32>
    %296 = arith.select %292, %294, %295 : vector<32x16xi1>, vector<32x16xf32>
    %cst_141 = arith.constant dense<0xFF800000> : vector<16xf32>
    %297 = vector.multi_reduction <maximumf>, %296, %cst_141 [0] : vector<32x16xf32> to vector<16xf32>
    %298 = vector.shape_cast %297 : vector<16xf32> to vector<1x16xf32>
    %cst_142 = arith.constant 0.000000e+00 : f32
    %299 = vector.shape_cast %298 : vector<1x16xf32> to vector<1x16xf32>
    %300 = vector.broadcast %299 : vector<1x16xf32> to vector<32x16xf32>
    %301 = vector.broadcast %cst_142 : f32 to vector<32x16xf32>
    %302 = arith.select %292, %300, %301 : vector<32x16xi1>, vector<32x16xf32>
    %cst_143 = arith.constant dense<0.000000e+00> : vector<32xf32>
    %303 = vector.multi_reduction <add>, %302, %cst_143 [1] : vector<32x16xf32> to vector<32xf32>
    %304 = vector.shape_cast %303 : vector<32xf32> to vector<32x1xf32>
    %305 = arith.subf %290, %304 : vector<32x1xf32>
    %306 = math.exp %305 : vector<32x1xf32>
    %cst_144 = arith.constant 0.000000e+00 : f32
    %307 = vector.shape_cast %306 : vector<32x1xf32> to vector<32x1xf32>
    %308 = vector.broadcast %307 : vector<32x1xf32> to vector<32x16xf32>
    %309 = vector.broadcast %cst_144 : f32 to vector<32x16xf32>
    %310 = arith.select %292, %308, %309 : vector<32x16xi1>, vector<32x16xf32>
    %cst_145 = arith.constant dense<0.000000e+00> : vector<16xf32>
    %311 = vector.multi_reduction <add>, %310, %cst_145 [0] : vector<32x16xf32> to vector<16xf32>
    %312 = vector.shape_cast %311 : vector<16xf32> to vector<1x16xf32>
    %cst_146 = arith.constant 0.000000e+00 : f32
    %313 = vector.shape_cast %312 : vector<1x16xf32> to vector<1x16xf32>
    %314 = vector.broadcast %313 : vector<1x16xf32> to vector<32x16xf32>
    %315 = vector.broadcast %cst_146 : f32 to vector<32x16xf32>
    %316 = arith.select %292, %314, %315 : vector<32x16xi1>, vector<32x16xf32>
    %cst_147 = arith.constant dense<0.000000e+00> : vector<32xf32>
    %317 = vector.multi_reduction <add>, %316, %cst_147 [1] : vector<32x16xf32> to vector<32xf32>
    %318 = vector.shape_cast %317 : vector<32xf32> to vector<32x1xf32>
    %319 = arith.divf %306, %318 : vector<32x1xf32>
    %320 = vector.broadcast %319 : vector<32x1xf32> to vector<32x128xf32>
    %321 = arith.mulf %320, %281 : vector<32x128xf32>
    %cst_148 = arith.constant dense<0.000000e+00> : vector<16x128xf32>
    %322 = tpu.matmul %8, %321, %cst_148 {dimension_numbers = #tpu.dot_dimension_numbers<[0], [0], [1], [1], [0, 1, 1, 1], [], []>} : vector<32x16xf32>, vector<32x128xf32>, vector<16x128xf32> -> vector<16x128xf32>
    %323 = arith.addf %224, %322 : vector<16x128xf32>
    %324 = arith.addf %323, %33 : vector<16x128xf32>
    %c0_149 = arith.constant 0 : index
    %c0_150 = arith.constant 0 : index
    %325 = vector.load %arg10[%c0_149, %c0_150] : memref<16x128xf32, #tpu.memory_space<vmem>>, vector<16x128xf32>
    tpu.vector_store %arg10[%c0_149, %c0_150], %324 {strides = array<i32>} : memref<16x128xf32, #tpu.memory_space<vmem>>, vector<16x128xf32>,
    %326 = arith.addf %274, %39 : vector<24x128xf32>
    %c0_151 = arith.constant 0 : index
    %c0_152 = arith.constant 0 : index
    %327 = vector.load %arg11[%c0_151, %c0_152] : memref<24x128xf32, #tpu.memory_space<vmem>>, vector<24x128xf32>
    tpu.vector_store %arg11[%c0_151, %c0_152], %326 {strides = array<i32>} : memref<24x128xf32, #tpu.memory_space<vmem>>, vector<24x128xf32>,
    return
  }
}

</mosaic_0001>

<llo_original>
// kernel: tpu_custom_call.1
$region0: #{tpu_custom_call.1}
  #allocation0 [shape = 'u32[]', space=smem, size = 0x4, offset = 0x4, fixed_abs, tag = 'smem constant byte address 0x4 - core index']
  #allocation1 [shape = 'u32[144,128]{1,0:T(1,128)}', space=vmem, size = 0x12000, scoped, tag = 'internal scratch']
  %s0 = inlined_call_operand.vmem [shape: bf16[16,128], index: 0, kind: input, shape index: {}]
  %s1 = inlined_call_operand.vmem [shape: bf16[24,128], index: 1, kind: input, shape index: {}]
  %s2 = inlined_call_operand.vmem [shape: bf16[40,16], index: 2, kind: input, shape index: {}]
  %s3 = inlined_call_operand.vmem [shape: bf16[40,24], index: 3, kind: input, shape index: {}]
  %s4 = inlined_call_operand.vmem [shape: bf16[32,24], index: 4, kind: input, shape index: {}]
  %s5 = inlined_call_operand.vmem [shape: bf16[32,16], index: 5, kind: input, shape index: {}]
  %s6 = inlined_call_operand.hbm [shape: bf16[8,128,128], index: 6, kind: input, shape index: {}]
  %s7 = inlined_call_operand.vmem [shape: f32[8,128], index: 7, kind: input, shape index: {}]
  %s8 = inlined_call_operand.hbm [shape: bf16[4,128,384], index: 8, kind: input, shape index: {}]
  %s9 = inlined_call_operand.vmem [shape: f32[4,384], index: 9, kind: input, shape index: {}]
  %s10 = inlined_call_operand.hbm [shape: f32[16,128], index: 10, kind: output, shape index: {0}]
  %s11 = inlined_call_operand.hbm [shape: f32[24,128], index: 11, kind: output, shape index: {1}]
  %12 = xla_tuple %s10, %s11
  %s13 = sld [smem:[#allocation0]]
  $region66: #{tpu_custom_call.1} parent=0
    _
  %s15 = ssub.s32 1, %s13
  %s16 = scalar_select 0, %s15, %s13
  $region1: #{tpu_custom_call.1} parent=0
    #allocation2 [shape = 'u8[262144]{0}', space=vmem, size = 0x40000, scoped, tag = 'input window, operand 6, single buffered']
    #allocation3 [shape = 's32[1]{0}', space=sflag, size = 0x4, scoped, tag = 'scoped memory for tpu_custom_call.1']
    #allocation4 [shape = 's32[1]{0}', space=sflag, size = 0x4, scoped, tag = 'scoped memory for tpu_custom_call.1']
    #allocation5 [shape = 'u8[393216]{0}', space=vmem, size = 0x60000, scoped, tag = 'input window, operand 8, single buffered']
    #allocation6 [shape = 's32[1]{0}', space=sflag, size = 0x4, scoped, tag = 'scoped memory for tpu_custom_call.1']
    #allocation7 [shape = 'u8[8192]{0}', space=vmem, size = 0x2000, scoped, tag = 'output window, operand 0, single buffered']
    #allocation8 [shape = 'u8[12288]{0}', space=vmem, size = 0x3000, scoped, tag = 'output window, operand 1, single buffered']
    #allocation9 [shape = 's32[1]{0}', space=sflag, size = 0x4, scoped, tag = 'scoped memory for tpu_custom_call.1']
    %17 = vsyncpa [#allocation3], 0
    %18 = vsyncpa [#allocation6], 0
    %19 = vsyncpa [#allocation4], 0
    %20 = vsyncpa [#allocation9], 0
    // Predicated region
    $region2: #{tpu_custom_call.1} parent=1 // pred_check
      _
    $region3: #{tpu_custom_call.1} parent=1 // pred_check_branch
      %22 = sbr.rel (0) target = $region5
    $region4: #{tpu_custom_call.1} parent=1 // pred_region
      _
    $region5: #{tpu_custom_call.1} parent=1 // pred_fallthru
      _
    // Predicated region
    $region6: #{tpu_custom_call.1} parent=1 // pred_check
      _
    $region7: #{tpu_custom_call.1} parent=1 // pred_check_branch
      %24 = sbr.rel (0) target = $region9
    $region8: #{tpu_custom_call.1} parent=1 // pred_region
      _
    $region9: #{tpu_custom_call.1} parent=1 // pred_fallthru
      _
    // Predicated region
    $region10: #{tpu_custom_call.1} parent=1 // pred_check
      _
    $region11: #{tpu_custom_call.1} parent=1 // pred_check_branch
      %26 = sbr.rel (0) target = $region13
    $region12: #{tpu_custom_call.1} parent=1 // pred_region
      _
    $region13: #{tpu_custom_call.1} parent=1 // pred_fallthru
      _
    // Predicated region
    $region14: #{tpu_custom_call.1} parent=1 // pred_check
      _
    $region15: #{tpu_custom_call.1} parent=1 // pred_check_branch
      %28 = sbr.rel (0) target = $region17
    $region16: #{tpu_custom_call.1} parent=1 // pred_region
      _
    $region17: #{tpu_custom_call.1} parent=1 // pred_fallthru
      _
    // Predicated region
    $region18: #{tpu_custom_call.1} parent=1 // pred_check
      _
    $region19: #{tpu_custom_call.1} parent=1 // pred_check_branch
      %30 = sbr.rel (0) target = $region21
    $region20: #{tpu_custom_call.1} parent=1 // pred_region
      _
    $region21: #{tpu_custom_call.1} parent=1 // pred_fallthru
      _
    // Predicated region
    $region22: #{tpu_custom_call.1} parent=1 // pred_check
      _
    $region23: #{tpu_custom_call.1} parent=1 // pred_check_branch
      %32 = sbr.rel (0) target = $region25
    $region24: #{tpu_custom_call.1} parent=1 // pred_region
      _
    $region25: #{tpu_custom_call.1} parent=1 // pred_fallthru
      _
    // Predicated region
    $region26: #{tpu_custom_call.1} parent=1 // pred_check
      _
    $region27: #{tpu_custom_call.1} parent=1 // pred_check_branch
      %34 = sbr.rel (0) target = $region29
    $region28: #{tpu_custom_call.1} parent=1 // pred_region
      %s36 = ssub.s32 8192, 8192
      %37 = vsyncadd [#allocation3], %s36
      %s38 = sshll.u32 [#allocation2], 4
      %s39 = int_to_ptr.vmem [resolvable:$true] %s38
      %44 = dma.hbm_to_vmem [thread:$0]  %s6, 8192, %s39, [#allocation3], 64, 64, 4
    $region29: #{tpu_custom_call.1} parent=1 // pred_fallthru
      _
    // Predicated region
    $region30: #{tpu_custom_call.1} parent=1 // pred_check
      _
    $region31: #{tpu_custom_call.1} parent=1 // pred_check_branch
      %46 = sbr.rel (0) target = $region33
    $region32: #{tpu_custom_call.1} parent=1 // pred_region
      _
    $region33: #{tpu_custom_call.1} parent=1 // pred_fallthru
      _
    // Predicated region
    $region34: #{tpu_custom_call.1} parent=1 // pred_check
      _
    $region35: #{tpu_custom_call.1} parent=1 // pred_check_branch
      %48 = sbr.rel (0) target = $region37
    $region36: #{tpu_custom_call.1} parent=1 // pred_region
      %s50 = ssub.s32 12288, 12288
      %51 = vsyncadd [#allocation6], %s50
      %s52 = sshll.u32 [#allocation5], 4
      %s53 = int_to_ptr.vmem [resolvable:$true] %s52
      %58 = dma.hbm_to_vmem [thread:$0]  %s8, 12288, %s53, [#allocation6], 192, 192, 12
    $region37: #{tpu_custom_call.1} parent=1 // pred_fallthru
      _
    // Predicated region
    $region38: #{tpu_custom_call.1} parent=1 // pred_check
      _
    $region39: #{tpu_custom_call.1} parent=1 // pred_check_branch
      %60 = sbr.rel (0) target = $region41
    $region40: #{tpu_custom_call.1} parent=1 // pred_region
      _
    $region41: #{tpu_custom_call.1} parent=1 // pred_fallthru
      _
    // Predicated region
    $region42: #{tpu_custom_call.1} parent=1 // pred_check
      _
    $region43: #{tpu_custom_call.1} parent=1 // pred_check_branch
      %62 = sbr.rel (0) target = $region45
    $region44: #{tpu_custom_call.1} parent=1 // pred_region
      %63 = dma.done [#allocation3], 8192
    $region45: #{tpu_custom_call.1} parent=1 // pred_fallthru
      _
    // Predicated region
    $region46: #{tpu_custom_call.1} parent=1 // pred_check
      _
    $region47: #{tpu_custom_call.1} parent=1 // pred_check_branch
      %65 = sbr.rel (0) target = $region49
    $region48: #{tpu_custom_call.1} parent=1 // pred_region
      %66 = dma.done [#allocation6], 12288
    $region49: #{tpu_custom_call.1} parent=1 // pred_fallthru
      _
    %v68 = vld [vmem:[%s2] sm:$0xf]
    %v69 = vld [vmem:[%s2 + $0x4] sm:$0xf]
    %v70 = vld [vmem:[%s2 + $0x8] sm:$0xf]
    %v71 = vld [vmem:[%s2 + $0xc] sm:$0xf]
    %v72 = vld [vmem:[%s2 + $0x10] sm:$0xf]
    %v73 = vld [vmem:[%s3] sm:$0xf]
    %v74 = vld [vmem:[%s3 + $0x4] sm:$0xf]
    %v75 = vld [vmem:[%s3 + $0x8] sm:$0xf]
    %v76 = vld [vmem:[%s3 + $0xc] sm:$0xf]
    %v77 = vld [vmem:[%s3 + $0x10] sm:$0xf]
    %v78 = vunpack.c.l.bf16 %v73
    %v79 = vunpack.c.l.bf16 %v74
    %v80 = vunpack.c.l.bf16 %v75
    %v81 = vunpack.c.l.bf16 %v76
    %v82 = vunpack.c.l.bf16 %v77
    %vm83 = vcmask 195584
    %v84 = vsel %vm83, %v78, 0.0
    %v85 = vsel %vm83, %v79, 0.0
    %v86 = vadd.f32 %v84, %v85
    %v87 = vsel %vm83, %v80, 0.0
    %v88 = vadd.f32 %v86, %v87
    %v89 = vsel %vm83, %v81, 0.0
    %v90 = vadd.f32 %v88, %v89
    %v91 = vsel %vm83, %v82, 0.0
    %v92 = vadd.f32 %v90, %v91
    %v93 = vrot.slane %v92, 4
    %v94 = vadd.f32 %v92, %v93
    %v95 = vrot.slane %v94, 2
    %v96 = vadd.f32 %v94, %v95
    %v97 = vrot.slane %v96, 1
    %v98 = vadd.f32 %v96, %v97
    %v99 = vpack.c.bf16 %v98, %v98
    %v100 = vld [vmem:[%s4] sm:$0xf]
    %v101 = vld [vmem:[%s4 + $0x4] sm:$0xf]
    %v102 = vld [vmem:[%s4 + $0x8] sm:$0xf]
    %v103 = vld [vmem:[%s4 + $0xc] sm:$0xf]
    %v104 = vld [vmem:[%s5] sm:$0xf]
    %v105 = vld [vmem:[%s5 + $0x4] sm:$0xf]
    %v106 = vld [vmem:[%s5 + $0x8] sm:$0xf]
    %v107 = vld [vmem:[%s5 + $0xc] sm:$0xf]
    %v108 = vunpack.c.l.bf16 %v104
    %v109 = vunpack.c.l.bf16 %v105
    %v110 = vunpack.c.l.bf16 %v106
    %v111 = vunpack.c.l.bf16 %v107
    %vm112 = vcmask 130048
    %v113 = vsel %vm112, %v108, 0.0
    %v114 = vsel %vm112, %v109, 0.0
    %v115 = vadd.f32 %v113, %v114
    %v116 = vsel %vm112, %v110, 0.0
    %v117 = vadd.f32 %v115, %v116
    %v118 = vsel %vm112, %v111, 0.0
    %v119 = vadd.f32 %v117, %v118
    %v120 = vrot.slane %v119, 4
    %v121 = vadd.f32 %v119, %v120
    %v122 = vrot.slane %v121, 2
    %v123 = vadd.f32 %v121, %v122
    %v124 = vrot.slane %v123, 1
    %v125 = vadd.f32 %v123, %v124
    %v126 = vpack.c.bf16 %v125, %v125
    %v127 = vld [vmem:[%s0] sm:$0xf]
    %v128 = vld [vmem:[%s0 + $0x4] sm:$0xf]
    %v129 = vld [vmem:[#allocation2] sm:$0xf]
    %v130 = vld [vmem:[#allocation2 + $0x4] sm:$0xf]
    %v131 = vld [vmem:[#allocation2 + $0x8] sm:$0xf]
    %v132 = vld [vmem:[#allocation2 + $0xc] sm:$0xf]
    %v133 = vld [vmem:[#allocation2 + $0x10] sm:$0xf]
    %v134 = vld [vmem:[#allocation2 + $0x14] sm:$0xf]
    %v135 = vld [vmem:[#allocation2 + $0x18] sm:$0xf]
    %v136 = vld [vmem:[#allocation2 + $0x1c] sm:$0xf]
    %v137 = vld [vmem:[#allocation2 + $0x20] sm:$0xf]
    %v138 = vld [vmem:[#allocation2 + $0x24] sm:$0xf]
    %v139 = vld [vmem:[#allocation2 + $0x28] sm:$0xf]
    %v140 = vld [vmem:[#allocation2 + $0x2c] sm:$0xf]
    %v141 = vld [vmem:[#allocation2 + $0x30] sm:$0xf]
    %v142 = vld [vmem:[#allocation2 + $0x34] sm:$0xf]
    %v143 = vld [vmem:[#allocation2 + $0x38] sm:$0xf]
    %v144 = vld [vmem:[#allocation2 + $0x3c] sm:$0xf]
    %v145 = vld [vmem:[%s7] sm:$0x1]
    %v146 = vlaneseq
    %v147 = vshrl.u32 %v146, 7
    %v148 = vsub.s32 0, %v147
    %v149 = vrot.slane %v145, %v148
    %v152 = vunpack.c.l.b16 %v127
    %v153 = vunpack.c.l.b16 %v128
    %v154 = vpack.c.b16 %v153, %v152
    %v172 = vunpack.c.l.b16 %v129
    %v173 = vunpack.c.l.b16 %v130
    %v174 = vunpack.c.l.b16 %v131
    %v175 = vunpack.c.l.b16 %v132
    %v176 = vunpack.c.l.b16 %v133
    %v177 = vunpack.c.l.b16 %v134
    %v178 = vunpack.c.l.b16 %v135
    %v179 = vunpack.c.l.b16 %v136
    %v180 = vunpack.c.l.b16 %v137
    %v181 = vunpack.c.l.b16 %v138
    %v182 = vunpack.c.l.b16 %v139
    %v183 = vunpack.c.l.b16 %v140
    %v184 = vunpack.c.l.b16 %v141
    %v185 = vunpack.c.l.b16 %v142
    %v186 = vunpack.c.l.b16 %v143
    %v187 = vunpack.c.l.b16 %v144
    %v188 = vpack.c.b16 %v173, %v172
    %v189 = vpack.c.b16 %v175, %v174
    %v190 = vpack.c.b16 %v177, %v176
    %v191 = vpack.c.b16 %v179, %v178
    %v192 = vpack.c.b16 %v181, %v180
    %v193 = vpack.c.b16 %v183, %v182
    %v194 = vpack.c.b16 %v185, %v184
    %v195 = vpack.c.b16 %v187, %v186
    %204 = vmatprep.subr.bf16.mxu0 0
    %205 = vmatpush1.bf16.msra.mxu0 %v188
    %206 = vmatprep.subr.bf16.mxu0 0
    %207 = vmatpush1.bf16.msra.mxu0 %v189
    %208 = vmatprep.subr.bf16.mxu0 0
    %209 = vmatpush1.bf16.msra.mxu0 %v190
    %210 = vmatprep.subr.bf16.mxu0 0
    %211 = vmatpush1.bf16.msra.mxu0 %v191
    %212 = vmatprep.subr.bf16.mxu0 0
    %213 = vmatpush1.bf16.msra.mxu0 %v192
    %214 = vmatprep.subr.bf16.mxu0 0
    %215 = vmatpush1.bf16.msra.mxu0 %v193
    %216 = vmatprep.subr.bf16.mxu0 0
    %217 = vmatpush1.bf16.msra.mxu0 %v194
    %218 = vmatprep.subr.bf16.mxu0 0
    %219 = vmatpush1.bf16.msra.mxu0 %v195
    %220 = vmatprep.subr.bf16.mxu0 0
    %221 = vmatpush1.bf16.msra.mxu0 0
    %222 = vmatprep.subr.bf16.mxu0 0
    %223 = vmatpush1.bf16.msra.mxu0 0
    %224 = vmatprep.subr.bf16.mxu0 0
    %225 = vmatpush1.bf16.msra.mxu0 0
    %226 = vmatprep.subr.bf16.mxu0 0
    %227 = vmatpush1.bf16.msra.mxu0 0
    %228 = vmatprep.subr.bf16.mxu0 0
    %229 = vmatpush1.bf16.msra.mxu0 0
    %230 = vmatprep.subr.bf16.mxu0 0
    %231 = vmatpush1.bf16.msra.mxu0 0
    %232 = vmatprep.subr.bf16.mxu0 0
    %233 = vmatpush1.bf16.msra.mxu0 0
    %234 = vmatprep.subr.bf16.mxu0 0
    %235 = vmatpush1.bf16.msra.mxu0 0
    %236 = vmatprep.mubr.bf16.mxu0 0
    %237 = vmatmul.mubr.bf16.gmra.mrb[0].mxu0 %v154
    %v238 = vpop.f32.mrb[0].mxu0
    %v239 = vadd.f32 %v149, %v238
    %v240 = vpop.f32.mrb[0].mxu0
    %v241 = vpop.f32.mrb[0].mxu0
    %v242 = vadd.f32 %v149, %v241
    %v243 = vpop.f32.mrb[0].mxu0
    %244 = vdwg.mxu0
    %v245 = vld [vmem:[%s1] sm:$0xf]
    %v246 = vld [vmem:[%s1 + $0x4] sm:$0xf]
    %v247 = vld [vmem:[%s1 + $0x8] sm:$0xf]
    %s248 = scalar_lea.vmem [#allocation2], 64
    %v249 = vld [vmem:[%s248] sm:$0xf]
    %v250 = vld [vmem:[%s248 + $0x4] sm:$0xf]
    %v251 = vld [vmem:[%s248 + $0x8] sm:$0xf]
    %v252 = vld [vmem:[%s248 + $0xc] sm:$0xf]
    %v253 = vld [vmem:[%s248 + $0x10] sm:$0xf]
    %v254 = vld [vmem:[%s248 + $0x14] sm:$0xf]
    %v255 = vld [vmem:[%s248 + $0x18] sm:$0xf]
    %v256 = vld [vmem:[%s248 + $0x1c] sm:$0xf]
    %v257 = vld [vmem:[%s248 + $0x20] sm:$0xf]
    %v258 = vld [vmem:[%s248 + $0x24] sm:$0xf]
    %v259 = vld [vmem:[%s248 + $0x28] sm:$0xf]
    %v260 = vld [vmem:[%s248 + $0x2c] sm:$0xf]
    %v261 = vld [vmem:[%s248 + $0x30] sm:$0xf]
    %v262 = vld [vmem:[%s248 + $0x34] sm:$0xf]
    %v263 = vld [vmem:[%s248 + $0x38] sm:$0xf]
    %v264 = vld [vmem:[%s248 + $0x3c] sm:$0xf]
    %v265 = vld [vmem:[%s7 + $0x1] sm:$0x1]
    %v266 = vlaneseq
    %v267 = vshrl.u32 %v266, 7
    %v268 = vsub.s32 0, %v267
    %v269 = vrot.slane %v265, %v268
    %v273 = vunpack.c.l.b16 %v245
    %v274 = vunpack.c.l.b16 %v246
    %v275 = vunpack.c.l.b16 %v247
    %v276 = vpack.c.b16 %v274, %v273
    %v277 = vpack.c.b16 %v275, %v275
    %v296 = vunpack.c.l.b16 %v249
    %v297 = vunpack.c.l.b16 %v250
    %v298 = vunpack.c.l.b16 %v251
    %v299 = vunpack.c.l.b16 %v252
    %v300 = vunpack.c.l.b16 %v253
    %v301 = vunpack.c.l.b16 %v254
    %v302 = vunpack.c.l.b16 %v255
    %v303 = vunpack.c.l.b16 %v256
    %v304 = vunpack.c.l.b16 %v257
    %v305 = vunpack.c.l.b16 %v258
    %v306 = vunpack.c.l.b16 %v259
    %v307 = vunpack.c.l.b16 %v260
    %v308 = vunpack.c.l.b16 %v261
    %v309 = vunpack.c.l.b16 %v262
    %v310 = vunpack.c.l.b16 %v263
    %v311 = vunpack.c.l.b16 %v264
    %v312 = vpack.c.b16 %v297, %v296
    %v313 = vpack.c.b16 %v299, %v298
    %v314 = vpack.c.b16 %v301, %v300
    %v315 = vpack.c.b16 %v303, %v302
    %v316 = vpack.c.b16 %v305, %v304
    %v317 = vpack.c.b16 %v307, %v306
    %v318 = vpack.c.b16 %v309, %v308
    %v319 = vpack.c.b16 %v311, %v310
    %328 = vmatprep.subr.bf16.mxu0 0
    %329 = vmatpush1.bf16.msra.mxu0 %v312
    %330 = vmatprep.subr.bf16.mxu0 0
    %331 = vmatpush1.bf16.msra.mxu0 %v313
    %332 = vmatprep.subr.bf16.mxu0 0
    %333 = vmatpush1.bf16.msra.mxu0 %v314
    %334 = vmatprep.subr.bf16.mxu0 0
    %335 = vmatpush1.bf16.msra.mxu0 %v315
    %336 = vmatprep.subr.bf16.mxu0 0
    %337 = vmatpush1.bf16.msra.mxu0 %v316
    %338 = vmatprep.subr.bf16.mxu0 0
    %339 = vmatpush1.bf16.msra.mxu0 %v317
    %340 = vmatprep.subr.bf16.mxu0 0
    %341 = vmatpush1.bf16.msra.mxu0 %v318
    %342 = vmatprep.subr.bf16.mxu0 0
    %343 = vmatpush1.bf16.msra.mxu0 %v319
    %344 = vmatprep.subr.bf16.mxu0 0
    %345 = vmatpush1.bf16.msra.mxu0 0
    %346 = vmatprep.subr.bf16.mxu0 0
    %347 = vmatpush1.bf16.msra.mxu0 0
    %348 = vmatprep.subr.bf16.mxu0 0
    %349 = vmatpush1.bf16.msra.mxu0 0
    %350 = vmatprep.subr.bf16.mxu0 0
    %351 = vmatpush1.bf16.msra.mxu0 0
    %352 = vmatprep.subr.bf16.mxu0 0
    %353 = vmatpush1.bf16.msra.mxu0 0
    %354 = vmatprep.subr.bf16.mxu0 0
    %355 = vmatpush1.bf16.msra.mxu0 0
    %356 = vmatprep.subr.bf16.mxu0 0
    %357 = vmatpush1.bf16.msra.mxu0 0
    %358 = vmatprep.subr.bf16.mxu0 0
    %359 = vmatpush1.bf16.msra.mxu0 0
    %360 = vmatprep.mubr.bf16.mxu0 0
    %361 = vmatmul.mubr.bf16.gmra.mrb[0].mxu0 %v276
    %v362 = vpop.f32.mrb[0].mxu0
    %v363 = vadd.f32 %v269, %v362
    %v364 = vpop.f32.mrb[0].mxu0
    %v365 = vpop.f32.mrb[0].mxu0
    %v366 = vadd.f32 %v269, %v365
    %v367 = vpop.f32.mrb[0].mxu0
    %368 = vmatprep.mubr.bf16.mxu0 0
    %369 = vmatmul.mubr.bf16.gmra.mrb[0].mxu0 %v277
    %v370 = vpop.f32.mrb[0].mxu0
    %v371 = vadd.f32 %v269, %v370
    %v372 = vpop.f32.mrb[0].mxu0
    %v373 = vpop.f32.mrb[0].mxu0
    %v374 = vpop.f32.mrb[0].mxu0
    %375 = vdwg.mxu0
    %v376 = vpack.c.bf16 %v242, %v239
    %v377 = vpack.c.bf16 %v366, %v363
    %v378 = vpack.c.bf16 %v371, %v371
    %s379 = scalar_lea.vmem [#allocation2], 128
    %v380 = vld [vmem:[%s379] sm:$0xf]
    %v381 = vld [vmem:[%s379 + $0x4] sm:$0xf]
    %v382 = vld [vmem:[%s379 + $0x8] sm:$0xf]
    %v383 = vld [vmem:[%s379 + $0xc] sm:$0xf]
    %v384 = vld [vmem:[%s379 + $0x10] sm:$0xf]
    %v385 = vld [vmem:[%s379 + $0x14] sm:$0xf]
    %v386 = vld [vmem:[%s379 + $0x18] sm:$0xf]
    %v387 = vld [vmem:[%s379 + $0x1c] sm:$0xf]
    %v388 = vld [vmem:[%s379 + $0x20] sm:$0xf]
    %v389 = vld [vmem:[%s379 + $0x24] sm:$0xf]
    %v390 = vld [vmem:[%s379 + $0x28] sm:$0xf]
    %v391 = vld [vmem:[%s379 + $0x2c] sm:$0xf]
    %v392 = vld [vmem:[%s379 + $0x30] sm:$0xf]
    %v393 = vld [vmem:[%s379 + $0x34] sm:$0xf]
    %v394 = vld [vmem:[%s379 + $0x38] sm:$0xf]
    %v395 = vld [vmem:[%s379 + $0x3c] sm:$0xf]
    %v396 = vld [vmem:[%s7 + $0x2] sm:$0x1]
    %v397 = vlaneseq
    %v398 = vshrl.u32 %v397, 7
    %v399 = vsub.s32 0, %v398
    %v400 = vrot.slane %v396, %v399
    %v417 = vunpack.c.l.b16 %v380
    %v418 = vunpack.c.l.b16 %v381
    %v419 = vunpack.c.l.b16 %v382
    %v420 = vunpack.c.l.b16 %v383
    %v421 = vunpack.c.l.b16 %v384
    %v422 = vunpack.c.l.b16 %v385
    %v423 = vunpack.c.l.b16 %v386
    %v424 = vunpack.c.l.b16 %v387
    %v425 = vunpack.c.l.b16 %v388
    %v426 = vunpack.c.l.b16 %v389
    %v427 = vunpack.c.l.b16 %v390
    %v428 = vunpack.c.l.b16 %v391
    %v429 = vunpack.c.l.b16 %v392
    %v430 = vunpack.c.l.b16 %v393
    %v431 = vunpack.c.l.b16 %v394
    %v432 = vunpack.c.l.b16 %v395
    %v433 = vpack.c.b16 %v418, %v417
    %v434 = vpack.c.b16 %v420, %v419
    %v435 = vpack.c.b16 %v422, %v421
    %v436 = vpack.c.b16 %v424, %v423
    %v437 = vpack.c.b16 %v426, %v425
    %v438 = vpack.c.b16 %v428, %v427
    %v439 = vpack.c.b16 %v430, %v429
    %v440 = vpack.c.b16 %v432, %v431
    %449 = vmatprep.subr.bf16.mxu0 0
    %450 = vmatpush1.bf16.msra.mxu0 %v433
    %451 = vmatprep.subr.bf16.mxu0 0
    %452 = vmatpush1.bf16.msra.mxu0 %v434
    %453 = vmatprep.subr.bf16.mxu0 0
    %454 = vmatpush1.bf16.msra.mxu0 %v435
    %455 = vmatprep.subr.bf16.mxu0 0
    %456 = vmatpush1.bf16.msra.mxu0 %v436
    %457 = vmatprep.subr.bf16.mxu0 0
    %458 = vmatpush1.bf16.msra.mxu0 %v437
    %459 = vmatprep.subr.bf16.mxu0 0
    %460 = vmatpush1.bf16.msra.mxu0 %v438
    %461 = vmatprep.subr.bf16.mxu0 0
    %462 = vmatpush1.bf16.msra.mxu0 %v439
    %463 = vmatprep.subr.bf16.mxu0 0
    %464 = vmatpush1.bf16.msra.mxu0 %v440
    %465 = vmatprep.subr.bf16.mxu0 0
    %466 = vmatpush1.bf16.msra.mxu0 0
    %467 = vmatprep.subr.bf16.mxu0 0
    %468 = vmatpush1.bf16.msra.mxu0 0
    %469 = vmatprep.subr.bf16.mxu0 0
    %470 = vmatpush1.bf16.msra.mxu0 0
    %471 = vmatprep.subr.bf16.mxu0 0
    %472 = vmatpush1.bf16.msra.mxu0 0
    %473 = vmatprep.subr.bf16.mxu0 0
    %474 = vmatpush1.bf16.msra.mxu0 0
    %475 = vmatprep.subr.bf16.mxu0 0
    %476 = vmatpush1.bf16.msra.mxu0 0
    %477 = vmatprep.subr.bf16.mxu0 0
    %478 = vmatpush1.bf16.msra.mxu0 0
    %479 = vmatprep.subr.bf16.mxu0 0
    %480 = vmatpush1.bf16.msra.mxu0 0
    %481 = vmatprep.mubr.bf16.mxu0 0
    %482 = vmatmul.mubr.bf16.gmra.mrb[0].mxu0 %v376
    %v483 = vpop.f32.mrb[0].mxu0
    %v484 = vadd.f32 %v400, %v483
    %v485 = vpop.f32.mrb[0].mxu0
    %v486 = vpop.f32.mrb[0].mxu0
    %v487 = vadd.f32 %v400, %v486
    %v488 = vpop.f32.mrb[0].mxu0
    %489 = vdwg.mxu0
    %s490 = scalar_lea.vmem [#allocation2], 192
    %v491 = vld [vmem:[%s490] sm:$0xf]
    %v492 = vld [vmem:[%s490 + $0x4] sm:$0xf]
    %v493 = vld [vmem:[%s490 + $0x8] sm:$0xf]
    %v494 = vld [vmem:[%s490 + $0xc] sm:$0xf]
    %v495 = vld [vmem:[%s490 + $0x10] sm:$0xf]
    %v496 = vld [vmem:[%s490 + $0x14] sm:$0xf]
    %v497 = vld [vmem:[%s490 + $0x18] sm:$0xf]
    %v498 = vld [vmem:[%s490 + $0x1c] sm:$0xf]
    %v499 = vld [vmem:[%s490 + $0x20] sm:$0xf]
    %v500 = vld [vmem:[%s490 + $0x24] sm:$0xf]
    %v501 = vld [vmem:[%s490 + $0x28] sm:$0xf]
    %v502 = vld [vmem:[%s490 + $0x2c] sm:$0xf]
    %v503 = vld [vmem:[%s490 + $0x30] sm:$0xf]
    %v504 = vld [vmem:[%s490 + $0x34] sm:$0xf]
    %v505 = vld [vmem:[%s490 + $0x38] sm:$0xf]
    %v506 = vld [vmem:[%s490 + $0x3c] sm:$0xf]
    %v507 = vld [vmem:[%s7 + $0x3] sm:$0x1]
    %v508 = vlaneseq
    %v509 = vshrl.u32 %v508, 7
    %v510 = vsub.s32 0, %v509
    %v511 = vrot.slane %v507, %v510
    %v528 = vunpack.c.l.b16 %v491
    %v529 = vunpack.c.l.b16 %v492
    %v530 = vunpack.c.l.b16 %v493
    %v531 = vunpack.c.l.b16 %v494
    %v532 = vunpack.c.l.b16 %v495
    %v533 = vunpack.c.l.b16 %v496
    %v534 = vunpack.c.l.b16 %v497
    %v535 = vunpack.c.l.b16 %v498
    %v536 = vunpack.c.l.b16 %v499
    %v537 = vunpack.c.l.b16 %v500
    %v538 = vunpack.c.l.b16 %v501
    %v539 = vunpack.c.l.b16 %v502
    %v540 = vunpack.c.l.b16 %v503
    %v541 = vunpack.c.l.b16 %v504
    %v542 = vunpack.c.l.b16 %v505
    %v543 = vunpack.c.l.b16 %v506
    %v544 = vpack.c.b16 %v529, %v528
    %v545 = vpack.c.b16 %v531, %v530
    %v546 = vpack.c.b16 %v533, %v532
    %v547 = vpack.c.b16 %v535, %v534
    %v548 = vpack.c.b16 %v537, %v536
    %v549 = vpack.c.b16 %v539, %v538
    %v550 = vpack.c.b16 %v541, %v540
    %v551 = vpack.c.b16 %v543, %v542
    %560 = vmatprep.subr.bf16.mxu0 0
    %561 = vmatpush1.bf16.msra.mxu0 %v544
    %562 = vmatprep.subr.bf16.mxu0 0
    %563 = vmatpush1.bf16.msra.mxu0 %v545
    %564 = vmatprep.subr.bf16.mxu0 0
    %565 = vmatpush1.bf16.msra.mxu0 %v546
    %566 = vmatprep.subr.bf16.mxu0 0
    %567 = vmatpush1.bf16.msra.mxu0 %v547
    %568 = vmatprep.subr.bf16.mxu0 0
    %569 = vmatpush1.bf16.msra.mxu0 %v548
    %570 = vmatprep.subr.bf16.mxu0 0
    %571 = vmatpush1.bf16.msra.mxu0 %v549
    %572 = vmatprep.subr.bf16.mxu0 0
    %573 = vmatpush1.bf16.msra.mxu0 %v550
    %574 = vmatprep.subr.bf16.mxu0 0
    %575 = vmatpush1.bf16.msra.mxu0 %v551
    %576 = vmatprep.subr.bf16.mxu0 0
    %577 = vmatpush1.bf16.msra.mxu0 0
    %578 = vmatprep.subr.bf16.mxu0 0
    %579 = vmatpush1.bf16.msra.mxu0 0
    %580 = vmatprep.subr.bf16.mxu0 0
    %581 = vmatpush1.bf16.msra.mxu0 0
    %582 = vmatprep.subr.bf16.mxu0 0
    %583 = vmatpush1.bf16.msra.mxu0 0
    %584 = vmatprep.subr.bf16.mxu0 0
    %585 = vmatpush1.bf16.msra.mxu0 0
    %586 = vmatprep.subr.bf16.mxu0 0
    %587 = vmatpush1.bf16.msra.mxu0 0
    %588 = vmatprep.subr.bf16.mxu0 0
    %589 = vmatpush1.bf16.msra.mxu0 0
    %590 = vmatprep.subr.bf16.mxu0 0
    %591 = vmatpush1.bf16.msra.mxu0 0
    %592 = vmatprep.mubr.bf16.mxu0 0
    %593 = vmatmul.mubr.bf16.gmra.mrb[0].mxu0 %v377
    %v594 = vpop.f32.mrb[0].mxu0
    %v595 = vadd.f32 %v511, %v594
    %v596 = vpop.f32.mrb[0].mxu0
    %v597 = vpop.f32.mrb[0].mxu0
    %v598 = vadd.f32 %v511, %v597
    %v599 = vpop.f32.mrb[0].mxu0
    %600 = vmatprep.mubr.bf16.mxu0 0
    %601 = vmatmul.mubr.bf16.gmra.mrb[0].mxu0 %v378
    %v602 = vpop.f32.mrb[0].mxu0
    %v603 = vadd.f32 %v511, %v602
    %v604 = vpop.f32.mrb[0].mxu0
    %v605 = vpop.f32.mrb[0].mxu0
    %v606 = vpop.f32.mrb[0].mxu0
    %607 = vdwg.mxu0
    %v608 = vld [vmem:[#allocation5] sm:$0xff]
    %v609 = vld [vmem:[#allocation5 + $0x8] sm:$0xf]
    %v610 = vld [vmem:[#allocation5 + $0xc] sm:$0xff]
    %v611 = vld [vmem:[#allocation5 + $0x14] sm:$0xf]
    %v612 = vld [vmem:[#allocation5 + $0x18] sm:$0xff]
    %v613 = vld [vmem:[#allocation5 + $0x20] sm:$0xf]
    %v614 = vld [vmem:[#allocation5 + $0x24] sm:$0xff]
    %v615 = vld [vmem:[#allocation5 + $0x2c] sm:$0xf]
    %v616 = vld [vmem:[#allocation5 + $0x30] sm:$0xff]
    %v617 = vld [vmem:[#allocation5 + $0x38] sm:$0xf]
    %v618 = vld [vmem:[#allocation5 + $0x3c] sm:$0xff]
    %v619 = vld [vmem:[#allocation5 + $0x44] sm:$0xf]
    %v620 = vld [vmem:[#allocation5 + $0x48] sm:$0xff]
    %v621 = vld [vmem:[#allocation5 + $0x50] sm:$0xf]
    %v622 = vld [vmem:[#allocation5 + $0x54] sm:$0xff]
    %v623 = vld [vmem:[#allocation5 + $0x5c] sm:$0xf]
    %v624 = vld [vmem:[#allocation5 + $0x60] sm:$0xff]
    %v625 = vld [vmem:[#allocation5 + $0x68] sm:$0xf]
    %v626 = vld [vmem:[#allocation5 + $0x6c] sm:$0xff]
    %v627 = vld [vmem:[#allocation5 + $0x74] sm:$0xf]
    %v628 = vld [vmem:[#allocation5 + $0x78] sm:$0xff]
    %v629 = vld [vmem:[#allocation5 + $0x80] sm:$0xf]
    %v630 = vld [vmem:[#allocation5 + $0x84] sm:$0xff]
    %v631 = vld [vmem:[#allocation5 + $0x8c] sm:$0xf]
    %v632 = vld [vmem:[#allocation5 + $0x90] sm:$0xff]
    %v633 = vld [vmem:[#allocation5 + $0x98] sm:$0xf]
    %v634 = vld [vmem:[#allocation5 + $0x9c] sm:$0xff]
    %v635 = vld [vmem:[#allocation5 + $0xa4] sm:$0xf]
    %v636 = vld [vmem:[#allocation5 + $0xa8] sm:$0xff]
    %v637 = vld [vmem:[#allocation5 + $0xb0] sm:$0xf]
    %v638 = vld [vmem:[#allocation5 + $0xb4] sm:$0xff]
    %v639 = vld [vmem:[#allocation5 + $0xbc] sm:$0xf]
    %v640 = vld [vmem:[%s9] ss:$4 sm:$0x7]
    %v642 = vlaneseq
    %v643 = vshrl.u32 %v642, 7
    %v644 = vsub.s32 0, %v643
    %v645 = vrot.slane %v640, %v644
    %v646 = vlaneseq
    %v647 = vshrl.u32 %v646, 7
    %v648 = vsub.s32 1, %v647
    %v649 = vrot.slane %v640, %v648
    %v650 = vlaneseq
    %v651 = vshrl.u32 %v650, 7
    %v652 = vsub.s32 2, %v651
    %v653 = vrot.slane %v640, %v652
    %v689 = vunpack.c.l.b16 %v608
    %v690 = vunpack.c.h.b16 %v608
    %v691 = vunpack.c.l.b16 %v609
    %v692 = vunpack.c.l.b16 %v610
    %v693 = vunpack.c.h.b16 %v610
    %v694 = vunpack.c.l.b16 %v611
    %v695 = vunpack.c.l.b16 %v612
    %v696 = vunpack.c.h.b16 %v612
    %v697 = vunpack.c.l.b16 %v613
    %v698 = vunpack.c.l.b16 %v614
    %v699 = vunpack.c.h.b16 %v614
    %v700 = vunpack.c.l.b16 %v615
    %v701 = vunpack.c.l.b16 %v616
    %v702 = vunpack.c.h.b16 %v616
    %v703 = vunpack.c.l.b16 %v617
    %v704 = vunpack.c.l.b16 %v618
    %v705 = vunpack.c.h.b16 %v618
    %v706 = vunpack.c.l.b16 %v619
    %v707 = vunpack.c.l.b16 %v620
    %v708 = vunpack.c.h.b16 %v620
    %v709 = vunpack.c.l.b16 %v621
    %v710 = vunpack.c.l.b16 %v622
    %v711 = vunpack.c.h.b16 %v622
    %v712 = vunpack.c.l.b16 %v623
    %v713 = vunpack.c.l.b16 %v624
    %v714 = vunpack.c.h.b16 %v624
    %v715 = vunpack.c.l.b16 %v625
    %v716 = vunpack.c.l.b16 %v626
    %v717 = vunpack.c.h.b16 %v626
    %v718 = vunpack.c.l.b16 %v627
    %v719 = vunpack.c.l.b16 %v628
    %v720 = vunpack.c.h.b16 %v628
    %v721 = vunpack.c.l.b16 %v629
    %v722 = vunpack.c.l.b16 %v630
    %v723 = vunpack.c.h.b16 %v630
    %v724 = vunpack.c.l.b16 %v631
    %v725 = vunpack.c.l.b16 %v632
    %v726 = vunpack.c.h.b16 %v632
    %v727 = vunpack.c.l.b16 %v633
    %v728 = vunpack.c.l.b16 %v634
    %v729 = vunpack.c.h.b16 %v634
    %v730 = vunpack.c.l.b16 %v635
    %v731 = vunpack.c.l.b16 %v636
    %v732 = vunpack.c.h.b16 %v636
    %v733 = vunpack.c.l.b16 %v637
    %v734 = vunpack.c.l.b16 %v638
    %v735 = vunpack.c.h.b16 %v638
    %v736 = vunpack.c.l.b16 %v639
    %v737 = vpack.c.b16 %v692, %v689
    %v738 = vpack.c.b16 %v693, %v690
    %v739 = vpack.c.b16 %v694, %v691
    %v740 = vpack.c.b16 %v698, %v695
    %v741 = vpack.c.b16 %v699, %v696
    %v742 = vpack.c.b16 %v700, %v697
    %v743 = vpack.c.b16 %v704, %v701
    %v744 = vpack.c.b16 %v705, %v702
    %v745 = vpack.c.b16 %v706, %v703
    %v746 = vpack.c.b16 %v710, %v707
    %v747 = vpack.c.b16 %v711, %v708
    %v748 = vpack.c.b16 %v712, %v709
    %v749 = vpack.c.b16 %v716, %v713
    %v750 = vpack.c.b16 %v717, %v714
    %v751 = vpack.c.b16 %v718, %v715
    %v752 = vpack.c.b16 %v722, %v719
    %v753 = vpack.c.b16 %v723, %v720
    %v754 = vpack.c.b16 %v724, %v721
    %v755 = vpack.c.b16 %v728, %v725
    %v756 = vpack.c.b16 %v729, %v726
    %v757 = vpack.c.b16 %v730, %v727
    %v758 = vpack.c.b16 %v734, %v731
    %v759 = vpack.c.b16 %v735, %v732
    %v760 = vpack.c.b16 %v736, %v733
    %785 = vmatprep.subr.bf16.mxu0 %v738
    %786 = vmatpush1.bf16.msra.mxu0 %v737
    %787 = vmatprep.subr.bf16.mxu0 %v741
    %788 = vmatpush1.bf16.msra.mxu0 %v740
    %789 = vmatprep.subr.bf16.mxu0 %v744
    %790 = vmatpush1.bf16.msra.mxu0 %v743
    %791 = vmatprep.subr.bf16.mxu0 %v747
    %792 = vmatpush1.bf16.msra.mxu0 %v746
    %793 = vmatprep.subr.bf16.mxu0 %v750
    %794 = vmatpush1.bf16.msra.mxu0 %v749
    %795 = vmatprep.subr.bf16.mxu0 %v753
    %796 = vmatpush1.bf16.msra.mxu0 %v752
    %797 = vmatprep.subr.bf16.mxu0 %v756
    %798 = vmatpush1.bf16.msra.mxu0 %v755
    %799 = vmatprep.subr.bf16.mxu0 %v759
    %800 = vmatpush1.bf16.msra.mxu0 %v758
    %801 = vmatprep.subr.bf16.mxu0 0
    %802 = vmatpush1.bf16.msra.mxu0 0
    %803 = vmatprep.subr.bf16.mxu0 0
    %804 = vmatpush1.bf16.msra.mxu0 0
    %805 = vmatprep.subr.bf16.mxu0 0
    %806 = vmatpush1.bf16.msra.mxu0 0
    %807 = vmatprep.subr.bf16.mxu0 0
    %808 = vmatpush1.bf16.msra.mxu0 0
    %809 = vmatprep.subr.bf16.mxu0 0
    %810 = vmatpush1.bf16.msra.mxu0 0
    %811 = vmatprep.subr.bf16.mxu0 0
    %812 = vmatpush1.bf16.msra.mxu0 0
    %813 = vmatprep.subr.bf16.mxu0 0
    %814 = vmatpush1.bf16.msra.mxu0 0
    %815 = vmatprep.subr.bf16.mxu0 0
    %816 = vmatpush1.bf16.msra.mxu0 0
    %817 = vmatprep.mubr.bf16.mxu0 0
    %818 = vmatmul.mubr.bf16.gmra.mrb[0].mxu0 %v376
    %v819 = vpop.f32.mrb[0].mxu0
    %v820 = vadd.f32 %v645, %v819
    %v821 = vpop.f32.mrb[0].mxu0
    %v822 = vadd.f32 %v649, %v821
    %v823 = vpop.f32.mrb[0].mxu0
    %v824 = vadd.f32 %v645, %v823
    %v825 = vpop.f32.mrb[0].mxu0
    %v826 = vadd.f32 %v649, %v825
    %827 = vdwg.mxu0
    %828 = vmatprep.subr.bf16.mxu0 0
    %829 = vmatpush1.bf16.msra.mxu0 %v739
    %830 = vmatprep.subr.bf16.mxu0 0
    %831 = vmatpush1.bf16.msra.mxu0 %v742
    %832 = vmatprep.subr.bf16.mxu0 0
    %833 = vmatpush1.bf16.msra.mxu0 %v745
    %834 = vmatprep.subr.bf16.mxu0 0
    %835 = vmatpush1.bf16.msra.mxu0 %v748
    %836 = vmatprep.subr.bf16.mxu0 0
    %837 = vmatpush1.bf16.msra.mxu0 %v751
    %838 = vmatprep.subr.bf16.mxu0 0
    %839 = vmatpush1.bf16.msra.mxu0 %v754
    %840 = vmatprep.subr.bf16.mxu0 0
    %841 = vmatpush1.bf16.msra.mxu0 %v757
    %842 = vmatprep.subr.bf16.mxu0 0
    %843 = vmatpush1.bf16.msra.mxu0 %v760
    %844 = vmatprep.subr.bf16.mxu0 0
    %845 = vmatpush1.bf16.msra.mxu0 0
    %846 = vmatprep.subr.bf16.mxu0 0
    %847 = vmatpush1.bf16.msra.mxu0 0
    %848 = vmatprep.subr.bf16.mxu0 0
    %849 = vmatpush1.bf16.msra.mxu0 0
    %850 = vmatprep.subr.bf16.mxu0 0
    %851 = vmatpush1.bf16.msra.mxu0 0
    %852 = vmatprep.subr.bf16.mxu0 0
    %853 = vmatpush1.bf16.msra.mxu0 0
    %854 = vmatprep.subr.bf16.mxu0 0
    %855 = vmatpush1.bf16.msra.mxu0 0
    %856 = vmatprep.subr.bf16.mxu0 0
    %857 = vmatpush1.bf16.msra.mxu0 0
    %858 = vmatprep.subr.bf16.mxu0 0
    %859 = vmatpush1.bf16.msra.mxu0 0
    %860 = vmatprep.mubr.bf16.mxu0 0
    %861 = vmatmul.mubr.bf16.gmra.mrb[0].mxu0 %v376
    %v862 = vpop.f32.mrb[0].mxu0
    %v863 = vadd.f32 %v653, %v862
    %v864 = vpop.f32.mrb[0].mxu0
    %v865 = vpop.f32.mrb[0].mxu0
    %v866 = vadd.f32 %v653, %v865
    %v867 = vpop.f32.mrb[0].mxu0
    %868 = vdwg.mxu0
    %v869 = vpack.c.bf16 %v824, %v820
    %v870 = vpack.c.bf16 %v826, %v822
    %v871 = vpack.c.bf16 %v866, %v863
    %s872 = scalar_lea.vmem [#allocation5], 192
    %v873 = vld [vmem:[%s872] sm:$0xff]
    %v874 = vld [vmem:[%s872 + $0x8] sm:$0xf]
    %v875 = vld [vmem:[%s872 + $0xc] sm:$0xff]
    %v876 = vld [vmem:[%s872 + $0x14] sm:$0xf]
    %v877 = vld [vmem:[%s872 + $0x18] sm:$0xff]
    %v878 = vld [vmem:[%s872 + $0x20] sm:$0xf]
    %v879 = vld [vmem:[%s872 + $0x24] sm:$0xff]
    %v880 = vld [vmem:[%s872 + $0x2c] sm:$0xf]
    %v881 = vld [vmem:[%s872 + $0x30] sm:$0xff]
    %v882 = vld [vmem:[%s872 + $0x38] sm:$0xf]
    %v883 = vld [vmem:[%s872 + $0x3c] sm:$0xff]
    %v884 = vld [vmem:[%s872 + $0x44] sm:$0xf]
    %v885 = vld [vmem:[%s872 + $0x48] sm:$0xff]
    %v886 = vld [vmem:[%s872 + $0x50] sm:$0xf]
    %v887 = vld [vmem:[%s872 + $0x54] sm:$0xff]
    %v888 = vld [vmem:[%s872 + $0x5c] sm:$0xf]
    %v889 = vld [vmem:[%s872 + $0x60] sm:$0xff]
    %v890 = vld [vmem:[%s872 + $0x68] sm:$0xf]
    %v891 = vld [vmem:[%s872 + $0x6c] sm:$0xff]
    %v892 = vld [vmem:[%s872 + $0x74] sm:$0xf]
    %v893 = vld [vmem:[%s872 + $0x78] sm:$0xff]
    %v894 = vld [vmem:[%s872 + $0x80] sm:$0xf]
    %v895 = vld [vmem:[%s872 + $0x84] sm:$0xff]
    %v896 = vld [vmem:[%s872 + $0x8c] sm:$0xf]
    %v897 = vld [vmem:[%s872 + $0x90] sm:$0xff]
    %v898 = vld [vmem:[%s872 + $0x98] sm:$0xf]
    %v899 = vld [vmem:[%s872 + $0x9c] sm:$0xff]
    %v900 = vld [vmem:[%s872 + $0xa4] sm:$0xf]
    %v901 = vld [vmem:[%s872 + $0xa8] sm:$0xff]
    %v902 = vld [vmem:[%s872 + $0xb0] sm:$0xf]
    %v903 = vld [vmem:[%s872 + $0xb4] sm:$0xff]
    %v904 = vld [vmem:[%s872 + $0xbc] sm:$0xf]
    %s905 = scalar_lea.vmem %s9, 1
    %v906 = vld [vmem:[%s905] ss:$4 sm:$0x7]
    %v908 = vlaneseq
    %v909 = vshrl.u32 %v908, 7
    %v910 = vsub.s32 0, %v909
    %v911 = vrot.slane %v906, %v910
    %v912 = vlaneseq
    %v913 = vshrl.u32 %v912, 7
    %v914 = vsub.s32 1, %v913
    %v915 = vrot.slane %v906, %v914
    %v916 = vlaneseq
    %v917 = vshrl.u32 %v916, 7
    %v918 = vsub.s32 2, %v917
    %v919 = vrot.slane %v906, %v918
    %v955 = vunpack.c.l.b16 %v873
    %v956 = vunpack.c.h.b16 %v873
    %v957 = vunpack.c.l.b16 %v874
    %v958 = vunpack.c.l.b16 %v875
    %v959 = vunpack.c.h.b16 %v875
    %v960 = vunpack.c.l.b16 %v876
    %v961 = vunpack.c.l.b16 %v877
    %v962 = vunpack.c.h.b16 %v877
    %v963 = vunpack.c.l.b16 %v878
    %v964 = vunpack.c.l.b16 %v879
    %v965 = vunpack.c.h.b16 %v879
    %v966 = vunpack.c.l.b16 %v880
    %v967 = vunpack.c.l.b16 %v881
    %v968 = vunpack.c.h.b16 %v881
    %v969 = vunpack.c.l.b16 %v882
    %v970 = vunpack.c.l.b16 %v883
    %v971 = vunpack.c.h.b16 %v883
    %v972 = vunpack.c.l.b16 %v884
    %v973 = vunpack.c.l.b16 %v885
    %v974 = vunpack.c.h.b16 %v885
    %v975 = vunpack.c.l.b16 %v886
    %v976 = vunpack.c.l.b16 %v887
    %v977 = vunpack.c.h.b16 %v887
    %v978 = vunpack.c.l.b16 %v888
    %v979 = vunpack.c.l.b16 %v889
    %v980 = vunpack.c.h.b16 %v889
    %v981 = vunpack.c.l.b16 %v890
    %v982 = vunpack.c.l.b16 %v891
    %v983 = vunpack.c.h.b16 %v891
    %v984 = vunpack.c.l.b16 %v892
    %v985 = vunpack.c.l.b16 %v893
    %v986 = vunpack.c.h.b16 %v893
    %v987 = vunpack.c.l.b16 %v894
    %v988 = vunpack.c.l.b16 %v895
    %v989 = vunpack.c.h.b16 %v895
    %v990 = vunpack.c.l.b16 %v896
    %v991 = vunpack.c.l.b16 %v897
    %v992 = vunpack.c.h.b16 %v897
    %v993 = vunpack.c.l.b16 %v898
    %v994 = vunpack.c.l.b16 %v899
    %v995 = vunpack.c.h.b16 %v899
    %v996 = vunpack.c.l.b16 %v900
    %v997 = vunpack.c.l.b16 %v901
    %v998 = vunpack.c.h.b16 %v901
    %v999 = vunpack.c.l.b16 %v902
    %v1000 = vunpack.c.l.b16 %v903
    %v1001 = vunpack.c.h.b16 %v903
    %v1002 = vunpack.c.l.b16 %v904
    %v1003 = vpack.c.b16 %v958, %v955
    %v1004 = vpack.c.b16 %v959, %v956
    %v1005 = vpack.c.b16 %v960, %v957
    %v1006 = vpack.c.b16 %v964, %v961
    %v1007 = vpack.c.b16 %v965, %v962
    %v1008 = vpack.c.b16 %v966, %v963
    %v1009 = vpack.c.b16 %v970, %v967
    %v1010 = vpack.c.b16 %v971, %v968
    %v1011 = vpack.c.b16 %v972, %v969
    %v1012 = vpack.c.b16 %v976, %v973
    %v1013 = vpack.c.b16 %v977, %v974
    %v1014 = vpack.c.b16 %v978, %v975
    %v1015 = vpack.c.b16 %v982, %v979
    %v1016 = vpack.c.b16 %v983, %v980
    %v1017 = vpack.c.b16 %v984, %v981
    %v1018 = vpack.c.b16 %v988, %v985
    %v1019 = vpack.c.b16 %v989, %v986
    %v1020 = vpack.c.b16 %v990, %v987
    %v1021 = vpack.c.b16 %v994, %v991
    %v1022 = vpack.c.b16 %v995, %v992
    %v1023 = vpack.c.b16 %v996, %v993
    %v1024 = vpack.c.b16 %v1000, %v997
    %v1025 = vpack.c.b16 %v1001, %v998
    %v1026 = vpack.c.b16 %v1002, %v999
    %1051 = vmatprep.subr.bf16.mxu0 %v1004
    %1052 = vmatpush1.bf16.msra.mxu0 %v1003
    %1053 = vmatprep.subr.bf16.mxu0 %v1007
    %1054 = vmatpush1.bf16.msra.mxu0 %v1006
    %1055 = vmatprep.subr.bf16.mxu0 %v1010
    %1056 = vmatpush1.bf16.msra.mxu0 %v1009
    %1057 = vmatprep.subr.bf16.mxu0 %v1013
    %1058 = vmatpush1.bf16.msra.mxu0 %v1012
    %1059 = vmatprep.subr.bf16.mxu0 %v1016
    %1060 = vmatpush1.bf16.msra.mxu0 %v1015
    %1061 = vmatprep.subr.bf16.mxu0 %v1019
    %1062 = vmatpush1.bf16.msra.mxu0 %v1018
    %1063 = vmatprep.subr.bf16.mxu0 %v1022
    %1064 = vmatpush1.bf16.msra.mxu0 %v1021
    %1065 = vmatprep.subr.bf16.mxu0 %v1025
    %1066 = vmatpush1.bf16.msra.mxu0 %v1024
    %1067 = vmatprep.subr.bf16.mxu0 0
    %1068 = vmatpush1.bf16.msra.mxu0 0
    %1069 = vmatprep.subr.bf16.mxu0 0
    %1070 = vmatpush1.bf16.msra.mxu0 0
    %1071 = vmatprep.subr.bf16.mxu0 0
    %1072 = vmatpush1.bf16.msra.mxu0 0
    %1073 = vmatprep.subr.bf16.mxu0 0
    %1074 = vmatpush1.bf16.msra.mxu0 0
    %1075 = vmatprep.subr.bf16.mxu0 0
    %1076 = vmatpush1.bf16.msra.mxu0 0
    %1077 = vmatprep.subr.bf16.mxu0 0
    %1078 = vmatpush1.bf16.msra.mxu0 0
    %1079 = vmatprep.subr.bf16.mxu0 0
    %1080 = vmatpush1.bf16.msra.mxu0 0
    %1081 = vmatprep.subr.bf16.mxu0 0
    %1082 = vmatpush1.bf16.msra.mxu0 0
    %1083 = vmatprep.mubr.bf16.mxu0 0
    %1084 = vmatmul.mubr.bf16.gmra.mrb[0].mxu0 %v377
    %v1085 = vpop.f32.mrb[0].mxu0
    %v1086 = vadd.f32 %v911, %v1085
    %v1087 = vpop.f32.mrb[0].mxu0
    %v1088 = vadd.f32 %v915, %v1087
    %v1089 = vpop.f32.mrb[0].mxu0
    %v1090 = vadd.f32 %v911, %v1089
    %v1091 = vpop.f32.mrb[0].mxu0
    %v1092 = vadd.f32 %v915, %v1091
    %1093 = vmatprep.mubr.bf16.mxu0 0
    %1094 = vmatmul.mubr.bf16.gmra.mrb[0].mxu0 %v378
    %v1095 = vpop.f32.mrb[0].mxu0
    %v1096 = vadd.f32 %v911, %v1095
    %v1097 = vpop.f32.mrb[0].mxu0
    %v1098 = vadd.f32 %v915, %v1097
    %v1099 = vpop.f32.mrb[0].mxu0
    %v1100 = vpop.f32.mrb[0].mxu0
    %1101 = vdwg.mxu0
    %1102 = vmatprep.subr.bf16.mxu0 0
    %1103 = vmatpush1.bf16.msra.mxu0 %v1005
    %1104 = vmatprep.subr.bf16.mxu0 0
    %1105 = vmatpush1.bf16.msra.mxu0 %v1008
    %1106 = vmatprep.subr.bf16.mxu0 0
    %1107 = vmatpush1.bf16.msra.mxu0 %v1011
    %1108 = vmatprep.subr.bf16.mxu0 0
    %1109 = vmatpush1.bf16.msra.mxu0 %v1014
    %1110 = vmatprep.subr.bf16.mxu0 0
    %1111 = vmatpush1.bf16.msra.mxu0 %v1017
    %1112 = vmatprep.subr.bf16.mxu0 0
    %1113 = vmatpush1.bf16.msra.mxu0 %v1020
    %1114 = vmatprep.subr.bf16.mxu0 0
    %1115 = vmatpush1.bf16.msra.mxu0 %v1023
    %1116 = vmatprep.subr.bf16.mxu0 0
    %1117 = vmatpush1.bf16.msra.mxu0 %v1026
    %1118 = vmatprep.subr.bf16.mxu0 0
    %1119 = vmatpush1.bf16.msra.mxu0 0
    %1120 = vmatprep.subr.bf16.mxu0 0
    %1121 = vmatpush1.bf16.msra.mxu0 0
    %1122 = vmatprep.subr.bf16.mxu0 0
    %1123 = vmatpush1.bf16.msra.mxu0 0
    %1124 = vmatprep.subr.bf16.mxu0 0
    %1125 = vmatpush1.bf16.msra.mxu0 0
    %1126 = vmatprep.subr.bf16.mxu0 0
    %1127 = vmatpush1.bf16.msra.mxu0 0
    %1128 = vmatprep.subr.bf16.mxu0 0
    %1129 = vmatpush1.bf16.msra.mxu0 0
    %1130 = vmatprep.subr.bf16.mxu0 0
    %1131 = vmatpush1.bf16.msra.mxu0 0
    %1132 = vmatprep.subr.bf16.mxu0 0
    %1133 = vmatpush1.bf16.msra.mxu0 0
    %1134 = vmatprep.mubr.bf16.mxu0 0
    %1135 = vmatmul.mubr.bf16.gmra.mrb[0].mxu0 %v377
    %v1136 = vpop.f32.mrb[0].mxu0
    %v1137 = vadd.f32 %v919, %v1136
    %v1138 = vpop.f32.mrb[0].mxu0
    %v1139 = vpop.f32.mrb[0].mxu0
    %v1140 = vadd.f32 %v919, %v1139
    %v1141 = vpop.f32.mrb[0].mxu0
    %1142 = vmatprep.mubr.bf16.mxu0 0
    %1143 = vmatmul.mubr.bf16.gmra.mrb[0].mxu0 %v378
    %v1144 = vpop.f32.mrb[0].mxu0
    %v1145 = vadd.f32 %v919, %v1144
    %v1146 = vpop.f32.mrb[0].mxu0
    %v1147 = vpop.f32.mrb[0].mxu0
    %v1148 = vpop.f32.mrb[0].mxu0
    %1149 = vdwg.mxu0
    %v1150 = vpack.c.bf16 %v1090, %v1086
    %v1151 = vpack.c.bf16 %v1092, %v1088
    %v1152 = vpack.c.bf16 %v1140, %v1137
    %v1153 = vpack.c.bf16 %v1096, %v1096
    %v1154 = vpack.c.bf16 %v1098, %v1098
    %v1155 = vpack.c.bf16 %v1145, %v1145
    %s1156 = scalar_lea.vmem [#allocation2], 256
    %v1157 = vld [vmem:[%s1156] sm:$0xf]
    %v1158 = vld [vmem:[%s1156 + $0x4] sm:$0xf]
    %v1159 = vld [vmem:[%s1156 + $0x8] sm:$0xf]
    %v1160 = vld [vmem:[%s1156 + $0xc] sm:$0xf]
    %v1161 = vld [vmem:[%s1156 + $0x10] sm:$0xf]
    %v1162 = vld [vmem:[%s1156 + $0x14] sm:$0xf]
    %v1163 = vld [vmem:[%s1156 + $0x18] sm:$0xf]
    %v1164 = vld [vmem:[%s1156 + $0x1c] sm:$0xf]
    %v1165 = vld [vmem:[%s1156 + $0x20] sm:$0xf]
    %v1166 = vld [vmem:[%s1156 + $0x24] sm:$0xf]
    %v1167 = vld [vmem:[%s1156 + $0x28] sm:$0xf]
    %v1168 = vld [vmem:[%s1156 + $0x2c] sm:$0xf]
    %v1169 = vld [vmem:[%s1156 + $0x30] sm:$0xf]
    %v1170 = vld [vmem:[%s1156 + $0x34] sm:$0xf]
    %v1171 = vld [vmem:[%s1156 + $0x38] sm:$0xf]
    %v1172 = vld [vmem:[%s1156 + $0x3c] sm:$0xf]
    %v1178 = vunpack.c.l.b16 %v68
    %v1179 = vunpack.c.l.b16 %v69
    %v1180 = vunpack.c.l.b16 %v70
    %v1181 = vunpack.c.l.b16 %v71
    %v1182 = vunpack.c.l.b16 %v72
    %v1183 = vpack.c.b16 %v1179, %v1178
    %v1184 = vpack.c.b16 %v1181, %v1180
    %v1185 = vpack.c.b16 %v1182, %v1182
    %v1187 = vsel %vm112, %v1183, 0
    %v1190 = vsel %vm112, %v1184, 0
    %v1193 = vsel %vm112, %v1185, 0
    %1195 = vmatprep.subr.bf16.mxu0 %v870
    %1196 = vmatpush1.bf16.msra.mxu0 %v869
    %1197 = vmatprep.subr.bf16.mxu0 0
    %1198 = vmatpush1.bf16.msra.mxu0 0
    %1199 = vmatprep.subr.bf16.mxu0 0
    %1200 = vmatpush1.bf16.msra.mxu0 0
    %1201 = vmatprep.subr.bf16.mxu0 0
    %1202 = vmatpush1.bf16.msra.mxu0 0
    %1203 = vmatprep.subr.bf16.mxu0 0
    %1204 = vmatpush1.bf16.msra.mxu0 0
    %1205 = vmatprep.subr.bf16.mxu0 0
    %1206 = vmatpush1.bf16.msra.mxu0 0
    %1207 = vmatprep.subr.bf16.mxu0 0
    %1208 = vmatpush1.bf16.msra.mxu0 0
    %1209 = vmatprep.subr.bf16.mxu0 0
    %1210 = vmatpush1.bf16.msra.mxu0 0
    %1211 = vmatprep.subr.bf16.mxu0 0
    %1212 = vmatpush1.bf16.msra.mxu0 0
    %1213 = vmatprep.subr.bf16.mxu0 0
    %1214 = vmatpush1.bf16.msra.mxu0 0
    %1215 = vmatprep.subr.bf16.mxu0 0
    %1216 = vmatpush1.bf16.msra.mxu0 0
    %1217 = vmatprep.subr.bf16.mxu0 0
    %1218 = vmatpush1.bf16.msra.mxu0 0
    %1219 = vmatprep.subr.bf16.mxu0 0
    %1220 = vmatpush1.bf16.msra.mxu0 0
    %1221 = vmatprep.subr.bf16.mxu0 0
    %1222 = vmatpush1.bf16.msra.mxu0 0
    %1223 = vmatprep.subr.bf16.mxu0 0
    %1224 = vmatpush1.bf16.msra.mxu0 0
    %1225 = vmatprep.subr.bf16.mxu0 0
    %1226 = vmatpush1.bf16.msra.mxu0 0
    %1227 = vmatprep.mubr.bf16.mxu0 0
    %1228 = vmatmul.mubr.bf16.gmra.mrb[0].mxu0 %v1187
    %v1229 = vpop.f32.mrb[0].mxu0
    %v1230 = vadd.f32 0.0, %v1229
    %v1231 = vpop.f32.mrb[0].mxu0
    %v1232 = vadd.f32 0.0, %v1231
    %v1233 = vpop.f32.mrb[0].mxu0
    %v1234 = vadd.f32 0.0, %v1233
    %v1235 = vpop.f32.mrb[0].mxu0
    %v1236 = vadd.f32 0.0, %v1235
    %1237 = vmatprep.mubr.bf16.mxu0 0
    %1238 = vmatmul.mubr.bf16.gmra.mrb[0].mxu0 %v1190
    %v1239 = vpop.f32.mrb[0].mxu0
    %v1240 = vadd.f32 0.0, %v1239
    %v1241 = vpop.f32.mrb[0].mxu0
    %v1242 = vadd.f32 0.0, %v1241
    %v1243 = vpop.f32.mrb[0].mxu0
    %v1244 = vadd.f32 0.0, %v1243
    %v1245 = vpop.f32.mrb[0].mxu0
    %v1246 = vadd.f32 0.0, %v1245
    %1247 = vmatprep.mubr.bf16.mxu0 0
    %1248 = vmatmul.mubr.bf16.gmra.mrb[0].mxu0 %v1193
    %v1249 = vpop.f32.mrb[0].mxu0
    %v1250 = vadd.f32 0.0, %v1249
    %v1251 = vpop.f32.mrb[0].mxu0
    %v1252 = vadd.f32 0.0, %v1251
    %v1253 = vpop.f32.mrb[0].mxu0
    %v1254 = vpop.f32.mrb[0].mxu0
    %1255 = vdwg.mxu0
    %v1257 = vsel %vm83, %v99, 0
    %vm1259 = vcmask 1043456
    %v1261 = vsel %vm1259, %v1155, 0
    %1263 = vmatprep.subr.bf16.mxu0 0
    %1264 = vmatpush1.bf16.msra.mxu0 %v1152
    %1265 = vmatprep.subr.bf16.mxu0 0
    %1266 = vmatpush1.bf16.msra.mxu0 %v1261
    %1267 = vmatprep.subr.bf16.mxu0 0
    %1268 = vmatpush1.bf16.msra.mxu0 0
    %1269 = vmatprep.subr.bf16.mxu0 0
    %1270 = vmatpush1.bf16.msra.mxu0 0
    %1271 = vmatprep.subr.bf16.mxu0 0
    %1272 = vmatpush1.bf16.msra.mxu0 0
    %1273 = vmatprep.subr.bf16.mxu0 0
    %1274 = vmatpush1.bf16.msra.mxu0 0
    %1275 = vmatprep.subr.bf16.mxu0 0
    %1276 = vmatpush1.bf16.msra.mxu0 0
    %1277 = vmatprep.subr.bf16.mxu0 0
    %1278 = vmatpush1.bf16.msra.mxu0 0
    %1279 = vmatprep.subr.bf16.mxu0 0
    %1280 = vmatpush1.bf16.msra.mxu0 0
    %1281 = vmatprep.subr.bf16.mxu0 0
    %1282 = vmatpush1.bf16.msra.mxu0 0
    %1283 = vmatprep.subr.bf16.mxu0 0
    %1284 = vmatpush1.bf16.msra.mxu0 0
    %1285 = vmatprep.subr.bf16.mxu0 0
    %1286 = vmatpush1.bf16.msra.mxu0 0
    %1287 = vmatprep.subr.bf16.mxu0 0
    %1288 = vmatpush1.bf16.msra.mxu0 0
    %1289 = vmatprep.subr.bf16.mxu0 0
    %1290 = vmatpush1.bf16.msra.mxu0 0
    %1291 = vmatprep.subr.bf16.mxu0 0
    %1292 = vmatpush1.bf16.msra.mxu0 0
    %1293 = vmatprep.subr.bf16.mxu0 0
    %1294 = vmatpush1.bf16.msra.mxu0 0
    %1295 = vmatprep.mubr.bf16.mxu0 0
    %1296 = vmatmul.mubr.bf16.gmra.mrb[0].mxu0 %v1257
    %v1297 = vpop.f32.mrb[0].mxu0
    %v1298 = vadd.f32 0.0, %v1297
    %v1299 = vpop.f32.mrb[0].mxu0
    %v1300 = vpop.f32.mrb[0].mxu0
    %v1301 = vpop.f32.mrb[0].mxu0
    %1302 = vdwg.mxu0
    %v1303 = vpack.c.bf16 %v1234, %v1230
    %v1304 = vpack.c.bf16 %v1244, %v1240
    %v1305 = vpack.c.bf16 %v1250, %v1250
    %v1322 = vunpack.c.l.b16 %v1157
    %v1323 = vunpack.c.l.b16 %v1158
    %v1324 = vunpack.c.l.b16 %v1159
    %v1325 = vunpack.c.l.b16 %v1160
    %v1326 = vunpack.c.l.b16 %v1161
    %v1327 = vunpack.c.l.b16 %v1162
    %v1328 = vunpack.c.l.b16 %v1163
    %v1329 = vunpack.c.l.b16 %v1164
    %v1330 = vunpack.c.l.b16 %v1165
    %v1331 = vunpack.c.l.b16 %v1166
    %v1332 = vunpack.c.l.b16 %v1167
    %v1333 = vunpack.c.l.b16 %v1168
    %v1334 = vunpack.c.l.b16 %v1169
    %v1335 = vunpack.c.l.b16 %v1170
    %v1336 = vunpack.c.l.b16 %v1171
    %v1337 = vunpack.c.l.b16 %v1172
    %v1338 = vpack.c.b16 %v1323, %v1322
    %v1339 = vpack.c.b16 %v1325, %v1324
    %v1340 = vpack.c.b16 %v1327, %v1326
    %v1341 = vpack.c.b16 %v1329, %v1328
    %v1342 = vpack.c.b16 %v1331, %v1330
    %v1343 = vpack.c.b16 %v1333, %v1332
    %v1344 = vpack.c.b16 %v1335, %v1334
    %v1345 = vpack.c.b16 %v1337, %v1336
    %1354 = vmatprep.subr.bf16.mxu0 0
    %1355 = vmatpush1.bf16.msra.mxu0 %v1338
    %1356 = vmatprep.subr.bf16.mxu0 0
    %1357 = vmatpush1.bf16.msra.mxu0 %v1339
    %1358 = vmatprep.subr.bf16.mxu0 0
    %1359 = vmatpush1.bf16.msra.mxu0 %v1340
    %1360 = vmatprep.subr.bf16.mxu0 0
    %1361 = vmatpush1.bf16.msra.mxu0 %v1341
    %1362 = vmatprep.subr.bf16.mxu0 0
    %1363 = vmatpush1.bf16.msra.mxu0 %v1342
    %1364 = vmatprep.subr.bf16.mxu0 0
    %1365 = vmatpush1.bf16.msra.mxu0 %v1343
    %1366 = vmatprep.subr.bf16.mxu0 0
    %1367 = vmatpush1.bf16.msra.mxu0 %v1344
    %1368 = vmatprep.subr.bf16.mxu0 0
    %1369 = vmatpush1.bf16.msra.mxu0 %v1345
    %1370 = vmatprep.subr.bf16.mxu0 0
    %1371 = vmatpush1.bf16.msra.mxu0 0
    %1372 = vmatprep.subr.bf16.mxu0 0
    %1373 = vmatpush1.bf16.msra.mxu0 0
    %1374 = vmatprep.subr.bf16.mxu0 0
    %1375 = vmatpush1.bf16.msra.mxu0 0
    %1376 = vmatprep.subr.bf16.mxu0 0
    %1377 = vmatpush1.bf16.msra.mxu0 0
    %1378 = vmatprep.subr.bf16.mxu0 0
    %1379 = vmatpush1.bf16.msra.mxu0 0
    %1380 = vmatprep.subr.bf16.mxu0 0
    %1381 = vmatpush1.bf16.msra.mxu0 0
    %1382 = vmatprep.subr.bf16.mxu0 0
    %1383 = vmatpush1.bf16.msra.mxu0 0
    %1384 = vmatprep.subr.bf16.mxu0 0
    %1385 = vmatpush1.bf16.msra.mxu0 0
    %1386 = vmatprep.mubr.bf16.mxu0 0
    %1387 = vmatmul.mubr.bf16.gmra.mrb[0].mxu0 %v1303
    %v1388 = vpop.f32.mrb[0].mxu0
    %v1389 = vadd.f32 0.0, %v1388
    %v1390 = vpop.f32.mrb[0].mxu0
    %v1391 = vpop.f32.mrb[0].mxu0
    %v1392 = vadd.f32 0.0, %v1391
    %v1393 = vpop.f32.mrb[0].mxu0
    %1394 = vmatprep.mubr.bf16.mxu0 0
    %1395 = vmatmul.mubr.bf16.gmra.mrb[0].mxu0 %v1304
    %v1396 = vpop.f32.mrb[0].mxu0
    %v1397 = vadd.f32 0.0, %v1396
    %v1398 = vpop.f32.mrb[0].mxu0
    %v1399 = vpop.f32.mrb[0].mxu0
    %v1400 = vadd.f32 0.0, %v1399
    %v1401 = vpop.f32.mrb[0].mxu0
    %1402 = vmatprep.mubr.bf16.mxu0 0
    %1403 = vmatmul.mubr.bf16.gmra.mrb[0].mxu0 %v1305
    %v1404 = vpop.f32.mrb[0].mxu0
    %v1405 = vadd.f32 0.0, %v1404
    %v1406 = vpop.f32.mrb[0].mxu0
    %v1407 = vpop.f32.mrb[0].mxu0
    %v1408 = vpop.f32.mrb[0].mxu0
    %1409 = vdwg.mxu0
    %v1410 = vlaneseq
    %v1411 = vshrl.u32 %v1410, 7
    %v1412 = vsub.s32 0, %v1411
    %v1413 = vrot.slane %v1298, %v1412
    %v1414 = vmul.f32 %v1389, %v1413
    %v1415 = vmul.f32 %v1392, %v1413
    %v1416 = vmul.f32 %v1397, %v1413
    %v1417 = vmul.f32 %v1400, %v1413
    %v1418 = vmul.f32 %v1405, %v1413
    %1419 = vadd.xlane.f32.xlu0 %v1414
    %v1420 = vpop.xlane.xlu0 %1419
    %1421 = vadd.xlane.f32.xlu0 %v1415
    %v1422 = vpop.xlane.xlu0 %1421
    %1423 = vadd.xlane.f32.xlu0 %v1416
    %v1424 = vpop.xlane.xlu0 %1423
    %1425 = vadd.xlane.f32.xlu0 %v1417
    %v1426 = vpop.xlane.xlu0 %1425
    %1427 = vadd.xlane.f32.xlu0 %v1418
    %v1428 = vpop.xlane.xlu0 %1427
    %v1429 = vmul.f32 %v1420, 0.17677669
    %v1430 = vmul.f32 %v1422, 0.17677669
    %v1431 = vmul.f32 %v1424, 0.17677669
    %v1432 = vmul.f32 %v1426, 0.17677669
    %v1433 = vmul.f32 %v1428, 0.17677669
    %vm1434 = vcmp.gt.f32.partialorder %v78, 0.0
    %vm1435 = vcmp.gt.f32.partialorder %v79, 0.0
    %vm1436 = vcmp.gt.f32.partialorder %v80, 0.0
    %vm1437 = vcmp.gt.f32.partialorder %v81, 0.0
    %vm1438 = vcmp.gt.f32.partialorder %v82, 0.0
    %v1439 = vsel %vm1434, %v1429, -1e+30
    %v1440 = vsel %vm1435, %v1430, -1e+30
    %v1441 = vsel %vm1436, %v1431, -1e+30
    %v1442 = vsel %vm1437, %v1432, -1e+30
    %v1443 = vsel %vm1438, %v1433, -1e+30
    %v1444 = vsel %vm83, %v1439, -inf
    %v1445 = vsel %vm83, %v1440, -inf
    %v1446 = vsel %vm83, %v1441, -inf
    %v1447 = vsel %vm83, %v1442, -inf
    %v1448 = vsel %vm83, %v1443, -inf
    %v1449 = vmax.f32 %v1444, %v1448
    %v1450 = vmax.f32 %v1449, %v1445
    %v1451 = vmax.f32 %v1446, %v1447
    %v1452 = vmax.f32 %v1450, %v1451
    %v1453 = vrot.slane %v1452, 4
    %v1454 = vmax.f32 %v1452, %v1453
    %v1455 = vrot.slane %v1454, 2
    %v1456 = vmax.f32 %v1454, %v1455
    %v1457 = vrot.slane %v1456, 1
    %v1458 = vmax.f32 %v1456, %v1457
    %v1459 = vsel %vm1434, %v1458, 0.0
    %v1460 = vsel %vm1435, %v1458, 0.0
    %v1461 = vsel %vm1436, %v1458, 0.0
    %v1462 = vsel %vm1437, %v1458, 0.0
    %v1463 = vsel %vm1438, %v1458, 0.0
    %v1464 = vsel %vm83, %v1459, 0.0
    %1465 = vadd.xlane.f32.xlu0 %v1464
    %v1466 = vpop.xlane.xlu0 %1465
    %v1467 = vsel %vm83, %v1460, 0.0
    %1468 = vadd.xlane.f32.xlu0 %v1467
    %v1469 = vpop.xlane.xlu0 %1468
    %v1470 = vsel %vm83, %v1461, 0.0
    %1471 = vadd.xlane.f32.xlu0 %v1470
    %v1472 = vpop.xlane.xlu0 %1471
    %v1473 = vsel %vm83, %v1462, 0.0
    %1474 = vadd.xlane.f32.xlu0 %v1473
    %v1475 = vpop.xlane.xlu0 %1474
    %v1476 = vsel %vm83, %v1463, 0.0
    %1477 = vadd.xlane.f32.xlu0 %v1476
    %v1478 = vpop.xlane.xlu0 %1477
    %v1479 = vsub.f32 %v1429, %v1466
    %v1480 = vsub.f32 %v1430, %v1469
    %v1481 = vsub.f32 %v1431, %v1472
    %v1482 = vsub.f32 %v1432, %v1475
    %v1483 = vsub.f32 %v1433, %v1478
    %v1484 = vmul.f32 %v1479, 1.442695
    %v1485 = vpow.pop %v1484
    %v1486 = vmul.f32 %v1480, 1.442695
    %v1487 = vpow.pop %v1486
    %v1488 = vmul.f32 %v1481, 1.442695
    %v1489 = vpow.pop %v1488
    %v1490 = vmul.f32 %v1482, 1.442695
    %v1491 = vpow.pop %v1490
    %v1492 = vmul.f32 %v1483, 1.442695
    %v1493 = vpow.pop %v1492
    %v1494 = vsel %vm1434, %v1485, 0.0
    %v1495 = vsel %vm1435, %v1487, 0.0
    %v1496 = vsel %vm1436, %v1489, 0.0
    %v1497 = vsel %vm1437, %v1491, 0.0
    %v1498 = vsel %vm1438, %v1493, 0.0
    %v1499 = vsel %vm83, %v1494, 0.0
    %v1500 = vsel %vm83, %v1495, 0.0
    %v1501 = vadd.f32 %v1499, %v1500
    %v1502 = vsel %vm83, %v1496, 0.0
    %v1503 = vadd.f32 %v1501, %v1502
    %v1504 = vsel %vm83, %v1497, 0.0
    %v1505 = vadd.f32 %v1503, %v1504
    %v1506 = vsel %vm83, %v1498, 0.0
    %v1507 = vadd.f32 %v1505, %v1506
    %v1508 = vrot.slane %v1507, 4
    %v1509 = vadd.f32 %v1507, %v1508
    %v1510 = vrot.slane %v1509, 2
    %v1511 = vadd.f32 %v1509, %v1510
    %v1512 = vrot.slane %v1511, 1
    %v1513 = vadd.f32 %v1511, %v1512
    %v1514 = vsel %vm1434, %v1513, 0.0
    %v1515 = vsel %vm1435, %v1513, 0.0
    %v1516 = vsel %vm1436, %v1513, 0.0
    %v1517 = vsel %vm1437, %v1513, 0.0
    %v1518 = vsel %vm1438, %v1513, 0.0
    %v1519 = vsel %vm83, %v1514, 0.0
    %1520 = vadd.xlane.f32.xlu0 %v1519
    %v1521 = vpop.xlane.xlu0 %1520
    %v1522 = vsel %vm83, %v1515, 0.0
    %1523 = vadd.xlane.f32.xlu0 %v1522
    %v1524 = vpop.xlane.xlu0 %1523
    %v1525 = vsel %vm83, %v1516, 0.0
    %1526 = vadd.xlane.f32.xlu0 %v1525
    %v1527 = vpop.xlane.xlu0 %1526
    %v1528 = vsel %vm83, %v1517, 0.0
    %1529 = vadd.xlane.f32.xlu0 %v1528
    %v1530 = vpop.xlane.xlu0 %1529
    %v1531 = vsel %vm83, %v1518, 0.0
    %1532 = vadd.xlane.f32.xlu0 %v1531
    %v1533 = vpop.xlane.xlu0 %1532
    %v1534 = vrcp.pop %v1521
    %v1535 = vmul.f32 %v1485, %v1534
    %v1536 = vrcp.pop %v1524
    %v1537 = vmul.f32 %v1487, %v1536
    %v1538 = vrcp.pop %v1527
    %v1539 = vmul.f32 %v1489, %v1538
    %v1540 = vrcp.pop %v1530
    %v1541 = vmul.f32 %v1491, %v1540
    %v1542 = vrcp.pop %v1533
    %v1543 = vmul.f32 %v1493, %v1542
    %v1544 = vmul.f32 %v1535, %v1232
    %v1545 = vmul.f32 %v1537, %v1236
    %v1546 = vmul.f32 %v1539, %v1242
    %v1547 = vmul.f32 %v1541, %v1246
    %v1548 = vmul.f32 %v1543, %v1252
    %1549 = vxpose.xlu0.b32.start [1/16] %v78, 128
    %1550 = vxpose.xlu0.b32.cont [2/16] %v79, 128
    %1551 = vxpose.xlu0.b32.cont [3/16] %v80, 128
    %1552 = vxpose.xlu0.b32.cont [4/16] %v81, 128
    %1553 = vxpose.xlu0.b32.cont [5/16] %v82, 128
    %1554 = vxpose.xlu0.b32.cont [6/16] 0.0, 128
    %1555 = vxpose.xlu0.b32.cont [7/16] 0.0, 128
    %1556 = vxpose.xlu0.b32.cont [8/16] 0.0, 128
    %1557 = vxpose.xlu0.b32.cont [9/16] 0.0, 128
    %1558 = vxpose.xlu0.b32.cont [10/16] 0.0, 128
    %1559 = vxpose.xlu0.b32.cont [11/16] 0.0, 128
    %1560 = vxpose.xlu0.b32.cont [12/16] 0.0, 128
    %1561 = vxpose.xlu0.b32.cont [13/16] 0.0, 128
    %1562 = vxpose.xlu0.b32.cont [14/16] 0.0, 128
    %1563 = vxpose.xlu0.b32.cont [15/16] 0.0, 128
    %1564 = vxpose.xlu0.b32.end [16/16] 0.0, 128
    %v1565 = vpop.trf.xlu0
    %v1566 = vpop.trf.xlu0
    %v1567 = vpop.trf.xlu0
    %v1568 = vpop.trf.xlu0
    %v1569 = vpop.trf.xlu0
    %v1570 = vpop.trf.xlu0
    %v1571 = vpop.trf.xlu0
    %v1572 = vpop.trf.xlu0
    %v1573 = vpop.trf.xlu0
    %v1574 = vpop.trf.xlu0
    %v1575 = vpop.trf.xlu0
    %v1576 = vpop.trf.xlu0
    %v1577 = vpop.trf.xlu0
    %v1578 = vpop.trf.xlu0
    %v1579 = vpop.trf.xlu0
    %v1580 = vpop.trf.xlu0
    %vm1581 = vcmask 326656
    %v1583 = vsel %vm1581, %v1565, 0
    %v1586 = vsel %vm1581, %v1566, 0
    %v1589 = vsel %vm1581, %v1567, 0
    %1591 = vmatprep.subr.mxu0 0.0
    %1592 = vmatpush1.msra.mxu0 %v1544
    %1593 = vmatprep.subr.mxu0 0.0
    %1594 = vmatpush1.msra.mxu0 %v1545
    %1595 = vmatprep.subr.mxu0 0.0
    %1596 = vmatpush1.msra.mxu0 %v1546
    %1597 = vmatprep.subr.mxu0 0.0
    %1598 = vmatpush1.msra.mxu0 %v1547
    %1599 = vmatprep.subr.mxu0 0.0
    %1600 = vmatpush1.msra.mxu0 %v1548
    %1601 = vmatprep.subr.mxu0 0.0
    %1602 = vmatpush1.msra.mxu0 0.0
    %1603 = vmatprep.subr.mxu0 0.0
    %1604 = vmatpush1.msra.mxu0 0.0
    %1605 = vmatprep.subr.mxu0 0.0
    %1606 = vmatpush1.msra.mxu0 0.0
    %1607 = vmatprep.subr.mxu0 0.0
    %1608 = vmatpush1.msra.mxu0 0.0
    %1609 = vmatprep.subr.mxu0 0.0
    %1610 = vmatpush1.msra.mxu0 0.0
    %1611 = vmatprep.subr.mxu0 0.0
    %1612 = vmatpush1.msra.mxu0 0.0
    %1613 = vmatprep.subr.mxu0 0.0
    %1614 = vmatpush1.msra.mxu0 0.0
    %1615 = vmatprep.subr.mxu0 0.0
    %1616 = vmatpush1.msra.mxu0 0.0
    %1617 = vmatprep.subr.mxu0 0.0
    %1618 = vmatpush1.msra.mxu0 0.0
    %1619 = vmatprep.subr.mxu0 0.0
    %1620 = vmatpush1.msra.mxu0 0.0
    %1621 = vmatprep.subr.mxu0 0.0
    %1622 = vmatpush1.msra.mxu0 0.0
    %1623 = vmatprep.subr.mxu0 0.0
    %1624 = vmatpush1.msra.mxu0 0.0
    %1625 = vmatprep.subr.mxu0 0.0
    %1626 = vmatpush1.msra.mxu0 0.0
    %1627 = vmatprep.subr.mxu0 0.0
    %1628 = vmatpush1.msra.mxu0 0.0
    %1629 = vmatprep.subr.mxu0 0.0
    %1630 = vmatpush1.msra.mxu0 0.0
    %1631 = vmatprep.subr.mxu0 0.0
    %1632 = vmatpush1.msra.mxu0 0.0
    %1633 = vmatprep.subr.mxu0 0.0
    %1634 = vmatpush1.msra.mxu0 0.0
    %1635 = vmatprep.subr.mxu0 0.0
    %1636 = vmatpush1.msra.mxu0 0.0
    %1637 = vmatprep.subr.mxu0 0.0
    %1638 = vmatpush1.msra.mxu0 0.0
    %1639 = vmatprep.subr.mxu0 0.0
    %1640 = vmatpush1.msra.mxu0 0.0
    %1641 = vmatprep.subr.mxu0 0.0
    %1642 = vmatpush1.msra.mxu0 0.0
    %1643 = vmatprep.subr.mxu0 0.0
    %1644 = vmatpush1.msra.mxu0 0.0
    %1645 = vmatprep.subr.mxu0 0.0
    %1646 = vmatpush1.msra.mxu0 0.0
    %1647 = vmatprep.subr.mxu0 0.0
    %1648 = vmatpush1.msra.mxu0 0.0
    %1649 = vmatprep.subr.mxu0 0.0
    %1650 = vmatpush1.msra.mxu0 0.0
    %1651 = vmatprep.subr.mxu0 0.0
    %1652 = vmatpush1.msra.mxu0 0.0
    %1653 = vmatprep.subr.mxu0 0.0
    %1654 = vmatpush1.msra.mxu0 0.0
    %1655 = vmatprep.mubr.f32.mxu0 0.0
    %1656 = vmatmul.mubr.f32.gmra.mrb[0].mxu0 %v1583
    %v1657 = vpop.f32.mrb[0].mxu0
    %v1658 = vadd.f32 0.0, %v1657
    %v1659 = vpop.f32.mrb[0].mxu0
    %1660 = vmatprep.mubr.f32.mxu0 0.0
    %1661 = vmatmul.mubr.f32.gmra.mrb[0].mxu0 %v1586
    %v1662 = vpop.f32.mrb[0].mxu0
    %v1663 = vadd.f32 0.0, %v1662
    %v1664 = vpop.f32.mrb[0].mxu0
    %1665 = vmatprep.mubr.f32.mxu0 0.0
    %1666 = vmatmul.mubr.f32.gmra.mrb[0].mxu0 %v1589
    %v1667 = vpop.f32.mrb[0].mxu0
    %v1668 = vadd.f32 0.0, %v1667
    %v1669 = vpop.f32.mrb[0].mxu0
    %1670 = vdwg.mxu0
    %s1671 = scalar_lea.vmem [#allocation2], 320
    %v1672 = vld [vmem:[%s1671] sm:$0xf]
    %v1673 = vld [vmem:[%s1671 + $0x4] sm:$0xf]
    %v1674 = vld [vmem:[%s1671 + $0x8] sm:$0xf]
    %v1675 = vld [vmem:[%s1671 + $0xc] sm:$0xf]
    %v1676 = vld [vmem:[%s1671 + $0x10] sm:$0xf]
    %v1677 = vld [vmem:[%s1671 + $0x14] sm:$0xf]
    %v1678 = vld [vmem:[%s1671 + $0x18] sm:$0xf]
    %v1679 = vld [vmem:[%s1671 + $0x1c] sm:$0xf]
    %v1680 = vld [vmem:[%s1671 + $0x20] sm:$0xf]
    %v1681 = vld [vmem:[%s1671 + $0x24] sm:$0xf]
    %v1682 = vld [vmem:[%s1671 + $0x28] sm:$0xf]
    %v1683 = vld [vmem:[%s1671 + $0x2c] sm:$0xf]
    %v1684 = vld [vmem:[%s1671 + $0x30] sm:$0xf]
    %v1685 = vld [vmem:[%s1671 + $0x34] sm:$0xf]
    %v1686 = vld [vmem:[%s1671 + $0x38] sm:$0xf]
    %v1687 = vld [vmem:[%s1671 + $0x3c] sm:$0xf]
    %v1692 = vunpack.c.l.b16 %v100
    %v1693 = vunpack.c.l.b16 %v101
    %v1694 = vunpack.c.l.b16 %v102
    %v1695 = vunpack.c.l.b16 %v103
    %v1696 = vpack.c.b16 %v1693, %v1692
    %v1697 = vpack.c.b16 %v1695, %v1694
    %v1699 = vsel %vm83, %v1696, 0
    %v1702 = vsel %vm83, %v1697, 0
    %v1705 = vsel %vm1259, %v1153, 0
    %v1708 = vsel %vm1259, %v1154, 0
    %1710 = vmatprep.subr.bf16.mxu0 %v1151
    %1711 = vmatpush1.bf16.msra.mxu0 %v1150
    %1712 = vmatprep.subr.bf16.mxu0 %v1708
    %1713 = vmatpush1.bf16.msra.mxu0 %v1705
    %1714 = vmatprep.subr.bf16.mxu0 0
    %1715 = vmatpush1.bf16.msra.mxu0 0
    %1716 = vmatprep.subr.bf16.mxu0 0
    %1717 = vmatpush1.bf16.msra.mxu0 0
    %1718 = vmatprep.subr.bf16.mxu0 0
    %1719 = vmatpush1.bf16.msra.mxu0 0
    %1720 = vmatprep.subr.bf16.mxu0 0
    %1721 = vmatpush1.bf16.msra.mxu0 0
    %1722 = vmatprep.subr.bf16.mxu0 0
    %1723 = vmatpush1.bf16.msra.mxu0 0
    %1724 = vmatprep.subr.bf16.mxu0 0
    %1725 = vmatpush1.bf16.msra.mxu0 0
    %1726 = vmatprep.subr.bf16.mxu0 0
    %1727 = vmatpush1.bf16.msra.mxu0 0
    %1728 = vmatprep.subr.bf16.mxu0 0
    %1729 = vmatpush1.bf16.msra.mxu0 0
    %1730 = vmatprep.subr.bf16.mxu0 0
    %1731 = vmatpush1.bf16.msra.mxu0 0
    %1732 = vmatprep.subr.bf16.mxu0 0
    %1733 = vmatpush1.bf16.msra.mxu0 0
    %1734 = vmatprep.subr.bf16.mxu0 0
    %1735 = vmatpush1.bf16.msra.mxu0 0
    %1736 = vmatprep.subr.bf16.mxu0 0
    %1737 = vmatpush1.bf16.msra.mxu0 0
    %1738 = vmatprep.subr.bf16.mxu0 0
    %1739 = vmatpush1.bf16.msra.mxu0 0
    %1740 = vmatprep.subr.bf16.mxu0 0
    %1741 = vmatpush1.bf16.msra.mxu0 0
    %1742 = vmatprep.mubr.bf16.mxu0 0
    %1743 = vmatmul.mubr.bf16.gmra.mrb[0].mxu0 %v1699
    %v1744 = vpop.f32.mrb[0].mxu0
    %v1745 = vadd.f32 0.0, %v1744
    %v1746 = vpop.f32.mrb[0].mxu0
    %v1747 = vadd.f32 0.0, %v1746
    %v1748 = vpop.f32.mrb[0].mxu0
    %v1749 = vadd.f32 0.0, %v1748
    %v1750 = vpop.f32.mrb[0].mxu0
    %v1751 = vadd.f32 0.0, %v1750
    %1752 = vmatprep.mubr.bf16.mxu0 0
    %1753 = vmatmul.mubr.bf16.gmra.mrb[0].mxu0 %v1702
    %v1754 = vpop.f32.mrb[0].mxu0
    %v1755 = vadd.f32 0.0, %v1754
    %v1756 = vpop.f32.mrb[0].mxu0
    %v1757 = vadd.f32 0.0, %v1756
    %v1758 = vpop.f32.mrb[0].mxu0
    %v1759 = vadd.f32 0.0, %v1758
    %v1760 = vpop.f32.mrb[0].mxu0
    %v1761 = vadd.f32 0.0, %v1760
    %1762 = vdwg.mxu0
    %v1764 = vsel %vm112, %v126, 0
    %1766 = vmatprep.subr.bf16.mxu0 0
    %1767 = vmatpush1.bf16.msra.mxu0 %v871
    %1768 = vmatprep.subr.bf16.mxu0 0
    %1769 = vmatpush1.bf16.msra.mxu0 0
    %1770 = vmatprep.subr.bf16.mxu0 0
    %1771 = vmatpush1.bf16.msra.mxu0 0
    %1772 = vmatprep.subr.bf16.mxu0 0
    %1773 = vmatpush1.bf16.msra.mxu0 0
    %1774 = vmatprep.subr.bf16.mxu0 0
    %1775 = vmatpush1.bf16.msra.mxu0 0
    %1776 = vmatprep.subr.bf16.mxu0 0
    %1777 = vmatpush1.bf16.msra.mxu0 0
    %1778 = vmatprep.subr.bf16.mxu0 0
    %1779 = vmatpush1.bf16.msra.mxu0 0
    %1780 = vmatprep.subr.bf16.mxu0 0
    %1781 = vmatpush1.bf16.msra.mxu0 0
    %1782 = vmatprep.subr.bf16.mxu0 0
    %1783 = vmatpush1.bf16.msra.mxu0 0
    %1784 = vmatprep.subr.bf16.mxu0 0
    %1785 = vmatpush1.bf16.msra.mxu0 0
    %1786 = vmatprep.subr.bf16.mxu0 0
    %1787 = vmatpush1.bf16.msra.mxu0 0
    %1788 = vmatprep.subr.bf16.mxu0 0
    %1789 = vmatpush1.bf16.msra.mxu0 0
    %1790 = vmatprep.subr.bf16.mxu0 0
    %1791 = vmatpush1.bf16.msra.mxu0 0
    %1792 = vmatprep.subr.bf16.mxu0 0
    %1793 = vmatpush1.bf16.msra.mxu0 0
    %1794 = vmatprep.subr.bf16.mxu0 0
    %1795 = vmatpush1.bf16.msra.mxu0 0
    %1796 = vmatprep.subr.bf16.mxu0 0
    %1797 = vmatpush1.bf16.msra.mxu0 0
    %1798 = vmatprep.mubr.bf16.mxu0 0
    %1799 = vmatmul.mubr.bf16.gmra.mrb[0].mxu0 %v1764
    %v1800 = vpop.f32.mrb[0].mxu0
    %v1801 = vadd.f32 0.0, %v1800
    %v1802 = vpop.f32.mrb[0].mxu0
    %v1803 = vpop.f32.mrb[0].mxu0
    %v1804 = vpop.f32.mrb[0].mxu0
    %1805 = vdwg.mxu0
    %v1806 = vpack.c.bf16 %v1749, %v1745
    %v1807 = vpack.c.bf16 %v1759, %v1755
    %v1824 = vunpack.c.l.b16 %v1672
    %v1825 = vunpack.c.l.b16 %v1673
    %v1826 = vunpack.c.l.b16 %v1674
    %v1827 = vunpack.c.l.b16 %v1675
    %v1828 = vunpack.c.l.b16 %v1676
    %v1829 = vunpack.c.l.b16 %v1677
    %v1830 = vunpack.c.l.b16 %v1678
    %v1831 = vunpack.c.l.b16 %v1679
    %v1832 = vunpack.c.l.b16 %v1680
    %v1833 = vunpack.c.l.b16 %v1681
    %v1834 = vunpack.c.l.b16 %v1682
    %v1835 = vunpack.c.l.b16 %v1683
    %v1836 = vunpack.c.l.b16 %v1684
    %v1837 = vunpack.c.l.b16 %v1685
    %v1838 = vunpack.c.l.b16 %v1686
    %v1839 = vunpack.c.l.b16 %v1687
    %v1840 = vpack.c.b16 %v1825, %v1824
    %v1841 = vpack.c.b16 %v1827, %v1826
    %v1842 = vpack.c.b16 %v1829, %v1828
    %v1843 = vpack.c.b16 %v1831, %v1830
    %v1844 = vpack.c.b16 %v1833, %v1832
    %v1845 = vpack.c.b16 %v1835, %v1834
    %v1846 = vpack.c.b16 %v1837, %v1836
    %v1847 = vpack.c.b16 %v1839, %v1838
    %1856 = vmatprep.subr.bf16.mxu0 0
    %1857 = vmatpush1.bf16.msra.mxu0 %v1840
    %1858 = vmatprep.subr.bf16.mxu0 0
    %1859 = vmatpush1.bf16.msra.mxu0 %v1841
    %1860 = vmatprep.subr.bf16.mxu0 0
    %1861 = vmatpush1.bf16.msra.mxu0 %v1842
    %1862 = vmatprep.subr.bf16.mxu0 0
    %1863 = vmatpush1.bf16.msra.mxu0 %v1843
    %1864 = vmatprep.subr.bf16.mxu0 0
    %1865 = vmatpush1.bf16.msra.mxu0 %v1844
    %1866 = vmatprep.subr.bf16.mxu0 0
    %1867 = vmatpush1.bf16.msra.mxu0 %v1845
    %1868 = vmatprep.subr.bf16.mxu0 0
    %1869 = vmatpush1.bf16.msra.mxu0 %v1846
    %1870 = vmatprep.subr.bf16.mxu0 0
    %1871 = vmatpush1.bf16.msra.mxu0 %v1847
    %1872 = vmatprep.subr.bf16.mxu0 0
    %1873 = vmatpush1.bf16.msra.mxu0 0
    %1874 = vmatprep.subr.bf16.mxu0 0
    %1875 = vmatpush1.bf16.msra.mxu0 0
    %1876 = vmatprep.subr.bf16.mxu0 0
    %1877 = vmatpush1.bf16.msra.mxu0 0
    %1878 = vmatprep.subr.bf16.mxu0 0
    %1879 = vmatpush1.bf16.msra.mxu0 0
    %1880 = vmatprep.subr.bf16.mxu0 0
    %1881 = vmatpush1.bf16.msra.mxu0 0
    %1882 = vmatprep.subr.bf16.mxu0 0
    %1883 = vmatpush1.bf16.msra.mxu0 0
    %1884 = vmatprep.subr.bf16.mxu0 0
    %1885 = vmatpush1.bf16.msra.mxu0 0
    %1886 = vmatprep.subr.bf16.mxu0 0
    %1887 = vmatpush1.bf16.msra.mxu0 0
    %1888 = vmatprep.mubr.bf16.mxu0 0
    %1889 = vmatmul.mubr.bf16.gmra.mrb[0].mxu0 %v1806
    %v1890 = vpop.f32.mrb[0].mxu0
    %v1891 = vadd.f32 0.0, %v1890
    %v1892 = vpop.f32.mrb[0].mxu0
    %v1893 = vpop.f32.mrb[0].mxu0
    %v1894 = vadd.f32 0.0, %v1893
    %v1895 = vpop.f32.mrb[0].mxu0
    %1896 = vmatprep.mubr.bf16.mxu0 0
    %1897 = vmatmul.mubr.bf16.gmra.mrb[0].mxu0 %v1807
    %v1898 = vpop.f32.mrb[0].mxu0
    %v1899 = vadd.f32 0.0, %v1898
    %v1900 = vpop.f32.mrb[0].mxu0
    %v1901 = vpop.f32.mrb[0].mxu0
    %v1902 = vadd.f32 0.0, %v1901
    %v1903 = vpop.f32.mrb[0].mxu0
    %1904 = vdwg.mxu0
    %v1905 = vlaneseq
    %v1906 = vshrl.u32 %v1905, 7
    %v1907 = vsub.s32 0, %v1906
    %v1908 = vrot.slane %v1801, %v1907
    %v1909 = vmul.f32 %v1891, %v1908
    %v1910 = vmul.f32 %v1894, %v1908
    %v1911 = vmul.f32 %v1899, %v1908
    %v1912 = vmul.f32 %v1902, %v1908
    %1913 = vadd.xlane.f32.xlu0 %v1909
    %v1914 = vpop.xlane.xlu0 %1913
    %1915 = vadd.xlane.f32.xlu0 %v1910
    %v1916 = vpop.xlane.xlu0 %1915
    %1917 = vadd.xlane.f32.xlu0 %v1911
    %v1918 = vpop.xlane.xlu0 %1917
    %1919 = vadd.xlane.f32.xlu0 %v1912
    %v1920 = vpop.xlane.xlu0 %1919
    %v1921 = vmul.f32 %v1914, 0.17677669
    %v1922 = vmul.f32 %v1916, 0.17677669
    %v1923 = vmul.f32 %v1918, 0.17677669
    %v1924 = vmul.f32 %v1920, 0.17677669
    %vm1925 = vcmp.gt.f32.partialorder %v108, 0.0
    %vm1926 = vcmp.gt.f32.partialorder %v109, 0.0
    %vm1927 = vcmp.gt.f32.partialorder %v110, 0.0
    %vm1928 = vcmp.gt.f32.partialorder %v111, 0.0
    %v1929 = vsel %vm1925, %v1921, -1e+30
    %v1930 = vsel %vm1926, %v1922, -1e+30
    %v1931 = vsel %vm1927, %v1923, -1e+30
    %v1932 = vsel %vm1928, %v1924, -1e+30
    %v1933 = vsel %vm112, %v1929, -inf
    %v1934 = vsel %vm112, %v1930, -inf
    %v1935 = vsel %vm112, %v1931, -inf
    %v1936 = vsel %vm112, %v1932, -inf
    %v1937 = vmax.f32 %v1933, %v1934
    %v1938 = vmax.f32 %v1935, %v1936
    %v1939 = vmax.f32 %v1937, %v1938
    %v1940 = vrot.slane %v1939, 4
    %v1941 = vmax.f32 %v1939, %v1940
    %v1942 = vrot.slane %v1941, 2
    %v1943 = vmax.f32 %v1941, %v1942
    %v1944 = vrot.slane %v1943, 1
    %v1945 = vmax.f32 %v1943, %v1944
    %v1946 = vsel %vm1925, %v1945, 0.0
    %v1947 = vsel %vm1926, %v1945, 0.0
    %v1948 = vsel %vm1927, %v1945, 0.0
    %v1949 = vsel %vm1928, %v1945, 0.0
    %v1950 = vsel %vm112, %v1946, 0.0
    %1951 = vadd.xlane.f32.xlu0 %v1950
    %v1952 = vpop.xlane.xlu0 %1951
    %v1953 = vsel %vm112, %v1947, 0.0
    %1954 = vadd.xlane.f32.xlu0 %v1953
    %v1955 = vpop.xlane.xlu0 %1954
    %v1956 = vsel %vm112, %v1948, 0.0
    %1957 = vadd.xlane.f32.xlu0 %v1956
    %v1958 = vpop.xlane.xlu0 %1957
    %v1959 = vsel %vm112, %v1949, 0.0
    %1960 = vadd.xlane.f32.xlu0 %v1959
    %v1961 = vpop.xlane.xlu0 %1960
    %v1962 = vsub.f32 %v1921, %v1952
    %v1963 = vsub.f32 %v1922, %v1955
    %v1964 = vsub.f32 %v1923, %v1958
    %v1965 = vsub.f32 %v1924, %v1961
    %v1966 = vmul.f32 %v1962, 1.442695
    %v1967 = vpow.pop %v1966
    %v1968 = vmul.f32 %v1963, 1.442695
    %v1969 = vpow.pop %v1968
    %v1970 = vmul.f32 %v1964, 1.442695
    %v1971 = vpow.pop %v1970
    %v1972 = vmul.f32 %v1965, 1.442695
    %v1973 = vpow.pop %v1972
    %v1974 = vsel %vm1925, %v1967, 0.0
    %v1975 = vsel %vm1926, %v1969, 0.0
    %v1976 = vsel %vm1927, %v1971, 0.0
    %v1977 = vsel %vm1928, %v1973, 0.0
    %v1978 = vsel %vm112, %v1974, 0.0
    %v1979 = vsel %vm112, %v1975, 0.0
    %v1980 = vadd.f32 %v1978, %v1979
    %v1981 = vsel %vm112, %v1976, 0.0
    %v1982 = vadd.f32 %v1980, %v1981
    %v1983 = vsel %vm112, %v1977, 0.0
    %v1984 = vadd.f32 %v1982, %v1983
    %v1985 = vrot.slane %v1984, 4
    %v1986 = vadd.f32 %v1984, %v1985
    %v1987 = vrot.slane %v1986, 2
    %v1988 = vadd.f32 %v1986, %v1987
    %v1989 = vrot.slane %v1988, 1
    %v1990 = vadd.f32 %v1988, %v1989
    %v1991 = vsel %vm1925, %v1990, 0.0
    %v1992 = vsel %vm1926, %v1990, 0.0
    %v1993 = vsel %vm1927, %v1990, 0.0
    %v1994 = vsel %vm1928, %v1990, 0.0
    %v1995 = vsel %vm112, %v1991, 0.0
    %1996 = vadd.xlane.f32.xlu0 %v1995
    %v1997 = vpop.xlane.xlu0 %1996
    %v1998 = vsel %vm112, %v1992, 0.0
    %1999 = vadd.xlane.f32.xlu0 %v1998
    %v2000 = vpop.xlane.xlu0 %1999
    %v2001 = vsel %vm112, %v1993, 0.0
    %2002 = vadd.xlane.f32.xlu0 %v2001
    %v2003 = vpop.xlane.xlu0 %2002
    %v2004 = vsel %vm112, %v1994, 0.0
    %2005 = vadd.xlane.f32.xlu0 %v2004
    %v2006 = vpop.xlane.xlu0 %2005
    %v2007 = vrcp.pop %v1997
    %v2008 = vmul.f32 %v1967, %v2007
    %v2009 = vrcp.pop %v2000
    %v2010 = vmul.f32 %v1969, %v2009
    %v2011 = vrcp.pop %v2003
    %v2012 = vmul.f32 %v1971, %v2011
    %v2013 = vrcp.pop %v2006
    %v2014 = vmul.f32 %v1973, %v2013
    %v2015 = vmul.f32 %v2008, %v1747
    %v2016 = vmul.f32 %v2010, %v1751
    %v2017 = vmul.f32 %v2012, %v1757
    %v2018 = vmul.f32 %v2014, %v1761
    %2019 = vxpose.xlu0.b32.start [1/16] %v108, 128
    %2020 = vxpose.xlu0.b32.cont [2/16] %v109, 128
    %2021 = vxpose.xlu0.b32.cont [3/16] %v110, 128
    %2022 = vxpose.xlu0.b32.cont [4/16] %v111, 128
    %2023 = vxpose.xlu0.b32.cont [5/16] 0.0, 128
    %2024 = vxpose.xlu0.b32.cont [6/16] 0.0, 128
    %2025 = vxpose.xlu0.b32.cont [7/16] 0.0, 128
    %2026 = vxpose.xlu0.b32.cont [8/16] 0.0, 128
    %2027 = vxpose.xlu0.b32.cont [9/16] 0.0, 128
    %2028 = vxpose.xlu0.b32.cont [10/16] 0.0, 128
    %2029 = vxpose.xlu0.b32.cont [11/16] 0.0, 128
    %2030 = vxpose.xlu0.b32.cont [12/16] 0.0, 128
    %2031 = vxpose.xlu0.b32.cont [13/16] 0.0, 128
    %2032 = vxpose.xlu0.b32.cont [14/16] 0.0, 128
    %2033 = vxpose.xlu0.b32.cont [15/16] 0.0, 128
    %2034 = vxpose.xlu0.b32.end [16/16] 0.0, 128
    %v2035 = vpop.trf.xlu0
    %v2036 = vpop.trf.xlu0
    %v2037 = vpop.trf.xlu0
    %v2038 = vpop.trf.xlu0
    %v2039 = vpop.trf.xlu0
    %v2040 = vpop.trf.xlu0
    %v2041 = vpop.trf.xlu0
    %v2042 = vpop.trf.xlu0
    %v2043 = vpop.trf.xlu0
    %v2044 = vpop.trf.xlu0
    %v2045 = vpop.trf.xlu0
    %v2046 = vpop.trf.xlu0
    %v2047 = vpop.trf.xlu0
    %v2048 = vpop.trf.xlu0
    %v2049 = vpop.trf.xlu0
    %v2050 = vpop.trf.xlu0
    %vm2051 = vcmask 261120
    %v2053 = vsel %vm2051, %v2035, 0
    %v2056 = vsel %vm2051, %v2036, 0
    %2058 = vmatprep.subr.mxu0 0.0
    %2059 = vmatpush1.msra.mxu0 %v2015
    %2060 = vmatprep.subr.mxu0 0.0
    %2061 = vmatpush1.msra.mxu0 %v2016
    %2062 = vmatprep.subr.mxu0 0.0
    %2063 = vmatpush1.msra.mxu0 %v2017
    %2064 = vmatprep.subr.mxu0 0.0
    %2065 = vmatpush1.msra.mxu0 %v2018
    %2066 = vmatprep.subr.mxu0 0.0
    %2067 = vmatpush1.msra.mxu0 0.0
    %2068 = vmatprep.subr.mxu0 0.0
    %2069 = vmatpush1.msra.mxu0 0.0
    %2070 = vmatprep.subr.mxu0 0.0
    %2071 = vmatpush1.msra.mxu0 0.0
    %2072 = vmatprep.subr.mxu0 0.0
    %2073 = vmatpush1.msra.mxu0 0.0
    %2074 = vmatprep.subr.mxu0 0.0
    %2075 = vmatpush1.msra.mxu0 0.0
    %2076 = vmatprep.subr.mxu0 0.0
    %2077 = vmatpush1.msra.mxu0 0.0
    %2078 = vmatprep.subr.mxu0 0.0
    %2079 = vmatpush1.msra.mxu0 0.0
    %2080 = vmatprep.subr.mxu0 0.0
    %2081 = vmatpush1.msra.mxu0 0.0
    %2082 = vmatprep.subr.mxu0 0.0
    %2083 = vmatpush1.msra.mxu0 0.0
    %2084 = vmatprep.subr.mxu0 0.0
    %2085 = vmatpush1.msra.mxu0 0.0
    %2086 = vmatprep.subr.mxu0 0.0
    %2087 = vmatpush1.msra.mxu0 0.0
    %2088 = vmatprep.subr.mxu0 0.0
    %2089 = vmatpush1.msra.mxu0 0.0
    %2090 = vmatprep.subr.mxu0 0.0
    %2091 = vmatpush1.msra.mxu0 0.0
    %2092 = vmatprep.subr.mxu0 0.0
    %2093 = vmatpush1.msra.mxu0 0.0
    %2094 = vmatprep.subr.mxu0 0.0
    %2095 = vmatpush1.msra.mxu0 0.0
    %2096 = vmatprep.subr.mxu0 0.0
    %2097 = vmatpush1.msra.mxu0 0.0
    %2098 = vmatprep.subr.mxu0 0.0
    %2099 = vmatpush1.msra.mxu0 0.0
    %2100 = vmatprep.subr.mxu0 0.0
    %2101 = vmatpush1.msra.mxu0 0.0
    %2102 = vmatprep.subr.mxu0 0.0
    %2103 = vmatpush1.msra.mxu0 0.0
    %2104 = vmatprep.subr.mxu0 0.0
    %2105 = vmatpush1.msra.mxu0 0.0
    %2106 = vmatprep.subr.mxu0 0.0
    %2107 = vmatpush1.msra.mxu0 0.0
    %2108 = vmatprep.subr.mxu0 0.0
    %2109 = vmatpush1.msra.mxu0 0.0
    %2110 = vmatprep.subr.mxu0 0.0
    %2111 = vmatpush1.msra.mxu0 0.0
    %2112 = vmatprep.subr.mxu0 0.0
    %2113 = vmatpush1.msra.mxu0 0.0
    %2114 = vmatprep.subr.mxu0 0.0
    %2115 = vmatpush1.msra.mxu0 0.0
    %2116 = vmatprep.subr.mxu0 0.0
    %2117 = vmatpush1.msra.mxu0 0.0
    %2118 = vmatprep.subr.mxu0 0.0
    %2119 = vmatpush1.msra.mxu0 0.0
    %2120 = vmatprep.subr.mxu0 0.0
    %2121 = vmatpush1.msra.mxu0 0.0
    %2122 = vmatprep.mubr.f32.mxu0 0.0
    %2123 = vmatmul.mubr.f32.gmra.mrb[0].mxu0 %v2053
    %v2124 = vpop.f32.mrb[0].mxu0
    %v2125 = vadd.f32 0.0, %v2124
    %v2126 = vpop.f32.mrb[0].mxu0
    %2127 = vmatprep.mubr.f32.mxu0 0.0
    %2128 = vmatmul.mubr.f32.gmra.mrb[0].mxu0 %v2056
    %v2129 = vpop.f32.mrb[0].mxu0
    %v2130 = vadd.f32 0.0, %v2129
    %v2131 = vpop.f32.mrb[0].mxu0
    %2132 = vdwg.mxu0
    %v2133 = vld [vmem:[%s7 + $0x4] sm:$0x1]
    %v2134 = vld [vmem:[%s7 + $0x6] sm:$0x1]
    %v2135 = vadd.f32 %v2125, %v2130
    %v2136 = vrot.slane %v2135, 4
    %v2137 = vadd.f32 %v2135, %v2136
    %v2138 = vrot.slane %v2137, 2
    %v2139 = vadd.f32 %v2137, %v2138
    %v2140 = vrot.slane %v2139, 1
    %v2141 = vadd.f32 %v2139, %v2140
    %v2142 = vrcp.pop 16.0
    %v2143 = vmul.f32 %v2141, %v2142
    %v2144 = vsub.f32 %v2125, %v2143
    %v2145 = vsub.f32 %v2130, %v2143
    %v2146 = vmul.f32 %v2144, %v2144
    %v2147 = vmul.f32 %v2145, %v2145
    %v2148 = vadd.f32 %v2146, %v2147
    %v2149 = vrot.slane %v2148, 4
    %v2150 = vadd.f32 %v2148, %v2149
    %v2151 = vrot.slane %v2150, 2
    %v2152 = vadd.f32 %v2150, %v2151
    %v2153 = vrot.slane %v2152, 1
    %v2154 = vadd.f32 %v2152, %v2153
    %v2155 = vmul.f32 %v2154, %v2142
    %v2156 = vadd.f32 %v2155, 1e-05
    %v2157 = vrsqrt.pop %v2156
    %v2158 = vmul.f32 %v2144, %v2157
    %v2159 = vmul.f32 %v2145, %v2157
    %v2160 = vlaneseq
    %v2161 = vshrl.u32 %v2160, 7
    %v2162 = vsub.s32 0, %v2161
    %v2163 = vrot.slane %v2133, %v2162
    %v2164 = vmul.f32 %v2158, %v2163
    %v2165 = vmul.f32 %v2159, %v2163
    %v2166 = vlaneseq
    %v2167 = vshrl.u32 %v2166, 7
    %v2168 = vsub.s32 0, %v2167
    %v2169 = vrot.slane %v2134, %v2168
    %v2170 = vadd.f32 %v2164, %v2169
    %v2171 = vadd.f32 %v2165, %v2169
    %v2172 = vmax.f32 %v2170, 0.0
    %v2173 = vmax.f32 %v2171, 0.0
    %v2174 = vadd.f32 %v2172, %v484
    %v2175 = vadd.f32 %v2173, %v487
    %v2176 = vld [vmem:[%s7 + $0x5] sm:$0x1]
    %v2177 = vld [vmem:[%s7 + $0x7] sm:$0x1]
    %v2178 = vadd.f32 %v1658, %v1663
    %v2179 = vadd.f32 %v2178, %v1668
    %v2180 = vrot.slane %v2179, 4
    %v2181 = vadd.f32 %v2179, %v2180
    %v2182 = vrot.slane %v2181, 2
    %v2183 = vadd.f32 %v2181, %v2182
    %v2184 = vrot.slane %v2183, 1
    %v2185 = vadd.f32 %v2183, %v2184
    %v2186 = vrcp.pop 24.0
    %v2187 = vmul.f32 %v2185, %v2186
    %v2188 = vsub.f32 %v1658, %v2187
    %v2189 = vsub.f32 %v1663, %v2187
    %v2190 = vsub.f32 %v1668, %v2187
    %v2191 = vmul.f32 %v2188, %v2188
    %v2192 = vmul.f32 %v2189, %v2189
    %v2193 = vmul.f32 %v2190, %v2190
    %v2194 = vadd.f32 %v2191, %v2192
    %v2195 = vadd.f32 %v2194, %v2193
    %v2196 = vrot.slane %v2195, 4
    %v2197 = vadd.f32 %v2195, %v2196
    %v2198 = vrot.slane %v2197, 2
    %v2199 = vadd.f32 %v2197, %v2198
    %v2200 = vrot.slane %v2199, 1
    %v2201 = vadd.f32 %v2199, %v2200
    %v2202 = vmul.f32 %v2201, %v2186
    %v2203 = vadd.f32 %v2202, 1e-05
    %v2204 = vrsqrt.pop %v2203
    %v2205 = vmul.f32 %v2188, %v2204
    %v2206 = vmul.f32 %v2189, %v2204
    %v2207 = vmul.f32 %v2190, %v2204
    %v2208 = vlaneseq
    %v2209 = vshrl.u32 %v2208, 7
    %v2210 = vsub.s32 0, %v2209
    %v2211 = vrot.slane %v2176, %v2210
    %v2212 = vmul.f32 %v2205, %v2211
    %v2213 = vmul.f32 %v2206, %v2211
    %v2214 = vmul.f32 %v2207, %v2211
    %v2215 = vlaneseq
    %v2216 = vshrl.u32 %v2215, 7
    %v2217 = vsub.s32 0, %v2216
    %v2218 = vrot.slane %v2177, %v2217
    %v2219 = vadd.f32 %v2212, %v2218
    %v2220 = vadd.f32 %v2213, %v2218
    %v2221 = vadd.f32 %v2214, %v2218
    %v2222 = vmax.f32 %v2219, 0.0
    %v2223 = vmax.f32 %v2220, 0.0
    %v2224 = vmax.f32 %v2221, 0.0
    %v2225 = vadd.f32 %v2222, %v595
    %v2226 = vadd.f32 %v2223, %v598
    %v2227 = vadd.f32 %v2224, %v603
    %v2228 = vpack.c.bf16 %v2175, %v2174
    %v2229 = vpack.c.bf16 %v2226, %v2225
    %v2230 = vpack.c.bf16 %v2227, %v2227
    %s2231 = scalar_lea.vmem [#allocation5], 384
    %v2232 = vld [vmem:[%s2231] sm:$0xff]
    %v2233 = vld [vmem:[%s2231 + $0x8] sm:$0xf]
    %v2234 = vld [vmem:[%s2231 + $0xc] sm:$0xff]
    %v2235 = vld [vmem:[%s2231 + $0x14] sm:$0xf]
    %v2236 = vld [vmem:[%s2231 + $0x18] sm:$0xff]
    %v2237 = vld [vmem:[%s2231 + $0x20] sm:$0xf]
    %v2238 = vld [vmem:[%s2231 + $0x24] sm:$0xff]
    %v2239 = vld [vmem:[%s2231 + $0x2c] sm:$0xf]
    %v2240 = vld [vmem:[%s2231 + $0x30] sm:$0xff]
    %v2241 = vld [vmem:[%s2231 + $0x38] sm:$0xf]
    %v2242 = vld [vmem:[%s2231 + $0x3c] sm:$0xff]
    %v2243 = vld [vmem:[%s2231 + $0x44] sm:$0xf]
    %v2244 = vld [vmem:[%s2231 + $0x48] sm:$0xff]
    %v2245 = vld [vmem:[%s2231 + $0x50] sm:$0xf]
    %v2246 = vld [vmem:[%s2231 + $0x54] sm:$0xff]
    %v2247 = vld [vmem:[%s2231 + $0x5c] sm:$0xf]
    %v2248 = vld [vmem:[%s2231 + $0x60] sm:$0xff]
    %v2249 = vld [vmem:[%s2231 + $0x68] sm:$0xf]
    %v2250 = vld [vmem:[%s2231 + $0x6c] sm:$0xff]
    %v2251 = vld [vmem:[%s2231 + $0x74] sm:$0xf]
    %v2252 = vld [vmem:[%s2231 + $0x78] sm:$0xff]
    %v2253 = vld [vmem:[%s2231 + $0x80] sm:$0xf]
    %v2254 = vld [vmem:[%s2231 + $0x84] sm:$0xff]
    %v2255 = vld [vmem:[%s2231 + $0x8c] sm:$0xf]
    %v2256 = vld [vmem:[%s2231 + $0x90] sm:$0xff]
    %v2257 = vld [vmem:[%s2231 + $0x98] sm:$0xf]
    %v2258 = vld [vmem:[%s2231 + $0x9c] sm:$0xff]
    %v2259 = vld [vmem:[%s2231 + $0xa4] sm:$0xf]
    %v2260 = vld [vmem:[%s2231 + $0xa8] sm:$0xff]
    %v2261 = vld [vmem:[%s2231 + $0xb0] sm:$0xf]
    %v2262 = vld [vmem:[%s2231 + $0xb4] sm:$0xff]
    %v2263 = vld [vmem:[%s2231 + $0xbc] sm:$0xf]
    %s2264 = scalar_lea.vmem %s9, 2
    %v2265 = vld [vmem:[%s2264] ss:$4 sm:$0x7]
    %v2267 = vlaneseq
    %v2268 = vshrl.u32 %v2267, 7
    %v2269 = vsub.s32 0, %v2268
    %v2270 = vrot.slane %v2265, %v2269
    %v2271 = vlaneseq
    %v2272 = vshrl.u32 %v2271, 7
    %v2273 = vsub.s32 1, %v2272
    %v2274 = vrot.slane %v2265, %v2273
    %v2275 = vlaneseq
    %v2276 = vshrl.u32 %v2275, 7
    %v2277 = vsub.s32 2, %v2276
    %v2278 = vrot.slane %v2265, %v2277
    %v2314 = vunpack.c.l.b16 %v2232
    %v2315 = vunpack.c.h.b16 %v2232
    %v2316 = vunpack.c.l.b16 %v2233
    %v2317 = vunpack.c.l.b16 %v2234
    %v2318 = vunpack.c.h.b16 %v2234
    %v2319 = vunpack.c.l.b16 %v2235
    %v2320 = vunpack.c.l.b16 %v2236
    %v2321 = vunpack.c.h.b16 %v2236
    %v2322 = vunpack.c.l.b16 %v2237
    %v2323 = vunpack.c.l.b16 %v2238
    %v2324 = vunpack.c.h.b16 %v2238
    %v2325 = vunpack.c.l.b16 %v2239
    %v2326 = vunpack.c.l.b16 %v2240
    %v2327 = vunpack.c.h.b16 %v2240
    %v2328 = vunpack.c.l.b16 %v2241
    %v2329 = vunpack.c.l.b16 %v2242
    %v2330 = vunpack.c.h.b16 %v2242
    %v2331 = vunpack.c.l.b16 %v2243
    %v2332 = vunpack.c.l.b16 %v2244
    %v2333 = vunpack.c.h.b16 %v2244
    %v2334 = vunpack.c.l.b16 %v2245
    %v2335 = vunpack.c.l.b16 %v2246
    %v2336 = vunpack.c.h.b16 %v2246
    %v2337 = vunpack.c.l.b16 %v2247
    %v2338 = vunpack.c.l.b16 %v2248
    %v2339 = vunpack.c.h.b16 %v2248
    %v2340 = vunpack.c.l.b16 %v2249
    %v2341 = vunpack.c.l.b16 %v2250
    %v2342 = vunpack.c.h.b16 %v2250
    %v2343 = vunpack.c.l.b16 %v2251
    %v2344 = vunpack.c.l.b16 %v2252
    %v2345 = vunpack.c.h.b16 %v2252
    %v2346 = vunpack.c.l.b16 %v2253
    %v2347 = vunpack.c.l.b16 %v2254
    %v2348 = vunpack.c.h.b16 %v2254
    %v2349 = vunpack.c.l.b16 %v2255
    %v2350 = vunpack.c.l.b16 %v2256
    %v2351 = vunpack.c.h.b16 %v2256
    %v2352 = vunpack.c.l.b16 %v2257
    %v2353 = vunpack.c.l.b16 %v2258
    %v2354 = vunpack.c.h.b16 %v2258
    %v2355 = vunpack.c.l.b16 %v2259
    %v2356 = vunpack.c.l.b16 %v2260
    %v2357 = vunpack.c.h.b16 %v2260
    %v2358 = vunpack.c.l.b16 %v2261
    %v2359 = vunpack.c.l.b16 %v2262
    %v2360 = vunpack.c.h.b16 %v2262
    %v2361 = vunpack.c.l.b16 %v2263
    %v2362 = vpack.c.b16 %v2317, %v2314
    %v2363 = vpack.c.b16 %v2318, %v2315
    %v2364 = vpack.c.b16 %v2319, %v2316
    %v2365 = vpack.c.b16 %v2323, %v2320
    %v2366 = vpack.c.b16 %v2324, %v2321
    %v2367 = vpack.c.b16 %v2325, %v2322
    %v2368 = vpack.c.b16 %v2329, %v2326
    %v2369 = vpack.c.b16 %v2330, %v2327
    %v2370 = vpack.c.b16 %v2331, %v2328
    %v2371 = vpack.c.b16 %v2335, %v2332
    %v2372 = vpack.c.b16 %v2336, %v2333
    %v2373 = vpack.c.b16 %v2337, %v2334
    %v2374 = vpack.c.b16 %v2341, %v2338
    %v2375 = vpack.c.b16 %v2342, %v2339
    %v2376 = vpack.c.b16 %v2343, %v2340
    %v2377 = vpack.c.b16 %v2347, %v2344
    %v2378 = vpack.c.b16 %v2348, %v2345
    %v2379 = vpack.c.b16 %v2349, %v2346
    %v2380 = vpack.c.b16 %v2353, %v2350
    %v2381 = vpack.c.b16 %v2354, %v2351
    %v2382 = vpack.c.b16 %v2355, %v2352
    %v2383 = vpack.c.b16 %v2359, %v2356
    %v2384 = vpack.c.b16 %v2360, %v2357
    %v2385 = vpack.c.b16 %v2361, %v2358
    %2410 = vmatprep.subr.bf16.mxu0 %v2363
    %2411 = vmatpush1.bf16.msra.mxu0 %v2362
    %2412 = vmatprep.subr.bf16.mxu0 %v2366
    %2413 = vmatpush1.bf16.msra.mxu0 %v2365
    %2414 = vmatprep.subr.bf16.mxu0 %v2369
    %2415 = vmatpush1.bf16.msra.mxu0 %v2368
    %2416 = vmatprep.subr.bf16.mxu0 %v2372
    %2417 = vmatpush1.bf16.msra.mxu0 %v2371
    %2418 = vmatprep.subr.bf16.mxu0 %v2375
    %2419 = vmatpush1.bf16.msra.mxu0 %v2374
    %2420 = vmatprep.subr.bf16.mxu0 %v2378
    %2421 = vmatpush1.bf16.msra.mxu0 %v2377
    %2422 = vmatprep.subr.bf16.mxu0 %v2381
    %2423 = vmatpush1.bf16.msra.mxu0 %v2380
    %2424 = vmatprep.subr.bf16.mxu0 %v2384
    %2425 = vmatpush1.bf16.msra.mxu0 %v2383
    %2426 = vmatprep.subr.bf16.mxu0 0
    %2427 = vmatpush1.bf16.msra.mxu0 0
    %2428 = vmatprep.subr.bf16.mxu0 0
    %2429 = vmatpush1.bf16.msra.mxu0 0
    %2430 = vmatprep.subr.bf16.mxu0 0
    %2431 = vmatpush1.bf16.msra.mxu0 0
    %2432 = vmatprep.subr.bf16.mxu0 0
    %2433 = vmatpush1.bf16.msra.mxu0 0
    %2434 = vmatprep.subr.bf16.mxu0 0
    %2435 = vmatpush1.bf16.msra.mxu0 0
    %2436 = vmatprep.subr.bf16.mxu0 0
    %2437 = vmatpush1.bf16.msra.mxu0 0
    %2438 = vmatprep.subr.bf16.mxu0 0
    %2439 = vmatpush1.bf16.msra.mxu0 0
    %2440 = vmatprep.subr.bf16.mxu0 0
    %2441 = vmatpush1.bf16.msra.mxu0 0
    %2442 = vmatprep.mubr.bf16.mxu0 0
    %2443 = vmatmul.mubr.bf16.gmra.mrb[0].mxu0 %v2228
    %v2444 = vpop.f32.mrb[0].mxu0
    %v2445 = vadd.f32 %v2270, %v2444
    %v2446 = vpop.f32.mrb[0].mxu0
    %v2447 = vadd.f32 %v2274, %v2446
    %v2448 = vpop.f32.mrb[0].mxu0
    %v2449 = vadd.f32 %v2270, %v2448
    %v2450 = vpop.f32.mrb[0].mxu0
    %v2451 = vadd.f32 %v2274, %v2450
    %2452 = vdwg.mxu0
    %2453 = vmatprep.subr.bf16.mxu0 0
    %2454 = vmatpush1.bf16.msra.mxu0 %v2364
    %2455 = vmatprep.subr.bf16.mxu0 0
    %2456 = vmatpush1.bf16.msra.mxu0 %v2367
    %2457 = vmatprep.subr.bf16.mxu0 0
    %2458 = vmatpush1.bf16.msra.mxu0 %v2370
    %2459 = vmatprep.subr.bf16.mxu0 0
    %2460 = vmatpush1.bf16.msra.mxu0 %v2373
    %2461 = vmatprep.subr.bf16.mxu0 0
    %2462 = vmatpush1.bf16.msra.mxu0 %v2376
    %2463 = vmatprep.subr.bf16.mxu0 0
    %2464 = vmatpush1.bf16.msra.mxu0 %v2379
    %2465 = vmatprep.subr.bf16.mxu0 0
    %2466 = vmatpush1.bf16.msra.mxu0 %v2382
    %2467 = vmatprep.subr.bf16.mxu0 0
    %2468 = vmatpush1.bf16.msra.mxu0 %v2385
    %2469 = vmatprep.subr.bf16.mxu0 0
    %2470 = vmatpush1.bf16.msra.mxu0 0
    %2471 = vmatprep.subr.bf16.mxu0 0
    %2472 = vmatpush1.bf16.msra.mxu0 0
    %2473 = vmatprep.subr.bf16.mxu0 0
    %2474 = vmatpush1.bf16.msra.mxu0 0
    %2475 = vmatprep.subr.bf16.mxu0 0
    %2476 = vmatpush1.bf16.msra.mxu0 0
    %2477 = vmatprep.subr.bf16.mxu0 0
    %2478 = vmatpush1.bf16.msra.mxu0 0
    %2479 = vmatprep.subr.bf16.mxu0 0
    %2480 = vmatpush1.bf16.msra.mxu0 0
    %2481 = vmatprep.subr.bf16.mxu0 0
    %2482 = vmatpush1.bf16.msra.mxu0 0
    %2483 = vmatprep.subr.bf16.mxu0 0
    %2484 = vmatpush1.bf16.msra.mxu0 0
    %2485 = vmatprep.mubr.bf16.mxu0 0
    %2486 = vmatmul.mubr.bf16.gmra.mrb[0].mxu0 %v2228
    %v2487 = vpop.f32.mrb[0].mxu0
    %v2488 = vadd.f32 %v2278, %v2487
    %v2489 = vpop.f32.mrb[0].mxu0
    %v2490 = vpop.f32.mrb[0].mxu0
    %v2491 = vadd.f32 %v2278, %v2490
    %v2492 = vpop.f32.mrb[0].mxu0
    %2493 = vdwg.mxu0
    %v2494 = vpack.c.bf16 %v2449, %v2445
    %v2495 = vpack.c.bf16 %v2451, %v2447
    %v2496 = vpack.c.bf16 %v2491, %v2488
    %s2497 = scalar_lea.vmem [#allocation5], 576
    %v2498 = vld [vmem:[%s2497] sm:$0xff]
    %v2499 = vld [vmem:[%s2497 + $0x8] sm:$0xf]
    %v2500 = vld [vmem:[%s2497 + $0xc] sm:$0xff]
    %v2501 = vld [vmem:[%s2497 + $0x14] sm:$0xf]
    %v2502 = vld [vmem:[%s2497 + $0x18] sm:$0xff]
    %v2503 = vld [vmem:[%s2497 + $0x20] sm:$0xf]
    %v2504 = vld [vmem:[%s2497 + $0x24] sm:$0xff]
    %v2505 = vld [vmem:[%s2497 + $0x2c] sm:$0xf]
    %v2506 = vld [vmem:[%s2497 + $0x30] sm:$0xff]
    %v2507 = vld [vmem:[%s2497 + $0x38] sm:$0xf]
    %v2508 = vld [vmem:[%s2497 + $0x3c] sm:$0xff]
    %v2509 = vld [vmem:[%s2497 + $0x44] sm:$0xf]
    %v2510 = vld [vmem:[%s2497 + $0x48] sm:$0xff]
    %v2511 = vld [vmem:[%s2497 + $0x50] sm:$0xf]
    %v2512 = vld [vmem:[%s2497 + $0x54] sm:$0xff]
    %v2513 = vld [vmem:[%s2497 + $0x5c] sm:$0xf]
    %v2514 = vld [vmem:[%s2497 + $0x60] sm:$0xff]
    %v2515 = vld [vmem:[%s2497 + $0x68] sm:$0xf]
    %v2516 = vld [vmem:[%s2497 + $0x6c] sm:$0xff]
    %v2517 = vld [vmem:[%s2497 + $0x74] sm:$0xf]
    %v2518 = vld [vmem:[%s2497 + $0x78] sm:$0xff]
    %v2519 = vld [vmem:[%s2497 + $0x80] sm:$0xf]
    %v2520 = vld [vmem:[%s2497 + $0x84] sm:$0xff]
    %v2521 = vld [vmem:[%s2497 + $0x8c] sm:$0xf]
    %v2522 = vld [vmem:[%s2497 + $0x90] sm:$0xff]
    %v2523 = vld [vmem:[%s2497 + $0x98] sm:$0xf]
    %v2524 = vld [vmem:[%s2497 + $0x9c] sm:$0xff]
    %v2525 = vld [vmem:[%s2497 + $0xa4] sm:$0xf]
    %v2526 = vld [vmem:[%s2497 + $0xa8] sm:$0xff]
    %v2527 = vld [vmem:[%s2497 + $0xb0] sm:$0xf]
    %v2528 = vld [vmem:[%s2497 + $0xb4] sm:$0xff]
    %v2529 = vld [vmem:[%s2497 + $0xbc] sm:$0xf]
    %s2530 = scalar_lea.vmem %s9, 3
    %v2531 = vld [vmem:[%s2530] ss:$4 sm:$0x7]
    %v2533 = vlaneseq
    %v2534 = vshrl.u32 %v2533, 7
    %v2535 = vsub.s32 0, %v2534
    %v2536 = vrot.slane %v2531, %v2535
    %v2537 = vlaneseq
    %v2538 = vshrl.u32 %v2537, 7
    %v2539 = vsub.s32 1, %v2538
    %v2540 = vrot.slane %v2531, %v2539
    %v2541 = vlaneseq
    %v2542 = vshrl.u32 %v2541, 7
    %v2543 = vsub.s32 2, %v2542
    %v2544 = vrot.slane %v2531, %v2543
    %v2580 = vunpack.c.l.b16 %v2498
    %v2581 = vunpack.c.h.b16 %v2498
    %v2582 = vunpack.c.l.b16 %v2499
    %v2583 = vunpack.c.l.b16 %v2500
    %v2584 = vunpack.c.h.b16 %v2500
    %v2585 = vunpack.c.l.b16 %v2501
    %v2586 = vunpack.c.l.b16 %v2502
    %v2587 = vunpack.c.h.b16 %v2502
    %v2588 = vunpack.c.l.b16 %v2503
    %v2589 = vunpack.c.l.b16 %v2504
    %v2590 = vunpack.c.h.b16 %v2504
    %v2591 = vunpack.c.l.b16 %v2505
    %v2592 = vunpack.c.l.b16 %v2506
    %v2593 = vunpack.c.h.b16 %v2506
    %v2594 = vunpack.c.l.b16 %v2507
    %v2595 = vunpack.c.l.b16 %v2508
    %v2596 = vunpack.c.h.b16 %v2508
    %v2597 = vunpack.c.l.b16 %v2509
    %v2598 = vunpack.c.l.b16 %v2510
    %v2599 = vunpack.c.h.b16 %v2510
    %v2600 = vunpack.c.l.b16 %v2511
    %v2601 = vunpack.c.l.b16 %v2512
    %v2602 = vunpack.c.h.b16 %v2512
    %v2603 = vunpack.c.l.b16 %v2513
    %v2604 = vunpack.c.l.b16 %v2514
    %v2605 = vunpack.c.h.b16 %v2514
    %v2606 = vunpack.c.l.b16 %v2515
    %v2607 = vunpack.c.l.b16 %v2516
    %v2608 = vunpack.c.h.b16 %v2516
    %v2609 = vunpack.c.l.b16 %v2517
    %v2610 = vunpack.c.l.b16 %v2518
    %v2611 = vunpack.c.h.b16 %v2518
    %v2612 = vunpack.c.l.b16 %v2519
    %v2613 = vunpack.c.l.b16 %v2520
    %v2614 = vunpack.c.h.b16 %v2520
    %v2615 = vunpack.c.l.b16 %v2521
    %v2616 = vunpack.c.l.b16 %v2522
    %v2617 = vunpack.c.h.b16 %v2522
    %v2618 = vunpack.c.l.b16 %v2523
    %v2619 = vunpack.c.l.b16 %v2524
    %v2620 = vunpack.c.h.b16 %v2524
    %v2621 = vunpack.c.l.b16 %v2525
    %v2622 = vunpack.c.l.b16 %v2526
    %v2623 = vunpack.c.h.b16 %v2526
    %v2624 = vunpack.c.l.b16 %v2527
    %v2625 = vunpack.c.l.b16 %v2528
    %v2626 = vunpack.c.h.b16 %v2528
    %v2627 = vunpack.c.l.b16 %v2529
    %v2628 = vpack.c.b16 %v2583, %v2580
    %v2629 = vpack.c.b16 %v2584, %v2581
    %v2630 = vpack.c.b16 %v2585, %v2582
    %v2631 = vpack.c.b16 %v2589, %v2586
    %v2632 = vpack.c.b16 %v2590, %v2587
    %v2633 = vpack.c.b16 %v2591, %v2588
    %v2634 = vpack.c.b16 %v2595, %v2592
    %v2635 = vpack.c.b16 %v2596, %v2593
    %v2636 = vpack.c.b16 %v2597, %v2594
    %v2637 = vpack.c.b16 %v2601, %v2598
    %v2638 = vpack.c.b16 %v2602, %v2599
    %v2639 = vpack.c.b16 %v2603, %v2600
    %v2640 = vpack.c.b16 %v2607, %v2604
    %v2641 = vpack.c.b16 %v2608, %v2605
    %v2642 = vpack.c.b16 %v2609, %v2606
    %v2643 = vpack.c.b16 %v2613, %v2610
    %v2644 = vpack.c.b16 %v2614, %v2611
    %v2645 = vpack.c.b16 %v2615, %v2612
    %v2646 = vpack.c.b16 %v2619, %v2616
    %v2647 = vpack.c.b16 %v2620, %v2617
    %v2648 = vpack.c.b16 %v2621, %v2618
    %v2649 = vpack.c.b16 %v2625, %v2622
    %v2650 = vpack.c.b16 %v2626, %v2623
    %v2651 = vpack.c.b16 %v2627, %v2624
    %2676 = vmatprep.subr.bf16.mxu0 %v2629
    %2677 = vmatpush1.bf16.msra.mxu0 %v2628
    %2678 = vmatprep.subr.bf16.mxu0 %v2632
    %2679 = vmatpush1.bf16.msra.mxu0 %v2631
    %2680 = vmatprep.subr.bf16.mxu0 %v2635
    %2681 = vmatpush1.bf16.msra.mxu0 %v2634
    %2682 = vmatprep.subr.bf16.mxu0 %v2638
    %2683 = vmatpush1.bf16.msra.mxu0 %v2637
    %2684 = vmatprep.subr.bf16.mxu0 %v2641
    %2685 = vmatpush1.bf16.msra.mxu0 %v2640
    %2686 = vmatprep.subr.bf16.mxu0 %v2644
    %2687 = vmatpush1.bf16.msra.mxu0 %v2643
    %2688 = vmatprep.subr.bf16.mxu0 %v2647
    %2689 = vmatpush1.bf16.msra.mxu0 %v2646
    %2690 = vmatprep.subr.bf16.mxu0 %v2650
    %2691 = vmatpush1.bf16.msra.mxu0 %v2649
    %2692 = vmatprep.subr.bf16.mxu0 0
    %2693 = vmatpush1.bf16.msra.mxu0 0
    %2694 = vmatprep.subr.bf16.mxu0 0
    %2695 = vmatpush1.bf16.msra.mxu0 0
    %2696 = vmatprep.subr.bf16.mxu0 0
    %2697 = vmatpush1.bf16.msra.mxu0 0
    %2698 = vmatprep.subr.bf16.mxu0 0
    %2699 = vmatpush1.bf16.msra.mxu0 0
    %2700 = vmatprep.subr.bf16.mxu0 0
    %2701 = vmatpush1.bf16.msra.mxu0 0
    %2702 = vmatprep.subr.bf16.mxu0 0
    %2703 = vmatpush1.bf16.msra.mxu0 0
    %2704 = vmatprep.subr.bf16.mxu0 0
    %2705 = vmatpush1.bf16.msra.mxu0 0
    %2706 = vmatprep.subr.bf16.mxu0 0
    %2707 = vmatpush1.bf16.msra.mxu0 0
    %2708 = vmatprep.mubr.bf16.mxu0 0
    %2709 = vmatmul.mubr.bf16.gmra.mrb[0].mxu0 %v2229
    %v2710 = vpop.f32.mrb[0].mxu0
    %v2711 = vadd.f32 %v2536, %v2710
    %v2712 = vpop.f32.mrb[0].mxu0
    %v2713 = vadd.f32 %v2540, %v2712
    %v2714 = vpop.f32.mrb[0].mxu0
    %v2715 = vadd.f32 %v2536, %v2714
    %v2716 = vpop.f32.mrb[0].mxu0
    %v2717 = vadd.f32 %v2540, %v2716
    %2718 = vmatprep.mubr.bf16.mxu0 0
    %2719 = vmatmul.mubr.bf16.gmra.mrb[0].mxu0 %v2230
    %v2720 = vpop.f32.mrb[0].mxu0
    %v2721 = vadd.f32 %v2536, %v2720
    %v2722 = vpop.f32.mrb[0].mxu0
    %v2723 = vadd.f32 %v2540, %v2722
    %v2724 = vpop.f32.mrb[0].mxu0
    %v2725 = vpop.f32.mrb[0].mxu0
    %2726 = vdwg.mxu0
    %2727 = vmatprep.subr.bf16.mxu0 0
    %2728 = vmatpush1.bf16.msra.mxu0 %v2630
    %2729 = vmatprep.subr.bf16.mxu0 0
    %2730 = vmatpush1.bf16.msra.mxu0 %v2633
    %2731 = vmatprep.subr.bf16.mxu0 0
    %2732 = vmatpush1.bf16.msra.mxu0 %v2636
    %2733 = vmatprep.subr.bf16.mxu0 0
    %2734 = vmatpush1.bf16.msra.mxu0 %v2639
    %2735 = vmatprep.subr.bf16.mxu0 0
    %2736 = vmatpush1.bf16.msra.mxu0 %v2642
    %2737 = vmatprep.subr.bf16.mxu0 0
    %2738 = vmatpush1.bf16.msra.mxu0 %v2645
    %2739 = vmatprep.subr.bf16.mxu0 0
    %2740 = vmatpush1.bf16.msra.mxu0 %v2648
    %2741 = vmatprep.subr.bf16.mxu0 0
    %2742 = vmatpush1.bf16.msra.mxu0 %v2651
    %2743 = vmatprep.subr.bf16.mxu0 0
    %2744 = vmatpush1.bf16.msra.mxu0 0
    %2745 = vmatprep.subr.bf16.mxu0 0
    %2746 = vmatpush1.bf16.msra.mxu0 0
    %2747 = vmatprep.subr.bf16.mxu0 0
    %2748 = vmatpush1.bf16.msra.mxu0 0
    %2749 = vmatprep.subr.bf16.mxu0 0
    %2750 = vmatpush1.bf16.msra.mxu0 0
    %2751 = vmatprep.subr.bf16.mxu0 0
    %2752 = vmatpush1.bf16.msra.mxu0 0
    %2753 = vmatprep.subr.bf16.mxu0 0
    %2754 = vmatpush1.bf16.msra.mxu0 0
    %2755 = vmatprep.subr.bf16.mxu0 0
    %2756 = vmatpush1.bf16.msra.mxu0 0
    %2757 = vmatprep.subr.bf16.mxu0 0
    %2758 = vmatpush1.bf16.msra.mxu0 0
    %2759 = vmatprep.mubr.bf16.mxu0 0
    %2760 = vmatmul.mubr.bf16.gmra.mrb[0].mxu0 %v2229
    %v2761 = vpop.f32.mrb[0].mxu0
    %v2762 = vadd.f32 %v2544, %v2761
    %v2763 = vpop.f32.mrb[0].mxu0
    %v2764 = vpop.f32.mrb[0].mxu0
    %v2765 = vadd.f32 %v2544, %v2764
    %v2766 = vpop.f32.mrb[0].mxu0
    %2767 = vmatprep.mubr.bf16.mxu0 0
    %2768 = vmatmul.mubr.bf16.gmra.mrb[0].mxu0 %v2230
    %v2769 = vpop.f32.mrb[0].mxu0
    %v2770 = vadd.f32 %v2544, %v2769
    %v2771 = vpop.f32.mrb[0].mxu0
    %v2772 = vpop.f32.mrb[0].mxu0
    %v2773 = vpop.f32.mrb[0].mxu0
    %2774 = vdwg.mxu0
    %v2775 = vpack.c.bf16 %v2715, %v2711
    %v2776 = vpack.c.bf16 %v2717, %v2713
    %v2777 = vpack.c.bf16 %v2765, %v2762
    %v2778 = vpack.c.bf16 %v2721, %v2721
    %v2779 = vpack.c.bf16 %v2723, %v2723
    %v2780 = vpack.c.bf16 %v2770, %v2770
    %s2781 = scalar_lea.vmem [#allocation2], 384
    %v2782 = vld [vmem:[%s2781] sm:$0xf]
    %v2783 = vld [vmem:[%s2781 + $0x4] sm:$0xf]
    %v2784 = vld [vmem:[%s2781 + $0x8] sm:$0xf]
    %v2785 = vld [vmem:[%s2781 + $0xc] sm:$0xf]
    %v2786 = vld [vmem:[%s2781 + $0x10] sm:$0xf]
    %v2787 = vld [vmem:[%s2781 + $0x14] sm:$0xf]
    %v2788 = vld [vmem:[%s2781 + $0x18] sm:$0xf]
    %v2789 = vld [vmem:[%s2781 + $0x1c] sm:$0xf]
    %v2790 = vld [vmem:[%s2781 + $0x20] sm:$0xf]
    %v2791 = vld [vmem:[%s2781 + $0x24] sm:$0xf]
    %v2792 = vld [vmem:[%s2781 + $0x28] sm:$0xf]
    %v2793 = vld [vmem:[%s2781 + $0x2c] sm:$0xf]
    %v2794 = vld [vmem:[%s2781 + $0x30] sm:$0xf]
    %v2795 = vld [vmem:[%s2781 + $0x34] sm:$0xf]
    %v2796 = vld [vmem:[%s2781 + $0x38] sm:$0xf]
    %v2797 = vld [vmem:[%s2781 + $0x3c] sm:$0xf]
    %2798 = vmatprep.subr.bf16.mxu0 %v2495
    %2799 = vmatpush1.bf16.msra.mxu0 %v2494
    %2800 = vmatprep.subr.bf16.mxu0 0
    %2801 = vmatpush1.bf16.msra.mxu0 0
    %2802 = vmatprep.subr.bf16.mxu0 0
    %2803 = vmatpush1.bf16.msra.mxu0 0
    %2804 = vmatprep.subr.bf16.mxu0 0
    %2805 = vmatpush1.bf16.msra.mxu0 0
    %2806 = vmatprep.subr.bf16.mxu0 0
    %2807 = vmatpush1.bf16.msra.mxu0 0
    %2808 = vmatprep.subr.bf16.mxu0 0
    %2809 = vmatpush1.bf16.msra.mxu0 0
    %2810 = vmatprep.subr.bf16.mxu0 0
    %2811 = vmatpush1.bf16.msra.mxu0 0
    %2812 = vmatprep.subr.bf16.mxu0 0
    %2813 = vmatpush1.bf16.msra.mxu0 0
    %2814 = vmatprep.subr.bf16.mxu0 0
    %2815 = vmatpush1.bf16.msra.mxu0 0
    %2816 = vmatprep.subr.bf16.mxu0 0
    %2817 = vmatpush1.bf16.msra.mxu0 0
    %2818 = vmatprep.subr.bf16.mxu0 0
    %2819 = vmatpush1.bf16.msra.mxu0 0
    %2820 = vmatprep.subr.bf16.mxu0 0
    %2821 = vmatpush1.bf16.msra.mxu0 0
    %2822 = vmatprep.subr.bf16.mxu0 0
    %2823 = vmatpush1.bf16.msra.mxu0 0
    %2824 = vmatprep.subr.bf16.mxu0 0
    %2825 = vmatpush1.bf16.msra.mxu0 0
    %2826 = vmatprep.subr.bf16.mxu0 0
    %2827 = vmatpush1.bf16.msra.mxu0 0
    %2828 = vmatprep.subr.bf16.mxu0 0
    %2829 = vmatpush1.bf16.msra.mxu0 0
    %2830 = vmatprep.mubr.bf16.mxu0 0
    %2831 = vmatmul.mubr.bf16.gmra.mrb[0].mxu0 %v1187
    %v2832 = vpop.f32.mrb[0].mxu0
    %v2833 = vadd.f32 0.0, %v2832
    %v2834 = vpop.f32.mrb[0].mxu0
    %v2835 = vadd.f32 0.0, %v2834
    %v2836 = vpop.f32.mrb[0].mxu0
    %v2837 = vadd.f32 0.0, %v2836
    %v2838 = vpop.f32.mrb[0].mxu0
    %v2839 = vadd.f32 0.0, %v2838
    %2840 = vmatprep.mubr.bf16.mxu0 0
    %2841 = vmatmul.mubr.bf16.gmra.mrb[0].mxu0 %v1190
    %v2842 = vpop.f32.mrb[0].mxu0
    %v2843 = vadd.f32 0.0, %v2842
    %v2844 = vpop.f32.mrb[0].mxu0
    %v2845 = vadd.f32 0.0, %v2844
    %v2846 = vpop.f32.mrb[0].mxu0
    %v2847 = vadd.f32 0.0, %v2846
    %v2848 = vpop.f32.mrb[0].mxu0
    %v2849 = vadd.f32 0.0, %v2848
    %2850 = vmatprep.mubr.bf16.mxu0 0
    %2851 = vmatmul.mubr.bf16.gmra.mrb[0].mxu0 %v1193
    %v2852 = vpop.f32.mrb[0].mxu0
    %v2853 = vadd.f32 0.0, %v2852
    %v2854 = vpop.f32.mrb[0].mxu0
    %v2855 = vadd.f32 0.0, %v2854
    %v2856 = vpop.f32.mrb[0].mxu0
    %v2857 = vpop.f32.mrb[0].mxu0
    %2858 = vdwg.mxu0
    %v2860 = vsel %vm1259, %v2780, 0
    %2862 = vmatprep.subr.bf16.mxu0 0
    %2863 = vmatpush1.bf16.msra.mxu0 %v2777
    %2864 = vmatprep.subr.bf16.mxu0 0
    %2865 = vmatpush1.bf16.msra.mxu0 %v2860
    %2866 = vmatprep.subr.bf16.mxu0 0
    %2867 = vmatpush1.bf16.msra.mxu0 0
    %2868 = vmatprep.subr.bf16.mxu0 0
    %2869 = vmatpush1.bf16.msra.mxu0 0
    %2870 = vmatprep.subr.bf16.mxu0 0
    %2871 = vmatpush1.bf16.msra.mxu0 0
    %2872 = vmatprep.subr.bf16.mxu0 0
    %2873 = vmatpush1.bf16.msra.mxu0 0
    %2874 = vmatprep.subr.bf16.mxu0 0
    %2875 = vmatpush1.bf16.msra.mxu0 0
    %2876 = vmatprep.subr.bf16.mxu0 0
    %2877 = vmatpush1.bf16.msra.mxu0 0
    %2878 = vmatprep.subr.bf16.mxu0 0
    %2879 = vmatpush1.bf16.msra.mxu0 0
    %2880 = vmatprep.subr.bf16.mxu0 0
    %2881 = vmatpush1.bf16.msra.mxu0 0
    %2882 = vmatprep.subr.bf16.mxu0 0
    %2883 = vmatpush1.bf16.msra.mxu0 0
    %2884 = vmatprep.subr.bf16.mxu0 0
    %2885 = vmatpush1.bf16.msra.mxu0 0
    %2886 = vmatprep.subr.bf16.mxu0 0
    %2887 = vmatpush1.bf16.msra.mxu0 0
    %2888 = vmatprep.subr.bf16.mxu0 0
    %2889 = vmatpush1.bf16.msra.mxu0 0
    %2890 = vmatprep.subr.bf16.mxu0 0
    %2891 = vmatpush1.bf16.msra.mxu0 0
    %2892 = vmatprep.subr.bf16.mxu0 0
    %2893 = vmatpush1.bf16.msra.mxu0 0
    %2894 = vmatprep.mubr.bf16.mxu0 0
    %2895 = vmatmul.mubr.bf16.gmra.mrb[0].mxu0 %v1257
    %v2896 = vpop.f32.mrb[0].mxu0
    %v2897 = vadd.f32 0.0, %v2896
    %v2898 = vpop.f32.mrb[0].mxu0
    %v2899 = vpop.f32.mrb[0].mxu0
    %v2900 = vpop.f32.mrb[0].mxu0
    %2901 = vdwg.mxu0
    %v2902 = vpack.c.bf16 %v2837, %v2833
    %v2903 = vpack.c.bf16 %v2847, %v2843
    %v2904 = vpack.c.bf16 %v2853, %v2853
    %v2921 = vunpack.c.l.b16 %v2782
    %v2922 = vunpack.c.l.b16 %v2783
    %v2923 = vunpack.c.l.b16 %v2784
    %v2924 = vunpack.c.l.b16 %v2785
    %v2925 = vunpack.c.l.b16 %v2786
    %v2926 = vunpack.c.l.b16 %v2787
    %v2927 = vunpack.c.l.b16 %v2788
    %v2928 = vunpack.c.l.b16 %v2789
    %v2929 = vunpack.c.l.b16 %v2790
    %v2930 = vunpack.c.l.b16 %v2791
    %v2931 = vunpack.c.l.b16 %v2792
    %v2932 = vunpack.c.l.b16 %v2793
    %v2933 = vunpack.c.l.b16 %v2794
    %v2934 = vunpack.c.l.b16 %v2795
    %v2935 = vunpack.c.l.b16 %v2796
    %v2936 = vunpack.c.l.b16 %v2797
    %v2937 = vpack.c.b16 %v2922, %v2921
    %v2938 = vpack.c.b16 %v2924, %v2923
    %v2939 = vpack.c.b16 %v2926, %v2925
    %v2940 = vpack.c.b16 %v2928, %v2927
    %v2941 = vpack.c.b16 %v2930, %v2929
    %v2942 = vpack.c.b16 %v2932, %v2931
    %v2943 = vpack.c.b16 %v2934, %v2933
    %v2944 = vpack.c.b16 %v2936, %v2935
    %2953 = vmatprep.subr.bf16.mxu0 0
    %2954 = vmatpush1.bf16.msra.mxu0 %v2937
    %2955 = vmatprep.subr.bf16.mxu0 0
    %2956 = vmatpush1.bf16.msra.mxu0 %v2938
    %2957 = vmatprep.subr.bf16.mxu0 0
    %2958 = vmatpush1.bf16.msra.mxu0 %v2939
    %2959 = vmatprep.subr.bf16.mxu0 0
    %2960 = vmatpush1.bf16.msra.mxu0 %v2940
    %2961 = vmatprep.subr.bf16.mxu0 0
    %2962 = vmatpush1.bf16.msra.mxu0 %v2941
    %2963 = vmatprep.subr.bf16.mxu0 0
    %2964 = vmatpush1.bf16.msra.mxu0 %v2942
    %2965 = vmatprep.subr.bf16.mxu0 0
    %2966 = vmatpush1.bf16.msra.mxu0 %v2943
    %2967 = vmatprep.subr.bf16.mxu0 0
    %2968 = vmatpush1.bf16.msra.mxu0 %v2944
    %2969 = vmatprep.subr.bf16.mxu0 0
    %2970 = vmatpush1.bf16.msra.mxu0 0
    %2971 = vmatprep.subr.bf16.mxu0 0
    %2972 = vmatpush1.bf16.msra.mxu0 0
    %2973 = vmatprep.subr.bf16.mxu0 0
    %2974 = vmatpush1.bf16.msra.mxu0 0
    %2975 = vmatprep.subr.bf16.mxu0 0
    %2976 = vmatpush1.bf16.msra.mxu0 0
    %2977 = vmatprep.subr.bf16.mxu0 0
    %2978 = vmatpush1.bf16.msra.mxu0 0
    %2979 = vmatprep.subr.bf16.mxu0 0
    %2980 = vmatpush1.bf16.msra.mxu0 0
    %2981 = vmatprep.subr.bf16.mxu0 0
    %2982 = vmatpush1.bf16.msra.mxu0 0
    %2983 = vmatprep.subr.bf16.mxu0 0
    %2984 = vmatpush1.bf16.msra.mxu0 0
    %2985 = vmatprep.mubr.bf16.mxu0 0
    %2986 = vmatmul.mubr.bf16.gmra.mrb[0].mxu0 %v2902
    %v2987 = vpop.f32.mrb[0].mxu0
    %v2988 = vadd.f32 0.0, %v2987
    %v2989 = vpop.f32.mrb[0].mxu0
    %v2990 = vpop.f32.mrb[0].mxu0
    %v2991 = vadd.f32 0.0, %v2990
    %v2992 = vpop.f32.mrb[0].mxu0
    %2993 = vmatprep.mubr.bf16.mxu0 0
    %2994 = vmatmul.mubr.bf16.gmra.mrb[0].mxu0 %v2903
    %v2995 = vpop.f32.mrb[0].mxu0
    %v2996 = vadd.f32 0.0, %v2995
    %v2997 = vpop.f32.mrb[0].mxu0
    %v2998 = vpop.f32.mrb[0].mxu0
    %v2999 = vadd.f32 0.0, %v2998
    %v3000 = vpop.f32.mrb[0].mxu0
    %3001 = vmatprep.mubr.bf16.mxu0 0
    %3002 = vmatmul.mubr.bf16.gmra.mrb[0].mxu0 %v2904
    %v3003 = vpop.f32.mrb[0].mxu0
    %v3004 = vadd.f32 0.0, %v3003
    %v3005 = vpop.f32.mrb[0].mxu0
    %v3006 = vpop.f32.mrb[0].mxu0
    %v3007 = vpop.f32.mrb[0].mxu0
    %3008 = vdwg.mxu0
    %v3009 = vlaneseq
    %v3010 = vshrl.u32 %v3009, 7
    %v3011 = vsub.s32 0, %v3010
    %v3012 = vrot.slane %v2897, %v3011
    %v3013 = vmul.f32 %v2988, %v3012
    %v3014 = vmul.f32 %v2991, %v3012
    %v3015 = vmul.f32 %v2996, %v3012
    %v3016 = vmul.f32 %v2999, %v3012
    %v3017 = vmul.f32 %v3004, %v3012
    %3018 = vadd.xlane.f32.xlu0 %v3013
    %v3019 = vpop.xlane.xlu0 %3018
    %3020 = vadd.xlane.f32.xlu0 %v3014
    %v3021 = vpop.xlane.xlu0 %3020
    %3022 = vadd.xlane.f32.xlu0 %v3015
    %v3023 = vpop.xlane.xlu0 %3022
    %3024 = vadd.xlane.f32.xlu0 %v3016
    %v3025 = vpop.xlane.xlu0 %3024
    %3026 = vadd.xlane.f32.xlu0 %v3017
    %v3027 = vpop.xlane.xlu0 %3026
    %v3028 = vmul.f32 %v3019, 0.17677669
    %v3029 = vmul.f32 %v3021, 0.17677669
    %v3030 = vmul.f32 %v3023, 0.17677669
    %v3031 = vmul.f32 %v3025, 0.17677669
    %v3032 = vmul.f32 %v3027, 0.17677669
    %v3033 = vsel %vm1434, %v3028, -1e+30
    %v3034 = vsel %vm1435, %v3029, -1e+30
    %v3035 = vsel %vm1436, %v3030, -1e+30
    %v3036 = vsel %vm1437, %v3031, -1e+30
    %v3037 = vsel %vm1438, %v3032, -1e+30
    %v3038 = vsel %vm83, %v3033, -inf
    %v3039 = vsel %vm83, %v3034, -inf
    %v3040 = vsel %vm83, %v3035, -inf
    %v3041 = vsel %vm83, %v3036, -inf
    %v3042 = vsel %vm83, %v3037, -inf
    %v3043 = vmax.f32 %v3038, %v3042
    %v3044 = vmax.f32 %v3043, %v3039
    %v3045 = vmax.f32 %v3040, %v3041
    %v3046 = vmax.f32 %v3044, %v3045
    %v3047 = vrot.slane %v3046, 4
    %v3048 = vmax.f32 %v3046, %v3047
    %v3049 = vrot.slane %v3048, 2
    %v3050 = vmax.f32 %v3048, %v3049
    %v3051 = vrot.slane %v3050, 1
    %v3052 = vmax.f32 %v3050, %v3051
    %v3053 = vsel %vm1434, %v3052, 0.0
    %v3054 = vsel %vm1435, %v3052, 0.0
    %v3055 = vsel %vm1436, %v3052, 0.0
    %v3056 = vsel %vm1437, %v3052, 0.0
    %v3057 = vsel %vm1438, %v3052, 0.0
    %v3058 = vsel %vm83, %v3053, 0.0
    %3059 = vadd.xlane.f32.xlu0 %v3058
    %v3060 = vpop.xlane.xlu0 %3059
    %v3061 = vsel %vm83, %v3054, 0.0
    %3062 = vadd.xlane.f32.xlu0 %v3061
    %v3063 = vpop.xlane.xlu0 %3062
    %v3064 = vsel %vm83, %v3055, 0.0
    %3065 = vadd.xlane.f32.xlu0 %v3064
    %v3066 = vpop.xlane.xlu0 %3065
    %v3067 = vsel %vm83, %v3056, 0.0
    %3068 = vadd.xlane.f32.xlu0 %v3067
    %v3069 = vpop.xlane.xlu0 %3068
    %v3070 = vsel %vm83, %v3057, 0.0
    %3071 = vadd.xlane.f32.xlu0 %v3070
    %v3072 = vpop.xlane.xlu0 %3071
    %v3073 = vsub.f32 %v3028, %v3060
    %v3074 = vsub.f32 %v3029, %v3063
    %v3075 = vsub.f32 %v3030, %v3066
    %v3076 = vsub.f32 %v3031, %v3069
    %v3077 = vsub.f32 %v3032, %v3072
    %v3078 = vmul.f32 %v3073, 1.442695
    %v3079 = vpow.pop %v3078
    %v3080 = vmul.f32 %v3074, 1.442695
    %v3081 = vpow.pop %v3080
    %v3082 = vmul.f32 %v3075, 1.442695
    %v3083 = vpow.pop %v3082
    %v3084 = vmul.f32 %v3076, 1.442695
    %v3085 = vpow.pop %v3084
    %v3086 = vmul.f32 %v3077, 1.442695
    %v3087 = vpow.pop %v3086
    %v3088 = vsel %vm1434, %v3079, 0.0
    %v3089 = vsel %vm1435, %v3081, 0.0
    %v3090 = vsel %vm1436, %v3083, 0.0
    %v3091 = vsel %vm1437, %v3085, 0.0
    %v3092 = vsel %vm1438, %v3087, 0.0
    %v3093 = vsel %vm83, %v3088, 0.0
    %v3094 = vsel %vm83, %v3089, 0.0
    %v3095 = vadd.f32 %v3093, %v3094
    %v3096 = vsel %vm83, %v3090, 0.0
    %v3097 = vadd.f32 %v3095, %v3096
    %v3098 = vsel %vm83, %v3091, 0.0
    %v3099 = vadd.f32 %v3097, %v3098
    %v3100 = vsel %vm83, %v3092, 0.0
    %v3101 = vadd.f32 %v3099, %v3100
    %v3102 = vrot.slane %v3101, 4
    %v3103 = vadd.f32 %v3101, %v3102
    %v3104 = vrot.slane %v3103, 2
    %v3105 = vadd.f32 %v3103, %v3104
    %v3106 = vrot.slane %v3105, 1
    %v3107 = vadd.f32 %v3105, %v3106
    %v3108 = vsel %vm1434, %v3107, 0.0
    %v3109 = vsel %vm1435, %v3107, 0.0
    %v3110 = vsel %vm1436, %v3107, 0.0
    %v3111 = vsel %vm1437, %v3107, 0.0
    %v3112 = vsel %vm1438, %v3107, 0.0
    %v3113 = vsel %vm83, %v3108, 0.0
    %3114 = vadd.xlane.f32.xlu0 %v3113
    %v3115 = vpop.xlane.xlu0 %3114
    %v3116 = vsel %vm83, %v3109, 0.0
    %3117 = vadd.xlane.f32.xlu0 %v3116
    %v3118 = vpop.xlane.xlu0 %3117
    %v3119 = vsel %vm83, %v3110, 0.0
    %3120 = vadd.xlane.f32.xlu0 %v3119
    %v3121 = vpop.xlane.xlu0 %3120
    %v3122 = vsel %vm83, %v3111, 0.0
    %3123 = vadd.xlane.f32.xlu0 %v3122
    %v3124 = vpop.xlane.xlu0 %3123
    %v3125 = vsel %vm83, %v3112, 0.0
    %3126 = vadd.xlane.f32.xlu0 %v3125
    %v3127 = vpop.xlane.xlu0 %3126
    %v3128 = vrcp.pop %v3115
    %v3129 = vmul.f32 %v3079, %v3128
    %v3130 = vrcp.pop %v3118
    %v3131 = vmul.f32 %v3081, %v3130
    %v3132 = vrcp.pop %v3121
    %v3133 = vmul.f32 %v3083, %v3132
    %v3134 = vrcp.pop %v3124
    %v3135 = vmul.f32 %v3085, %v3134
    %v3136 = vrcp.pop %v3127
    %v3137 = vmul.f32 %v3087, %v3136
    %v3138 = vmul.f32 %v3129, %v2835
    %v3139 = vmul.f32 %v3131, %v2839
    %v3140 = vmul.f32 %v3133, %v2845
    %v3141 = vmul.f32 %v3135, %v2849
    %v3142 = vmul.f32 %v3137, %v2855
    %s3143 = scalar_lea.vmem [#allocation2], 448
    %v3144 = vld [vmem:[%s3143] sm:$0xf]
    %v3145 = vld [vmem:[%s3143 + $0x4] sm:$0xf]
    %v3146 = vld [vmem:[%s3143 + $0x8] sm:$0xf]
    %v3147 = vld [vmem:[%s3143 + $0xc] sm:$0xf]
    %v3148 = vld [vmem:[%s3143 + $0x10] sm:$0xf]
    %v3149 = vld [vmem:[%s3143 + $0x14] sm:$0xf]
    %v3150 = vld [vmem:[%s3143 + $0x18] sm:$0xf]
    %v3151 = vld [vmem:[%s3143 + $0x1c] sm:$0xf]
    %v3152 = vld [vmem:[%s3143 + $0x20] sm:$0xf]
    %v3153 = vld [vmem:[%s3143 + $0x24] sm:$0xf]
    %v3154 = vld [vmem:[%s3143 + $0x28] sm:$0xf]
    %v3155 = vld [vmem:[%s3143 + $0x2c] sm:$0xf]
    %v3156 = vld [vmem:[%s3143 + $0x30] sm:$0xf]
    %v3157 = vld [vmem:[%s3143 + $0x34] sm:$0xf]
    %v3158 = vld [vmem:[%s3143 + $0x38] sm:$0xf]
    %v3159 = vld [vmem:[%s3143 + $0x3c] sm:$0xf]
    %v3161 = vsel %vm1259, %v2778, 0
    %v3164 = vsel %vm1259, %v2779, 0
    %3166 = vmatprep.subr.bf16.mxu0 %v2776
    %3167 = vmatpush1.bf16.msra.mxu0 %v2775
    %3168 = vmatprep.subr.bf16.mxu0 %v3164
    %3169 = vmatpush1.bf16.msra.mxu0 %v3161
    %3170 = vmatprep.subr.bf16.mxu0 0
    %3171 = vmatpush1.bf16.msra.mxu0 0
    %3172 = vmatprep.subr.bf16.mxu0 0
    %3173 = vmatpush1.bf16.msra.mxu0 0
    %3174 = vmatprep.subr.bf16.mxu0 0
    %3175 = vmatpush1.bf16.msra.mxu0 0
    %3176 = vmatprep.subr.bf16.mxu0 0
    %3177 = vmatpush1.bf16.msra.mxu0 0
    %3178 = vmatprep.subr.bf16.mxu0 0
    %3179 = vmatpush1.bf16.msra.mxu0 0
    %3180 = vmatprep.subr.bf16.mxu0 0
    %3181 = vmatpush1.bf16.msra.mxu0 0
    %3182 = vmatprep.subr.bf16.mxu0 0
    %3183 = vmatpush1.bf16.msra.mxu0 0
    %3184 = vmatprep.subr.bf16.mxu0 0
    %3185 = vmatpush1.bf16.msra.mxu0 0
    %3186 = vmatprep.subr.bf16.mxu0 0
    %3187 = vmatpush1.bf16.msra.mxu0 0
    %3188 = vmatprep.subr.bf16.mxu0 0
    %3189 = vmatpush1.bf16.msra.mxu0 0
    %3190 = vmatprep.subr.bf16.mxu0 0
    %3191 = vmatpush1.bf16.msra.mxu0 0
    %3192 = vmatprep.subr.bf16.mxu0 0
    %3193 = vmatpush1.bf16.msra.mxu0 0
    %3194 = vmatprep.subr.bf16.mxu0 0
    %3195 = vmatpush1.bf16.msra.mxu0 0
    %3196 = vmatprep.subr.bf16.mxu0 0
    %3197 = vmatpush1.bf16.msra.mxu0 0
    %3198 = vmatprep.mubr.bf16.mxu0 0
    %3199 = vmatmul.mubr.bf16.gmra.mrb[0].mxu0 %v1699
    %v3200 = vpop.f32.mrb[0].mxu0
    %v3201 = vadd.f32 0.0, %v3200
    %v3202 = vpop.f32.mrb[0].mxu0
    %v3203 = vadd.f32 0.0, %v3202
    %v3204 = vpop.f32.mrb[0].mxu0
    %v3205 = vadd.f32 0.0, %v3204
    %v3206 = vpop.f32.mrb[0].mxu0
    %v3207 = vadd.f32 0.0, %v3206
    %3208 = vmatprep.mubr.bf16.mxu0 0
    %3209 = vmatmul.mubr.bf16.gmra.mrb[0].mxu0 %v1702
    %v3210 = vpop.f32.mrb[0].mxu0
    %v3211 = vadd.f32 0.0, %v3210
    %v3212 = vpop.f32.mrb[0].mxu0
    %v3213 = vadd.f32 0.0, %v3212
    %v3214 = vpop.f32.mrb[0].mxu0
    %v3215 = vadd.f32 0.0, %v3214
    %v3216 = vpop.f32.mrb[0].mxu0
    %v3217 = vadd.f32 0.0, %v3216
    %3218 = vdwg.mxu0
    %3219 = vmatprep.subr.bf16.mxu0 0
    %3220 = vmatpush1.bf16.msra.mxu0 %v2496
    %3221 = vmatprep.subr.bf16.mxu0 0
    %3222 = vmatpush1.bf16.msra.mxu0 0
    %3223 = vmatprep.subr.bf16.mxu0 0
    %3224 = vmatpush1.bf16.msra.mxu0 0
    %3225 = vmatprep.subr.bf16.mxu0 0
    %3226 = vmatpush1.bf16.msra.mxu0 0
    %3227 = vmatprep.subr.bf16.mxu0 0
    %3228 = vmatpush1.bf16.msra.mxu0 0
    %3229 = vmatprep.subr.bf16.mxu0 0
    %3230 = vmatpush1.bf16.msra.mxu0 0
    %3231 = vmatprep.subr.bf16.mxu0 0
    %3232 = vmatpush1.bf16.msra.mxu0 0
    %3233 = vmatprep.subr.bf16.mxu0 0
    %3234 = vmatpush1.bf16.msra.mxu0 0
    %3235 = vmatprep.subr.bf16.mxu0 0
    %3236 = vmatpush1.bf16.msra.mxu0 0
    %3237 = vmatprep.subr.bf16.mxu0 0
    %3238 = vmatpush1.bf16.msra.mxu0 0
    %3239 = vmatprep.subr.bf16.mxu0 0
    %3240 = vmatpush1.bf16.msra.mxu0 0
    %3241 = vmatprep.subr.bf16.mxu0 0
    %3242 = vmatpush1.bf16.msra.mxu0 0
    %3243 = vmatprep.subr.bf16.mxu0 0
    %3244 = vmatpush1.bf16.msra.mxu0 0
    %3245 = vmatprep.subr.bf16.mxu0 0
    %3246 = vmatpush1.bf16.msra.mxu0 0
    %3247 = vmatprep.subr.bf16.mxu0 0
    %3248 = vmatpush1.bf16.msra.mxu0 0
    %3249 = vmatprep.subr.bf16.mxu0 0
    %3250 = vmatpush1.bf16.msra.mxu0 0
    %3251 = vmatprep.mubr.bf16.mxu0 0
    %3252 = vmatmul.mubr.bf16.gmra.mrb[0].mxu0 %v1764
    %v3253 = vpop.f32.mrb[0].mxu0
    %v3254 = vadd.f32 0.0, %v3253
    %v3255 = vpop.f32.mrb[0].mxu0
    %v3256 = vpop.f32.mrb[0].mxu0
    %v3257 = vpop.f32.mrb[0].mxu0
    %3258 = vdwg.mxu0
    %v3259 = vpack.c.bf16 %v3205, %v3201
    %v3260 = vpack.c.bf16 %v3215, %v3211
    %v3277 = vunpack.c.l.b16 %v3144
    %v3278 = vunpack.c.l.b16 %v3145
    %v3279 = vunpack.c.l.b16 %v3146
    %v3280 = vunpack.c.l.b16 %v3147
    %v3281 = vunpack.c.l.b16 %v3148
    %v3282 = vunpack.c.l.b16 %v3149
    %v3283 = vunpack.c.l.b16 %v3150
    %v3284 = vunpack.c.l.b16 %v3151
    %v3285 = vunpack.c.l.b16 %v3152
    %v3286 = vunpack.c.l.b16 %v3153
    %v3287 = vunpack.c.l.b16 %v3154
    %v3288 = vunpack.c.l.b16 %v3155
    %v3289 = vunpack.c.l.b16 %v3156
    %v3290 = vunpack.c.l.b16 %v3157
    %v3291 = vunpack.c.l.b16 %v3158
    %v3292 = vunpack.c.l.b16 %v3159
    %v3293 = vpack.c.b16 %v3278, %v3277
    %v3294 = vpack.c.b16 %v3280, %v3279
    %v3295 = vpack.c.b16 %v3282, %v3281
    %v3296 = vpack.c.b16 %v3284, %v3283
    %v3297 = vpack.c.b16 %v3286, %v3285
    %v3298 = vpack.c.b16 %v3288, %v3287
    %v3299 = vpack.c.b16 %v3290, %v3289
    %v3300 = vpack.c.b16 %v3292, %v3291
    %3309 = vmatprep.subr.bf16.mxu0 0
    %3310 = vmatpush1.bf16.msra.mxu0 %v3293
    %3311 = vmatprep.subr.bf16.mxu0 0
    %3312 = vmatpush1.bf16.msra.mxu0 %v3294
    %3313 = vmatprep.subr.bf16.mxu0 0
    %3314 = vmatpush1.bf16.msra.mxu0 %v3295
    %3315 = vmatprep.subr.bf16.mxu0 0
    %3316 = vmatpush1.bf16.msra.mxu0 %v3296
    %3317 = vmatprep.subr.bf16.mxu0 0
    %3318 = vmatpush1.bf16.msra.mxu0 %v3297
    %3319 = vmatprep.subr.bf16.mxu0 0
    %3320 = vmatpush1.bf16.msra.mxu0 %v3298
    %3321 = vmatprep.subr.bf16.mxu0 0
    %3322 = vmatpush1.bf16.msra.mxu0 %v3299
    %3323 = vmatprep.subr.bf16.mxu0 0
    %3324 = vmatpush1.bf16.msra.mxu0 %v3300
    %3325 = vmatprep.subr.bf16.mxu0 0
    %3326 = vmatpush1.bf16.msra.mxu0 0
    %3327 = vmatprep.subr.bf16.mxu0 0
    %3328 = vmatpush1.bf16.msra.mxu0 0
    %3329 = vmatprep.subr.bf16.mxu0 0
    %3330 = vmatpush1.bf16.msra.mxu0 0
    %3331 = vmatprep.subr.bf16.mxu0 0
    %3332 = vmatpush1.bf16.msra.mxu0 0
    %3333 = vmatprep.subr.bf16.mxu0 0
    %3334 = vmatpush1.bf16.msra.mxu0 0
    %3335 = vmatprep.subr.bf16.mxu0 0
    %3336 = vmatpush1.bf16.msra.mxu0 0
    %3337 = vmatprep.subr.bf16.mxu0 0
    %3338 = vmatpush1.bf16.msra.mxu0 0
    %3339 = vmatprep.subr.bf16.mxu0 0
    %3340 = vmatpush1.bf16.msra.mxu0 0
    %3341 = vmatprep.mubr.bf16.mxu0 0
    %3342 = vmatmul.mubr.bf16.gmra.mrb[0].mxu0 %v3259
    %v3343 = vpop.f32.mrb[0].mxu0
    %v3344 = vadd.f32 0.0, %v3343
    %v3345 = vpop.f32.mrb[0].mxu0
    %v3346 = vpop.f32.mrb[0].mxu0
    %v3347 = vadd.f32 0.0, %v3346
    %v3348 = vpop.f32.mrb[0].mxu0
    %3349 = vmatprep.mubr.bf16.mxu0 0
    %3350 = vmatmul.mubr.bf16.gmra.mrb[0].mxu0 %v3260
    %v3351 = vpop.f32.mrb[0].mxu0
    %v3352 = vadd.f32 0.0, %v3351
    %v3353 = vpop.f32.mrb[0].mxu0
    %v3354 = vpop.f32.mrb[0].mxu0
    %v3355 = vadd.f32 0.0, %v3354
    %v3356 = vpop.f32.mrb[0].mxu0
    %3357 = vdwg.mxu0
    %v3358 = vlaneseq
    %v3359 = vshrl.u32 %v3358, 7
    %v3360 = vsub.s32 0, %v3359
    %v3361 = vrot.slane %v3254, %v3360
    %v3362 = vmul.f32 %v3344, %v3361
    %v3363 = vmul.f32 %v3347, %v3361
    %v3364 = vmul.f32 %v3352, %v3361
    %v3365 = vmul.f32 %v3355, %v3361
    %3366 = vadd.xlane.f32.xlu0 %v3362
    %v3367 = vpop.xlane.xlu0 %3366
    %3368 = vadd.xlane.f32.xlu0 %v3363
    %v3369 = vpop.xlane.xlu0 %3368
    %3370 = vadd.xlane.f32.xlu0 %v3364
    %v3371 = vpop.xlane.xlu0 %3370
    %3372 = vadd.xlane.f32.xlu0 %v3365
    %v3373 = vpop.xlane.xlu0 %3372
    %v3374 = vmul.f32 %v3367, 0.17677669
    %v3375 = vmul.f32 %v3369, 0.17677669
    %v3376 = vmul.f32 %v3371, 0.17677669
    %v3377 = vmul.f32 %v3373, 0.17677669
    %v3378 = vsel %vm1925, %v3374, -1e+30
    %v3379 = vsel %vm1926, %v3375, -1e+30
    %v3380 = vsel %vm1927, %v3376, -1e+30
    %v3381 = vsel %vm1928, %v3377, -1e+30
    %v3382 = vsel %vm112, %v3378, -inf
    %v3383 = vsel %vm112, %v3379, -inf
    %v3384 = vsel %vm112, %v3380, -inf
    %v3385 = vsel %vm112, %v3381, -inf
    %v3386 = vmax.f32 %v3382, %v3383
    %v3387 = vmax.f32 %v3384, %v3385
    %v3388 = vmax.f32 %v3386, %v3387
    %v3389 = vrot.slane %v3388, 4
    %v3390 = vmax.f32 %v3388, %v3389
    %v3391 = vrot.slane %v3390, 2
    %v3392 = vmax.f32 %v3390, %v3391
    %v3393 = vrot.slane %v3392, 1
    %v3394 = vmax.f32 %v3392, %v3393
    %v3395 = vsel %vm1925, %v3394, 0.0
    %v3396 = vsel %vm1926, %v3394, 0.0
    %v3397 = vsel %vm1927, %v3394, 0.0
    %v3398 = vsel %vm1928, %v3394, 0.0
    %v3399 = vsel %vm112, %v3395, 0.0
    %3400 = vadd.xlane.f32.xlu0 %v3399
    %v3401 = vpop.xlane.xlu0 %3400
    %v3402 = vsel %vm112, %v3396, 0.0
    %3403 = vadd.xlane.f32.xlu0 %v3402
    %v3404 = vpop.xlane.xlu0 %3403
    %v3405 = vsel %vm112, %v3397, 0.0
    %3406 = vadd.xlane.f32.xlu0 %v3405
    %v3407 = vpop.xlane.xlu0 %3406
    %v3408 = vsel %vm112, %v3398, 0.0
    %3409 = vadd.xlane.f32.xlu0 %v3408
    %v3410 = vpop.xlane.xlu0 %3409
    %v3411 = vsub.f32 %v3374, %v3401
    %v3412 = vsub.f32 %v3375, %v3404
    %v3413 = vsub.f32 %v3376, %v3407
    %v3414 = vsub.f32 %v3377, %v3410
    %v3415 = vmul.f32 %v3411, 1.442695
    %v3416 = vpow.pop %v3415
    %v3417 = vmul.f32 %v3412, 1.442695
    %v3418 = vpow.pop %v3417
    %v3419 = vmul.f32 %v3413, 1.442695
    %v3420 = vpow.pop %v3419
    %v3421 = vmul.f32 %v3414, 1.442695
    %v3422 = vpow.pop %v3421
    %v3423 = vsel %vm1925, %v3416, 0.0
    %v3424 = vsel %vm1926, %v3418, 0.0
    %v3425 = vsel %vm1927, %v3420, 0.0
    %v3426 = vsel %vm1928, %v3422, 0.0
    %v3427 = vsel %vm112, %v3423, 0.0
    %v3428 = vsel %vm112, %v3424, 0.0
    %v3429 = vadd.f32 %v3427, %v3428
    %v3430 = vsel %vm112, %v3425, 0.0
    %v3431 = vadd.f32 %v3429, %v3430
    %v3432 = vsel %vm112, %v3426, 0.0
    %v3433 = vadd.f32 %v3431, %v3432
    %v3434 = vrot.slane %v3433, 4
    %v3435 = vadd.f32 %v3433, %v3434
    %v3436 = vrot.slane %v3435, 2
    %v3437 = vadd.f32 %v3435, %v3436
    %v3438 = vrot.slane %v3437, 1
    %v3439 = vadd.f32 %v3437, %v3438
    %v3440 = vsel %vm1925, %v3439, 0.0
    %v3441 = vsel %vm1926, %v3439, 0.0
    %v3442 = vsel %vm1927, %v3439, 0.0
    %v3443 = vsel %vm1928, %v3439, 0.0
    %v3444 = vsel %vm112, %v3440, 0.0
    %3445 = vadd.xlane.f32.xlu0 %v3444
    %v3446 = vpop.xlane.xlu0 %3445
    %v3447 = vsel %vm112, %v3441, 0.0
    %3448 = vadd.xlane.f32.xlu0 %v3447
    %v3449 = vpop.xlane.xlu0 %3448
    %v3450 = vsel %vm112, %v3442, 0.0
    %3451 = vadd.xlane.f32.xlu0 %v3450
    %v3452 = vpop.xlane.xlu0 %3451
    %v3453 = vsel %vm112, %v3443, 0.0
    %3454 = vadd.xlane.f32.xlu0 %v3453
    %v3455 = vpop.xlane.xlu0 %3454
    %v3456 = vrcp.pop %v3446
    %v3457 = vmul.f32 %v3416, %v3456
    %v3458 = vrcp.pop %v3449
    %v3459 = vmul.f32 %v3418, %v3458
    %v3460 = vrcp.pop %v3452
    %v3461 = vmul.f32 %v3420, %v3460
    %v3462 = vrcp.pop %v3455
    %v3463 = vmul.f32 %v3422, %v3462
    %v3464 = vmul.f32 %v3457, %v3203
    %v3465 = vmul.f32 %v3459, %v3207
    %v3466 = vmul.f32 %v3461, %v3213
    %v3467 = vmul.f32 %v3463, %v3217
    %3468 = vmatprep.subr.mxu0 0.0
    %3469 = vmatpush1.msra.mxu0 %v3464
    %3470 = vmatprep.subr.mxu0 0.0
    %3471 = vmatpush1.msra.mxu0 %v3465
    %3472 = vmatprep.subr.mxu0 0.0
    %3473 = vmatpush1.msra.mxu0 %v3466
    %3474 = vmatprep.subr.mxu0 0.0
    %3475 = vmatpush1.msra.mxu0 %v3467
    %3476 = vmatprep.subr.mxu0 0.0
    %3477 = vmatpush1.msra.mxu0 0.0
    %3478 = vmatprep.subr.mxu0 0.0
    %3479 = vmatpush1.msra.mxu0 0.0
    %3480 = vmatprep.subr.mxu0 0.0
    %3481 = vmatpush1.msra.mxu0 0.0
    %3482 = vmatprep.subr.mxu0 0.0
    %3483 = vmatpush1.msra.mxu0 0.0
    %3484 = vmatprep.subr.mxu0 0.0
    %3485 = vmatpush1.msra.mxu0 0.0
    %3486 = vmatprep.subr.mxu0 0.0
    %3487 = vmatpush1.msra.mxu0 0.0
    %3488 = vmatprep.subr.mxu0 0.0
    %3489 = vmatpush1.msra.mxu0 0.0
    %3490 = vmatprep.subr.mxu0 0.0
    %3491 = vmatpush1.msra.mxu0 0.0
    %3492 = vmatprep.subr.mxu0 0.0
    %3493 = vmatpush1.msra.mxu0 0.0
    %3494 = vmatprep.subr.mxu0 0.0
    %3495 = vmatpush1.msra.mxu0 0.0
    %3496 = vmatprep.subr.mxu0 0.0
    %3497 = vmatpush1.msra.mxu0 0.0
    %3498 = vmatprep.subr.mxu0 0.0
    %3499 = vmatpush1.msra.mxu0 0.0
    %3500 = vmatprep.subr.mxu0 0.0
    %3501 = vmatpush1.msra.mxu0 0.0
    %3502 = vmatprep.subr.mxu0 0.0
    %3503 = vmatpush1.msra.mxu0 0.0
    %3504 = vmatprep.subr.mxu0 0.0
    %3505 = vmatpush1.msra.mxu0 0.0
    %3506 = vmatprep.subr.mxu0 0.0
    %3507 = vmatpush1.msra.mxu0 0.0
    %3508 = vmatprep.subr.mxu0 0.0
    %3509 = vmatpush1.msra.mxu0 0.0
    %3510 = vmatprep.subr.mxu0 0.0
    %3511 = vmatpush1.msra.mxu0 0.0
    %3512 = vmatprep.subr.mxu0 0.0
    %3513 = vmatpush1.msra.mxu0 0.0
    %3514 = vmatprep.subr.mxu0 0.0
    %3515 = vmatpush1.msra.mxu0 0.0
    %3516 = vmatprep.subr.mxu0 0.0
    %3517 = vmatpush1.msra.mxu0 0.0
    %3518 = vmatprep.subr.mxu0 0.0
    %3519 = vmatpush1.msra.mxu0 0.0
    %3520 = vmatprep.subr.mxu0 0.0
    %3521 = vmatpush1.msra.mxu0 0.0
    %3522 = vmatprep.subr.mxu0 0.0
    %3523 = vmatpush1.msra.mxu0 0.0
    %3524 = vmatprep.subr.mxu0 0.0
    %3525 = vmatpush1.msra.mxu0 0.0
    %3526 = vmatprep.subr.mxu0 0.0
    %3527 = vmatpush1.msra.mxu0 0.0
    %3528 = vmatprep.subr.mxu0 0.0
    %3529 = vmatpush1.msra.mxu0 0.0
    %3530 = vmatprep.subr.mxu0 0.0
    %3531 = vmatpush1.msra.mxu0 0.0
    %3532 = vmatprep.mubr.f32.mxu0 0.0
    %3533 = vmatmul.mubr.f32.gmra.mrb[0].mxu0 %v2053
    %v3534 = vpop.f32.mrb[0].mxu0
    %v3535 = vadd.f32 %v484, %v3534
    %v3536 = vpop.f32.mrb[0].mxu0
    %3537 = vmatprep.mubr.f32.mxu0 0.0
    %3538 = vmatmul.mubr.f32.gmra.mrb[0].mxu0 %v2056
    %v3539 = vpop.f32.mrb[0].mxu0
    %v3540 = vadd.f32 %v487, %v3539
    %v3541 = vpop.f32.mrb[0].mxu0
    %3542 = vdwg.mxu0
    %3543 = vst [vmem:[#allocation7] sm:$0xff] %v3535
    %3544 = vst [vmem:[#allocation7 + $0x8] sm:$0xff] %v3540
    %3545 = vmatprep.subr.mxu0 0.0
    %3546 = vmatpush1.msra.mxu0 %v3138
    %3547 = vmatprep.subr.mxu0 0.0
    %3548 = vmatpush1.msra.mxu0 %v3139
    %3549 = vmatprep.subr.mxu0 0.0
    %3550 = vmatpush1.msra.mxu0 %v3140
    %3551 = vmatprep.subr.mxu0 0.0
    %3552 = vmatpush1.msra.mxu0 %v3141
    %3553 = vmatprep.subr.mxu0 0.0
    %3554 = vmatpush1.msra.mxu0 %v3142
    %3555 = vmatprep.subr.mxu0 0.0
    %3556 = vmatpush1.msra.mxu0 0.0
    %3557 = vmatprep.subr.mxu0 0.0
    %3558 = vmatpush1.msra.mxu0 0.0
    %3559 = vmatprep.subr.mxu0 0.0
    %3560 = vmatpush1.msra.mxu0 0.0
    %3561 = vmatprep.subr.mxu0 0.0
    %3562 = vmatpush1.msra.mxu0 0.0
    %3563 = vmatprep.subr.mxu0 0.0
    %3564 = vmatpush1.msra.mxu0 0.0
    %3565 = vmatprep.subr.mxu0 0.0
    %3566 = vmatpush1.msra.mxu0 0.0
    %3567 = vmatprep.subr.mxu0 0.0
    %3568 = vmatpush1.msra.mxu0 0.0
    %3569 = vmatprep.subr.mxu0 0.0
    %3570 = vmatpush1.msra.mxu0 0.0
    %3571 = vmatprep.subr.mxu0 0.0
    %3572 = vmatpush1.msra.mxu0 0.0
    %3573 = vmatprep.subr.mxu0 0.0
    %3574 = vmatpush1.msra.mxu0 0.0
    %3575 = vmatprep.subr.mxu0 0.0
    %3576 = vmatpush1.msra.mxu0 0.0
    %3577 = vmatprep.subr.mxu0 0.0
    %3578 = vmatpush1.msra.mxu0 0.0
    %3579 = vmatprep.subr.mxu0 0.0
    %3580 = vmatpush1.msra.mxu0 0.0
    %3581 = vmatprep.subr.mxu0 0.0
    %3582 = vmatpush1.msra.mxu0 0.0
    %3583 = vmatprep.subr.mxu0 0.0
    %3584 = vmatpush1.msra.mxu0 0.0
    %3585 = vmatprep.subr.mxu0 0.0
    %3586 = vmatpush1.msra.mxu0 0.0
    %3587 = vmatprep.subr.mxu0 0.0
    %3588 = vmatpush1.msra.mxu0 0.0
    %3589 = vmatprep.subr.mxu0 0.0
    %3590 = vmatpush1.msra.mxu0 0.0
    %3591 = vmatprep.subr.mxu0 0.0
    %3592 = vmatpush1.msra.mxu0 0.0
    %3593 = vmatprep.subr.mxu0 0.0
    %3594 = vmatpush1.msra.mxu0 0.0
    %3595 = vmatprep.subr.mxu0 0.0
    %3596 = vmatpush1.msra.mxu0 0.0
    %3597 = vmatprep.subr.mxu0 0.0
    %3598 = vmatpush1.msra.mxu0 0.0
    %3599 = vmatprep.subr.mxu0 0.0
    %3600 = vmatpush1.msra.mxu0 0.0
    %3601 = vmatprep.subr.mxu0 0.0
    %3602 = vmatpush1.msra.mxu0 0.0
    %3603 = vmatprep.subr.mxu0 0.0
    %3604 = vmatpush1.msra.mxu0 0.0
    %3605 = vmatprep.subr.mxu0 0.0
    %3606 = vmatpush1.msra.mxu0 0.0
    %3607 = vmatprep.subr.mxu0 0.0
    %3608 = vmatpush1.msra.mxu0 0.0
    %3609 = vmatprep.mubr.f32.mxu0 0.0
    %3610 = vmatmul.mubr.f32.gmra.mrb[0].mxu0 %v1583
    %v3611 = vpop.f32.mrb[0].mxu0
    %v3612 = vadd.f32 %v595, %v3611
    %v3613 = vpop.f32.mrb[0].mxu0
    %3614 = vmatprep.mubr.f32.mxu0 0.0
    %3615 = vmatmul.mubr.f32.gmra.mrb[0].mxu0 %v1586
    %v3616 = vpop.f32.mrb[0].mxu0
    %v3617 = vadd.f32 %v598, %v3616
    %v3618 = vpop.f32.mrb[0].mxu0
    %3619 = vmatprep.mubr.f32.mxu0 0.0
    %3620 = vmatmul.mubr.f32.gmra.mrb[0].mxu0 %v1589
    %v3621 = vpop.f32.mrb[0].mxu0
    %v3622 = vadd.f32 %v603, %v3621
    %v3623 = vpop.f32.mrb[0].mxu0
    %3624 = vdwg.mxu0
    %3625 = vst [vmem:[#allocation8] sm:$0xff] %v3612
    %3626 = vst [vmem:[#allocation8 + $0x8] sm:$0xff] %v3617
    %3627 = vst [vmem:[#allocation8 + $0x10] sm:$0xff] %v3622
    // Predicated region
    $region50: #{tpu_custom_call.1} parent=1 // pred_check
      _
    $region51: #{tpu_custom_call.1} parent=1 // pred_check_branch
      %3629 = sbr.rel (0) target = $region53
    $region52: #{tpu_custom_call.1} parent=1 // pred_region
      %s3631 = ssub.s32 256, 256
      %3632 = vsyncadd [#allocation4], %s3631
      %s3633 = sshll.u32 [#allocation7], 4
      %s3634 = int_to_ptr.vmem [resolvable:$true] %s3633
      %3639 = dma.vmem_to_hbm [thread:$0]  %s3634, 256, %s10, [#allocation4], 128, 128, 8
    $region53: #{tpu_custom_call.1} parent=1 // pred_fallthru
      _
    // Predicated region
    $region54: #{tpu_custom_call.1} parent=1 // pred_check
      _
    $region55: #{tpu_custom_call.1} parent=1 // pred_check_branch
      %3641 = sbr.rel (0) target = $region57
    $region56: #{tpu_custom_call.1} parent=1 // pred_region
      %s3643 = ssub.s32 384, 384
      %3644 = vsyncadd [#allocation9], %s3643
      %s3645 = sshll.u32 [#allocation8], 4
      %s3646 = int_to_ptr.vmem [resolvable:$true] %s3645
      %3651 = dma.vmem_to_hbm [thread:$0]  %s3646, 384, %s11, [#allocation9], 128, 128, 8
    $region57: #{tpu_custom_call.1} parent=1 // pred_fallthru
      _
    // Predicated region
    $region58: #{tpu_custom_call.1} parent=1 // pred_check
      _
    $region59: #{tpu_custom_call.1} parent=1 // pred_check_branch
      %3653 = sbr.rel (0) target = $region61
    $region60: #{tpu_custom_call.1} parent=1 // pred_region
      %3654 = dma.done [#allocation4], 256
    $region61: #{tpu_custom_call.1} parent=1 // pred_fallthru
      _
    // Predicated region
    $region62: #{tpu_custom_call.1} parent=1 // pred_check
      _
    $region63: #{tpu_custom_call.1} parent=1 // pred_check_branch
      %3656 = sbr.rel (0) target = $region65
    $region64: #{tpu_custom_call.1} parent=1 // pred_region
      %3657 = dma.done [#allocation9], 384
    $region65: #{tpu_custom_call.1} parent=1 // pred_fallthru
      _
    %3658 = vsyncpa [#allocation3], 1
    %3659 = vsyncpa [#allocation6], 1
    %3660 = vsyncpa [#allocation4], 1
    %3661 = vsyncpa [#allocation9], 1

</llo_original>
